<compile_context>
chip_gen: v6e
topology: v6e:2x2x1
jax: 0.10.0
libtpu: 0.0.40
codegen_flags: <defaults>
</compile_context>

<pallas_src>
import functools

import jax
import jax.numpy as jnp
from jax.experimental import pallas as pl
from jax.experimental.pallas import tpu as pltpu


_CONV_SPECS = ((32, 8, 4), (64, 4, 2), (64, 3, 1))   # (C_out, kernel, stride)
_FC_HIDDEN = 512
_LANES = 128


def _conv_out(h, w, k, s):
    return (h - k) // s + 1, (w - k) // s + 1


def _im2col_nchw(x, k, stride):
    """(N, C, H, W) -> (N*Ho*Wo, C*k*k) patches, (c, kh, kw) column order
    (matches torch's conv weight.reshape(C_out, -1)).  Used only for conv1,
    whose input is the raw module-boundary tensor (wrapper-side XLA op)."""
    N, C, H, W = x.shape
    Ho, Wo = _conv_out(H, W, k, stride)
    cols = []
    for i in range(k):
        for j in range(k):
            cols.append(x[:, :, i:i + stride * Ho:stride, j:j + stride * Wo:stride])
    p = jnp.stack(cols, axis=2)                     # (N, C, k*k, Ho, Wo)
    p = p.reshape(N, C * k * k, Ho * Wo)
    p = p.transpose(0, 2, 1).reshape(N * Ho * Wo, C * k * k)
    return p


def _im2col_value(a, k, s):
    """Value-level im2col used *inside* the kernel.
    a: (B, H, W, C) -> (B*Ho*Wo, k*k*C), (kh, kw, c) column order.
    Only unit-stride slices, integer squeezes on non-minor dims, and a
    lane-axis concat -- no ref scatters, no strided/scalar ref indexing."""
    B, H, W, C = a.shape
    Ho, Wo = _conv_out(H, W, k, s)
    if s == 1:
        slabs = [a[:, i:i + Ho, j:j + Wo, :] for i in range(k) for j in range(k)]
    else:
        Hp = -(-H // s) * s
        Wp = -(-W // s) * s
        if (Hp, Wp) != (H, W):
            a = jnp.pad(a, ((0, 0), (0, Hp - H), (0, Wp - W), (0, 0)))
        ar = a.reshape(B, Hp // s, s, Wp // s, s, C)
        slabs = [ar[:, i // s:i // s + Ho, i % s, j // s:j // s + Wo, j % s, :]
                 for i in range(k) for j in range(k)]
    p = jnp.concatenate(slabs, axis=-1)             # (B, Ho, Wo, k*k*C)
    return p.reshape(B * Ho * Wo, k * k * C)


def _pick_batch_tile(n, rows_per_sample, target_rows=256):
    """Largest divisor of n whose conv1 GEMM M-dim stays near target_rows."""
    best = 1
    for d in range(1, n + 1):
        if n % d == 0 and (d == 1 or d * rows_per_sample <= target_rows):
            best = d
    return best


# ----------------------------------------------------------------------------
# Fully fused forward pass (single pallas_call, batch tiled over the grid)
# ----------------------------------------------------------------------------
@functools.partial(jax.jit, static_argnames=("action_space",))
def mario_net_forward(x, prepped, *, action_space):
    """x: (N, C, H, W) float32 (PyTorch NCHW layout).  Returns (N, A) f32."""
    N, C_in, H, W = x.shape
    (C1, k1, s1), (C2, k2, s2), (C3, k3, s3) = _CONV_SPECS
    Ho1, Wo1 = _conv_out(H, W, k1, s1)
    Ho2, Wo2 = _conv_out(Ho1, Wo1, k2, s2)
    Ho3, Wo3 = _conv_out(Ho2, Wo2, k3, s3)
    K1 = C_in * k1 * k1
    F = Ho3 * Wo3 * C3
    Ap = prepped["fw2"].shape[1]                    # lane-padded fc2 width

    # conv1 patches from the raw boundary input; bf16 halves their DMA.
    # TODO(synk): build these in-kernel from an NHWC input to avoid the
    # k1^2/s1^2 HBM duplication at production (84x84, batch>=32) sizes.
    p1 = _im2col_nchw(x, k1, s1).astype(jnp.bfloat16)      # (N*Ho1*Wo1, K1)

    bt = _pick_batch_tile(N, Ho1 * Wo1)             # batch tile per grid step
    rows1 = bt * Ho1 * Wo1

    def kernel(p1_ref, w1_ref, b1_ref, w2_ref, b2_ref, w3_ref, b3_ref,
               fw1_ref, fb1_ref, fw2_ref, fb2_ref, out_ref):
        f32, bf16 = jnp.float32, jnp.bfloat16

        # ---- conv1: one im2col GEMM for the whole batch tile.
        a1 = jnp.dot(p1_ref[...], w1_ref[...], preferred_element_type=f32)
        a1 = jnp.maximum(a1 + b1_ref[...], 0.0).astype(bf16)
        a1 = a1.reshape(bt, Ho1, Wo1, C1)           # channels-last value

        # ---- conv2: value-level im2col + one batched GEMM + bias/ReLU.
        p2 = _im2col_value(a1, k2, s2)              # (bt*Ho2*Wo2, k2*k2*C1) bf16
        a2 = jnp.dot(p2, w2_ref[...], preferred_element_type=f32)
        a2 = jnp.maximum(a2 + b2_ref[...], 0.0).astype(bf16)
        a2 = a2.reshape(bt, Ho2, Wo2, C2)

        # ---- conv3: same pattern, stride 1.
        p3 = _im2col_value(a2, k3, s3)              # (bt*Ho3*Wo3, k3*k3*C2) bf16
        a3 = jnp.dot(p3, w3_ref[...], preferred_element_type=f32)
        a3 = jnp.maximum(a3 + b3_ref[...], 0.0)     # (bt*Ho3*Wo3, C3) f32

        # ---- flatten in (h, w, c) order; fc1 weight was permuted once in
        # prepare_params to consume exactly this order (no NCHW shuffle here).
        feat = a3.reshape(bt, F).astype(bf16)
        h = jnp.dot(feat, fw1_ref[...], preferred_element_type=f32)
        h = jnp.maximum(h + fb1_ref[...], 0.0).astype(bf16)
        q = jnp.dot(h, fw2_ref[...], preferred_element_type=f32)
        out_ref[...] = (q + fb2_ref[...]).astype(out_ref.dtype)

    weight_ops = (prepped["w1"], prepped["b1"],
                  prepped["w2"], prepped["b2"],
                  prepped["w3"], prepped["b3"],
                  prepped["fw1"], prepped["fb1"],
                  prepped["fw2"], prepped["fb2"])
    const_map = lambda b: (0, 0)                    # weights VMEM-resident

    out_padded = pl.pallas_call(
        kernel,
        out_shape=jax.ShapeDtypeStruct((N, Ap), jnp.float32),
        grid=(N // bt,),
        in_specs=[pl.BlockSpec((rows1, K1), lambda b: (b, 0))]
                 + [pl.BlockSpec(w.shape, const_map) for w in weight_ops],
        out_specs=pl.BlockSpec((bt, Ap), lambda b: (b, 0)),
        compiler_params=pltpu.CompilerParams(
            dimension_semantics=("parallel",),          # shard tiles on v7x cores
            vmem_limit_bytes=48 * 1024 * 1024),         # headroom under v7x 64MiB
    )(p1, *weight_ops)

    return out_padded[:, :action_space]


# ----------------------------------------------------------------------------
# Parameters: torch-layout init + one-time prep for the fused kernel
# ----------------------------------------------------------------------------
def init_params(key, input_dimensions, action_space):
    """Random parameters in the original PyTorch layouts."""
    c_in, H, W = input_dimensions
    (C1, k1, s1), (C2, k2, s2), (C3, k3, s3) = _CONV_SPECS
    h1, w1 = _conv_out(H, W, k1, s1)
    h2, w2 = _conv_out(h1, w1, k2, s2)
    h3, w3 = _conv_out(h2, w2, k3, s3)
    conv_out_size = C3 * h3 * w3
    ks = jax.random.split(key, 10)

    def rnd(k, shape, scale=0.05):
        return jax.random.normal(k, shape, dtype=jnp.float32) * scale

    return {
        "conv1_w": rnd(ks[0], (C1, c_in, k1, k1)),
        "conv1_b": rnd(ks[1], (C1,)),
        "conv2_w": rnd(ks[2], (C2, C1, k2, k2)),
        "conv2_b": rnd(ks[3], (C2,)),
        "conv3_w": rnd(ks[4], (C3, C2, k3, k3)),
        "conv3_b": rnd(ks[5], (C3,)),
        "fc1_w": rnd(ks[6], (_FC_HIDDEN, conv_out_size)),
        "fc1_b": rnd(ks[7], (_FC_HIDDEN,)),
        "fc2_w": rnd(ks[8], (action_space, _FC_HIDDEN)),
        "fc2_b": rnd(ks[9], (action_space,)),
    }


def prepare_params(params, input_dimensions):
    """One-time weight prep: all transposes / reshapes / padding / bf16 casts
    happen here so the per-step forward does zero parameter reshuffling."""
    _, H, W = input_dimensions
    (C1, k1, s1), (C2, k2, s2), (C3, k3, s3) = _CONV_SPECS
    h1, w1 = _conv_out(H, W, k1, s1)
    h2, w2 = _conv_out(h1, w1, k2, s2)
    h3, w3 = _conv_out(h2, w2, k3, s3)
    bf16, f32 = jnp.bfloat16, jnp.float32
    hid = params["fc1_w"].shape[0]
    n_act = params["fc2_w"].shape[0]
    a_pad = -(-n_act // _LANES) * _LANES            # lane-dense fc2 output

    def conv_mat(w):   # (C_out, C_in, k, k) -> (k*k*C_in, C_out), (kh,kw,c) order
        co, ci, kh, kw = w.shape
        return w.transpose(2, 3, 1, 0).reshape(kh * kw * ci, co).astype(bf16)

    fw2 = jnp.pad(params["fc2_w"].T, ((0, 0), (0, a_pad - n_act))).astype(bf16)
    fb2 = jnp.pad(params["fc2_b"], (0, a_pad - n_act)).reshape(1, -1).astype(f32)

    return {
        # conv1 keeps torch's (c, kh, kw) flattening: its patches come from
        # _im2col_nchw in the wrapper.
        "w1": params["conv1_w"].reshape(C1, -1).T.astype(bf16),
        "b1": params["conv1_b"].reshape(1, -1).astype(f32),
        # conv2/conv3 consume the kernel's (kh, kw, c)-ordered patch columns.
        "w2": conv_mat(params["conv2_w"]),
        "b2": params["conv2_b"].reshape(1, -1).astype(f32),
        "w3": conv_mat(params["conv3_w"]),
        "b3": params["conv3_b"].reshape(1, -1).astype(f32),
        # fc1 consumes the kernel's (h, w, c)-ordered features: fold the NCHW
        # flatten permutation into the weight once here.
        "fw1": params["fc1_w"].reshape(hid, C3, h3, w3)
                              .transpose(2, 3, 1, 0)
                              .reshape(h3 * w3 * C3, hid).astype(bf16),
        "fb1": params["fc1_b"].reshape(1, -1).astype(f32),
        "fw2": fw2,
        "fb2": fb2,
    }


# ----------------------------------------------------------------------------
# Pure-JAX reference (PyTorch semantics) for the self-check
# ----------------------------------------------------------------------------
def reference_forward(x, params):
    def conv(y, w, b, stride):
        y = jax.lax.conv_general_dilated(
            y, w, window_strides=(stride, stride), padding="VALID",
            dimension_numbers=("NCHW", "OIHW", "NCHW"))
        return jax.nn.relu(y + b.reshape(1, -1, 1, 1))

    y = conv(x, params["conv1_w"], params["conv1_b"], 4)
    y = conv(y, params["conv2_w"], params["conv2_b"], 2)
    y = conv(y, params["conv3_w"], params["conv3_b"], 1)
    y = y.reshape(y.shape[0], -1)
    y = jax.nn.relu(y @ params["fc1_w"].T + params["fc1_b"])
    return y @ params["fc2_w"].T + params["fc2_b"]


if __name__ == "__main__":
    # (C, H, W) = (4, 36, 36) is the smallest spatial size this conv trunk
    # admits: conv1 -> (32, 8, 8), conv2 -> (64, 3, 3), conv3 -> (64, 1, 1),
    # so the flatten size is 64.
    input_dimensions = (4, 36, 36)
    action_space = 7
    batch = 2

    key = jax.random.PRNGKey(0)
    k_x, k_p = jax.random.split(key)
    x = jax.random.normal(k_x, (batch,) + input_dimensions, dtype=jnp.float32)
    params = init_params(k_p, input_dimensions, action_space)
    prepped = prepare_params(params, input_dimensions)

    q_values = jax.block_until_ready(
        mario_net_forward(x, prepped, action_space=action_space))
    assert q_values.shape == (batch, action_space), q_values.shape
    assert q_values.dtype == jnp.float32

    # Numerical sanity check vs a pure-JAX f32 reference (kernel matmuls run
    # bf16 operands with f32 accumulation, hence the loose tolerance).
    ref = reference_forward(x, params)
    max_err = float(jnp.max(jnp.abs(q_values - ref)))
    assert max_err < 5e-2, f"max abs error vs reference: {max_err}"

    print("KERNEL_OK")
</pallas_src>

<mosaic_0001>
module attributes {stable_mosaic.version = 11 : i64} {
  func.func @kernel(%arg0: i32, %arg1: memref<128x256xbf16, #tpu.memory_space<vmem>>, %arg2: memref<256x32xbf16, #tpu.memory_space<vmem>>, %arg3: memref<1x32xf32, #tpu.memory_space<vmem>>, %arg4: memref<512x64xbf16, #tpu.memory_space<vmem>>, %arg5: memref<1x64xf32, #tpu.memory_space<vmem>>, %arg6: memref<576x64xbf16, #tpu.memory_space<vmem>>, %arg7: memref<1x64xf32, #tpu.memory_space<vmem>>, %arg8: memref<64x512xbf16, #tpu.memory_space<vmem>>, %arg9: memref<1x512xf32, #tpu.memory_space<vmem>>, %arg10: memref<512x128xbf16, #tpu.memory_space<vmem>>, %arg11: memref<1x128xf32, #tpu.memory_space<vmem>>, %arg12: memref<2x128xf32, #tpu.memory_space<vmem>>) attributes {dimension_semantics = [#tpu.dimension_semantics<parallel>], iteration_bounds = array<i64: 1>, scalar_prefetch = 0 : i64, scratch_operands = 0 : i64, tpu.core_type = #tpu.core_type<tc>, window_params = [{transform_indices = @transform_0, window_bounds = array<i64: 128, 256>}, {pipeline_mode = #tpu.pipeline_mode<synchronous>, transform_indices = @transform_1, window_bounds = array<i64: 256, 32>}, {pipeline_mode = #tpu.pipeline_mode<synchronous>, transform_indices = @transform_2, window_bounds = array<i64: 1, 32>}, {pipeline_mode = #tpu.pipeline_mode<synchronous>, transform_indices = @transform_3, window_bounds = array<i64: 512, 64>}, {pipeline_mode = #tpu.pipeline_mode<synchronous>, transform_indices = @transform_4, window_bounds = array<i64: 1, 64>}, {pipeline_mode = #tpu.pipeline_mode<synchronous>, transform_indices = @transform_5, window_bounds = array<i64: 576, 64>}, {pipeline_mode = #tpu.pipeline_mode<synchronous>, transform_indices = @transform_6, window_bounds = array<i64: 1, 64>}, {pipeline_mode = #tpu.pipeline_mode<synchronous>, transform_indices = @transform_7, window_bounds = array<i64: 64, 512>}, {pipeline_mode = #tpu.pipeline_mode<synchronous>, transform_indices = @transform_8, window_bounds = array<i64: 1, 512>}, {pipeline_mode = #tpu.pipeline_mode<synchronous>, transform_indices = @transform_9, window_bounds = array<i64: 512, 128>}, {pipeline_mode = #tpu.pipeline_mode<synchronous>, transform_indices = @transform_10, window_bounds = array<i64: 1, 128>}, {transform_indices = @transform_11, window_bounds = array<i64: 2, 128>}]} {
    %c0 = arith.constant 0 : index
    %c0_0 = arith.constant 0 : index
    %0 = vector.load %arg1[%c0, %c0_0] : memref<128x256xbf16, #tpu.memory_space<vmem>>, vector<128x256xbf16>
    %c0_1 = arith.constant 0 : index
    %c0_2 = arith.constant 0 : index
    %1 = vector.load %arg2[%c0_1, %c0_2] : memref<256x32xbf16, #tpu.memory_space<vmem>>, vector<256x32xbf16>
    %cst = arith.constant dense<0.000000e+00> : vector<128x32xf32>
    %2 = tpu.matmul %0, %1, %cst {dimension_numbers = #tpu.dot_dimension_numbers<[1], [0], [0], [1], [0, 0, 1, 1], [], []>} : vector<128x256xbf16>, vector<256x32xbf16>, vector<128x32xf32> -> vector<128x32xf32>
    %c0_3 = arith.constant 0 : index
    %c0_4 = arith.constant 0 : index
    %3 = vector.load %arg3[%c0_3, %c0_4] : memref<1x32xf32, #tpu.memory_space<vmem>>, vector<1x32xf32>
    %4 = vector.broadcast %3 : vector<1x32xf32> to vector<128x32xf32>
    %5 = arith.addf %2, %4 : vector<128x32xf32>
    %cst_5 = arith.constant 0.000000e+00 : f32
    %6 = vector.broadcast %cst_5 : f32 to vector<128x32xf32>
    %7 = arith.maximumf %5, %6 : vector<128x32xf32>
    %8 = arith.truncf %7 : vector<128x32xf32> to vector<128x32xbf16>
    %9 = vector.shape_cast %8 : vector<128x32xbf16> to vector<2x8x8x32xbf16>
    %10 = vector.shape_cast %9 : vector<2x8x8x32xbf16> to vector<2x4x2x4x2x32xbf16>
    %11 = vector.extract_strided_slice %10 {offsets = [0, 0, 0, 0, 0, 0], sizes = [2, 3, 1, 3, 1, 32], strides = [1, 1, 1, 1, 1, 1]} : vector<2x4x2x4x2x32xbf16> to vector<2x3x1x3x1x32xbf16>
    %12 = vector.shape_cast %11 : vector<2x3x1x3x1x32xbf16> to vector<2x3x3x32xbf16>
    %13 = vector.extract_strided_slice %10 {offsets = [0, 0, 0, 0, 1, 0], sizes = [2, 3, 1, 3, 1, 32], strides = [1, 1, 1, 1, 1, 1]} : vector<2x4x2x4x2x32xbf16> to vector<2x3x1x3x1x32xbf16>
    %14 = vector.shape_cast %13 : vector<2x3x1x3x1x32xbf16> to vector<2x3x3x32xbf16>
    %15 = vector.extract_strided_slice %10 {offsets = [0, 0, 0, 1, 0, 0], sizes = [2, 3, 1, 3, 1, 32], strides = [1, 1, 1, 1, 1, 1]} : vector<2x4x2x4x2x32xbf16> to vector<2x3x1x3x1x32xbf16>
    %16 = vector.shape_cast %15 : vector<2x3x1x3x1x32xbf16> to vector<2x3x3x32xbf16>
    %17 = vector.extract_strided_slice %10 {offsets = [0, 0, 0, 1, 1, 0], sizes = [2, 3, 1, 3, 1, 32], strides = [1, 1, 1, 1, 1, 1]} : vector<2x4x2x4x2x32xbf16> to vector<2x3x1x3x1x32xbf16>
    %18 = vector.shape_cast %17 : vector<2x3x1x3x1x32xbf16> to vector<2x3x3x32xbf16>
    %19 = vector.extract_strided_slice %10 {offsets = [0, 0, 1, 0, 0, 0], sizes = [2, 3, 1, 3, 1, 32], strides = [1, 1, 1, 1, 1, 1]} : vector<2x4x2x4x2x32xbf16> to vector<2x3x1x3x1x32xbf16>
    %20 = vector.shape_cast %19 : vector<2x3x1x3x1x32xbf16> to vector<2x3x3x32xbf16>
    %21 = vector.extract_strided_slice %10 {offsets = [0, 0, 1, 0, 1, 0], sizes = [2, 3, 1, 3, 1, 32], strides = [1, 1, 1, 1, 1, 1]} : vector<2x4x2x4x2x32xbf16> to vector<2x3x1x3x1x32xbf16>
    %22 = vector.shape_cast %21 : vector<2x3x1x3x1x32xbf16> to vector<2x3x3x32xbf16>
    %23 = vector.extract_strided_slice %10 {offsets = [0, 0, 1, 1, 0, 0], sizes = [2, 3, 1, 3, 1, 32], strides = [1, 1, 1, 1, 1, 1]} : vector<2x4x2x4x2x32xbf16> to vector<2x3x1x3x1x32xbf16>
    %24 = vector.shape_cast %23 : vector<2x3x1x3x1x32xbf16> to vector<2x3x3x32xbf16>
    %25 = vector.extract_strided_slice %10 {offsets = [0, 0, 1, 1, 1, 0], sizes = [2, 3, 1, 3, 1, 32], strides = [1, 1, 1, 1, 1, 1]} : vector<2x4x2x4x2x32xbf16> to vector<2x3x1x3x1x32xbf16>
    %26 = vector.shape_cast %25 : vector<2x3x1x3x1x32xbf16> to vector<2x3x3x32xbf16>
    %27 = vector.extract_strided_slice %10 {offsets = [0, 1, 0, 0, 0, 0], sizes = [2, 3, 1, 3, 1, 32], strides = [1, 1, 1, 1, 1, 1]} : vector<2x4x2x4x2x32xbf16> to vector<2x3x1x3x1x32xbf16>
    %28 = vector.shape_cast %27 : vector<2x3x1x3x1x32xbf16> to vector<2x3x3x32xbf16>
    %29 = vector.extract_strided_slice %10 {offsets = [0, 1, 0, 0, 1, 0], sizes = [2, 3, 1, 3, 1, 32], strides = [1, 1, 1, 1, 1, 1]} : vector<2x4x2x4x2x32xbf16> to vector<2x3x1x3x1x32xbf16>
    %30 = vector.shape_cast %29 : vector<2x3x1x3x1x32xbf16> to vector<2x3x3x32xbf16>
    %31 = vector.extract_strided_slice %10 {offsets = [0, 1, 0, 1, 0, 0], sizes = [2, 3, 1, 3, 1, 32], strides = [1, 1, 1, 1, 1, 1]} : vector<2x4x2x4x2x32xbf16> to vector<2x3x1x3x1x32xbf16>
    %32 = vector.shape_cast %31 : vector<2x3x1x3x1x32xbf16> to vector<2x3x3x32xbf16>
    %33 = vector.extract_strided_slice %10 {offsets = [0, 1, 0, 1, 1, 0], sizes = [2, 3, 1, 3, 1, 32], strides = [1, 1, 1, 1, 1, 1]} : vector<2x4x2x4x2x32xbf16> to vector<2x3x1x3x1x32xbf16>
    %34 = vector.shape_cast %33 : vector<2x3x1x3x1x32xbf16> to vector<2x3x3x32xbf16>
    %35 = vector.extract_strided_slice %10 {offsets = [0, 1, 1, 0, 0, 0], sizes = [2, 3, 1, 3, 1, 32], strides = [1, 1, 1, 1, 1, 1]} : vector<2x4x2x4x2x32xbf16> to vector<2x3x1x3x1x32xbf16>
    %36 = vector.shape_cast %35 : vector<2x3x1x3x1x32xbf16> to vector<2x3x3x32xbf16>
    %37 = vector.extract_strided_slice %10 {offsets = [0, 1, 1, 0, 1, 0], sizes = [2, 3, 1, 3, 1, 32], strides = [1, 1, 1, 1, 1, 1]} : vector<2x4x2x4x2x32xbf16> to vector<2x3x1x3x1x32xbf16>
    %38 = vector.shape_cast %37 : vector<2x3x1x3x1x32xbf16> to vector<2x3x3x32xbf16>
    %39 = vector.extract_strided_slice %10 {offsets = [0, 1, 1, 1, 0, 0], sizes = [2, 3, 1, 3, 1, 32], strides = [1, 1, 1, 1, 1, 1]} : vector<2x4x2x4x2x32xbf16> to vector<2x3x1x3x1x32xbf16>
    %40 = vector.shape_cast %39 : vector<2x3x1x3x1x32xbf16> to vector<2x3x3x32xbf16>
    %41 = vector.extract_strided_slice %10 {offsets = [0, 1, 1, 1, 1, 0], sizes = [2, 3, 1, 3, 1, 32], strides = [1, 1, 1, 1, 1, 1]} : vector<2x4x2x4x2x32xbf16> to vector<2x3x1x3x1x32xbf16>
    %42 = vector.shape_cast %41 : vector<2x3x1x3x1x32xbf16> to vector<2x3x3x32xbf16>
    %43 = tpu.concatenate %12, %14, %16, %18, %20, %22, %24, %26, %28, %30, %32, %34, %36, %38, %40, %42 in 3 : vector<2x3x3x32xbf16>, vector<2x3x3x32xbf16>, vector<2x3x3x32xbf16>, vector<2x3x3x32xbf16>, vector<2x3x3x32xbf16>, vector<2x3x3x32xbf16>, vector<2x3x3x32xbf16>, vector<2x3x3x32xbf16>, vector<2x3x3x32xbf16>, vector<2x3x3x32xbf16>, vector<2x3x3x32xbf16>, vector<2x3x3x32xbf16>, vector<2x3x3x32xbf16>, vector<2x3x3x32xbf16>, vector<2x3x3x32xbf16>, vector<2x3x3x32xbf16> -> vector<2x3x3x512xbf16>
    %44 = vector.shape_cast %43 : vector<2x3x3x512xbf16> to vector<18x512xbf16>
    %c0_6 = arith.constant 0 : index
    %c0_7 = arith.constant 0 : index
    %45 = vector.load %arg4[%c0_6, %c0_7] : memref<512x64xbf16, #tpu.memory_space<vmem>>, vector<512x64xbf16>
    %cst_8 = arith.constant dense<0.000000e+00> : vector<18x64xf32>
    %46 = tpu.matmul %44, %45, %cst_8 {dimension_numbers = #tpu.dot_dimension_numbers<[1], [0], [0], [1], [0, 0, 1, 1], [], []>} : vector<18x512xbf16>, vector<512x64xbf16>, vector<18x64xf32> -> vector<18x64xf32>
    %c0_9 = arith.constant 0 : index
    %c0_10 = arith.constant 0 : index
    %47 = vector.load %arg5[%c0_9, %c0_10] : memref<1x64xf32, #tpu.memory_space<vmem>>, vector<1x64xf32>
    %48 = vector.broadcast %47 : vector<1x64xf32> to vector<18x64xf32>
    %49 = arith.addf %46, %48 : vector<18x64xf32>
    %cst_11 = arith.constant 0.000000e+00 : f32
    %50 = vector.broadcast %cst_11 : f32 to vector<18x64xf32>
    %51 = arith.maximumf %49, %50 : vector<18x64xf32>
    %52 = arith.truncf %51 : vector<18x64xf32> to vector<18x64xbf16>
    %53 = vector.shape_cast %52 : vector<18x64xbf16> to vector<2x3x3x64xbf16>
    %54 = vector.extract_strided_slice %53 {offsets = [0, 0, 0, 0], sizes = [2, 1, 1, 64], strides = [1, 1, 1, 1]} : vector<2x3x3x64xbf16> to vector<2x1x1x64xbf16>
    %55 = vector.extract_strided_slice %53 {offsets = [0, 0, 1, 0], sizes = [2, 1, 1, 64], strides = [1, 1, 1, 1]} : vector<2x3x3x64xbf16> to vector<2x1x1x64xbf16>
    %56 = vector.extract_strided_slice %53 {offsets = [0, 0, 2, 0], sizes = [2, 1, 1, 64], strides = [1, 1, 1, 1]} : vector<2x3x3x64xbf16> to vector<2x1x1x64xbf16>
    %57 = vector.extract_strided_slice %53 {offsets = [0, 1, 0, 0], sizes = [2, 1, 1, 64], strides = [1, 1, 1, 1]} : vector<2x3x3x64xbf16> to vector<2x1x1x64xbf16>
    %58 = vector.extract_strided_slice %53 {offsets = [0, 1, 1, 0], sizes = [2, 1, 1, 64], strides = [1, 1, 1, 1]} : vector<2x3x3x64xbf16> to vector<2x1x1x64xbf16>
    %59 = vector.extract_strided_slice %53 {offsets = [0, 1, 2, 0], sizes = [2, 1, 1, 64], strides = [1, 1, 1, 1]} : vector<2x3x3x64xbf16> to vector<2x1x1x64xbf16>
    %60 = vector.extract_strided_slice %53 {offsets = [0, 2, 0, 0], sizes = [2, 1, 1, 64], strides = [1, 1, 1, 1]} : vector<2x3x3x64xbf16> to vector<2x1x1x64xbf16>
    %61 = vector.extract_strided_slice %53 {offsets = [0, 2, 1, 0], sizes = [2, 1, 1, 64], strides = [1, 1, 1, 1]} : vector<2x3x3x64xbf16> to vector<2x1x1x64xbf16>
    %62 = vector.extract_strided_slice %53 {offsets = [0, 2, 2, 0], sizes = [2, 1, 1, 64], strides = [1, 1, 1, 1]} : vector<2x3x3x64xbf16> to vector<2x1x1x64xbf16>
    %63 = tpu.concatenate %54, %55, %56, %57, %58, %59, %60, %61, %62 in 3 : vector<2x1x1x64xbf16>, vector<2x1x1x64xbf16>, vector<2x1x1x64xbf16>, vector<2x1x1x64xbf16>, vector<2x1x1x64xbf16>, vector<2x1x1x64xbf16>, vector<2x1x1x64xbf16>, vector<2x1x1x64xbf16>, vector<2x1x1x64xbf16> -> vector<2x1x1x576xbf16>
    %64 = vector.shape_cast %63 : vector<2x1x1x576xbf16> to vector<2x576xbf16>
    %c0_12 = arith.constant 0 : index
    %c0_13 = arith.constant 0 : index
    %65 = vector.load %arg6[%c0_12, %c0_13] : memref<576x64xbf16, #tpu.memory_space<vmem>>, vector<576x64xbf16>
    %cst_14 = arith.constant dense<0.000000e+00> : vector<2x64xf32>
    %66 = tpu.matmul %64, %65, %cst_14 {dimension_numbers = #tpu.dot_dimension_numbers<[1], [0], [0], [1], [0, 0, 1, 1], [], []>} : vector<2x576xbf16>, vector<576x64xbf16>, vector<2x64xf32> -> vector<2x64xf32>
    %c0_15 = arith.constant 0 : index
    %c0_16 = arith.constant 0 : index
    %67 = vector.load %arg7[%c0_15, %c0_16] : memref<1x64xf32, #tpu.memory_space<vmem>>, vector<1x64xf32>
    %68 = vector.broadcast %67 : vector<1x64xf32> to vector<2x64xf32>
    %69 = arith.addf %66, %68 : vector<2x64xf32>
    %cst_17 = arith.constant 0.000000e+00 : f32
    %70 = vector.broadcast %cst_17 : f32 to vector<2x64xf32>
    %71 = arith.maximumf %69, %70 : vector<2x64xf32>
    %72 = arith.truncf %71 : vector<2x64xf32> to vector<2x64xbf16>
    %c0_18 = arith.constant 0 : index
    %c0_19 = arith.constant 0 : index
    %73 = vector.load %arg8[%c0_18, %c0_19] : memref<64x512xbf16, #tpu.memory_space<vmem>>, vector<64x512xbf16>
    %cst_20 = arith.constant dense<0.000000e+00> : vector<2x512xf32>
    %74 = tpu.matmul %72, %73, %cst_20 {dimension_numbers = #tpu.dot_dimension_numbers<[1], [0], [0], [1], [0, 0, 1, 1], [], []>} : vector<2x64xbf16>, vector<64x512xbf16>, vector<2x512xf32> -> vector<2x512xf32>
    %c0_21 = arith.constant 0 : index
    %c0_22 = arith.constant 0 : index
    %75 = vector.load %arg9[%c0_21, %c0_22] : memref<1x512xf32, #tpu.memory_space<vmem>>, vector<1x512xf32>
    %76 = vector.broadcast %75 : vector<1x512xf32> to vector<2x512xf32>
    %77 = arith.addf %74, %76 : vector<2x512xf32>
    %cst_23 = arith.constant 0.000000e+00 : f32
    %78 = vector.broadcast %cst_23 : f32 to vector<2x512xf32>
    %79 = arith.maximumf %77, %78 : vector<2x512xf32>
    %80 = arith.truncf %79 : vector<2x512xf32> to vector<2x512xbf16>
    %c0_24 = arith.constant 0 : index
    %c0_25 = arith.constant 0 : index
    %81 = vector.load %arg10[%c0_24, %c0_25] : memref<512x128xbf16, #tpu.memory_space<vmem>>, vector<512x128xbf16>
    %cst_26 = arith.constant dense<0.000000e+00> : vector<2x128xf32>
    %82 = tpu.matmul %80, %81, %cst_26 {dimension_numbers = #tpu.dot_dimension_numbers<[1], [0], [0], [1], [0, 0, 1, 1], [], []>} : vector<2x512xbf16>, vector<512x128xbf16>, vector<2x128xf32> -> vector<2x128xf32>
    %c0_27 = arith.constant 0 : index
    %c0_28 = arith.constant 0 : index
    %83 = vector.load %arg11[%c0_27, %c0_28] : memref<1x128xf32, #tpu.memory_space<vmem>>, vector<1x128xf32>
    %84 = vector.broadcast %83 : vector<1x128xf32> to vector<2x128xf32>
    %85 = arith.addf %82, %84 : vector<2x128xf32>
    %c0_29 = arith.constant 0 : index
    %c0_30 = arith.constant 0 : index
    %86 = vector.load %arg12[%c0_29, %c0_30] : memref<2x128xf32, #tpu.memory_space<vmem>>, vector<2x128xf32>
    tpu.vector_store %arg12[%c0_29, %c0_30], %85 {strides = array<i32>} : memref<2x128xf32, #tpu.memory_space<vmem>>, vector<2x128xf32>,
    return
  }
  func.func @transform_0(%arg0: i32) -> (i32, i32) {
    %c0_i32 = arith.constant 0 : i32
    %c0_i32_0 = arith.constant 0 : i32
    return %arg0, %c0_i32 : i32, i32
  }
  func.func @transform_1(%arg0: i32) -> (i32, i32) {
    %c0_i32 = arith.constant 0 : i32
    %c0_i32_0 = arith.constant 0 : i32
    %c0_i32_1 = arith.constant 0 : i32
    return %c0_i32, %c0_i32_0 : i32, i32
  }
  func.func @transform_2(%arg0: i32) -> (i32, i32) {
    %c0_i32 = arith.constant 0 : i32
    %c0_i32_0 = arith.constant 0 : i32
    %c0_i32_1 = arith.constant 0 : i32
    return %c0_i32, %c0_i32_0 : i32, i32
  }
  func.func @transform_3(%arg0: i32) -> (i32, i32) {
    %c0_i32 = arith.constant 0 : i32
    %c0_i32_0 = arith.constant 0 : i32
    %c0_i32_1 = arith.constant 0 : i32
    return %c0_i32, %c0_i32_0 : i32, i32
  }
  func.func @transform_4(%arg0: i32) -> (i32, i32) {
    %c0_i32 = arith.constant 0 : i32
    %c0_i32_0 = arith.constant 0 : i32
    %c0_i32_1 = arith.constant 0 : i32
    return %c0_i32, %c0_i32_0 : i32, i32
  }
  func.func @transform_5(%arg0: i32) -> (i32, i32) {
    %c0_i32 = arith.constant 0 : i32
    %c0_i32_0 = arith.constant 0 : i32
    %c0_i32_1 = arith.constant 0 : i32
    return %c0_i32, %c0_i32_0 : i32, i32
  }
  func.func @transform_6(%arg0: i32) -> (i32, i32) {
    %c0_i32 = arith.constant 0 : i32
    %c0_i32_0 = arith.constant 0 : i32
    %c0_i32_1 = arith.constant 0 : i32
    return %c0_i32, %c0_i32_0 : i32, i32
  }
  func.func @transform_7(%arg0: i32) -> (i32, i32) {
    %c0_i32 = arith.constant 0 : i32
    %c0_i32_0 = arith.constant 0 : i32
    %c0_i32_1 = arith.constant 0 : i32
    return %c0_i32, %c0_i32_0 : i32, i32
  }
  func.func @transform_8(%arg0: i32) -> (i32, i32) {
    %c0_i32 = arith.constant 0 : i32
    %c0_i32_0 = arith.constant 0 : i32
    %c0_i32_1 = arith.constant 0 : i32
    return %c0_i32, %c0_i32_0 : i32, i32
  }
  func.func @transform_9(%arg0: i32) -> (i32, i32) {
    %c0_i32 = arith.constant 0 : i32
    %c0_i32_0 = arith.constant 0 : i32
    %c0_i32_1 = arith.constant 0 : i32
    return %c0_i32, %c0_i32_0 : i32, i32
  }
  func.func @transform_10(%arg0: i32) -> (i32, i32) {
    %c0_i32 = arith.constant 0 : i32
    %c0_i32_0 = arith.constant 0 : i32
    %c0_i32_1 = arith.constant 0 : i32
    return %c0_i32, %c0_i32_0 : i32, i32
  }
  func.func @transform_11(%arg0: i32) -> (i32, i32) {
    %c0_i32 = arith.constant 0 : i32
    %c0_i32_0 = arith.constant 0 : i32
    return %arg0, %c0_i32 : i32, i32
  }
}

</mosaic_0001>

<llo_original>
// kernel: mario_net_forward.1
$region0: #{mario_net_forward.1}
  #allocation0 [shape = 'u32[]', space=smem, size = 0x4, offset = 0x4, fixed_abs, tag = 'smem constant byte address 0x4 - core index']
  #allocation1 [shape = 'u32[144,128]{1,0:T(1,128)}', space=vmem, size = 0x12000, scoped, tag = 'internal scratch']
  %s0 = inlined_call_operand.vmem [shape: bf16[128,256], index: 0, kind: input, shape index: {}]
  %s1 = inlined_call_operand.vmem [shape: bf16[256,32], index: 1, kind: input, shape index: {}]
  %s2 = inlined_call_operand.vmem [shape: f32[1,32], index: 2, kind: input, shape index: {}]
  %s3 = inlined_call_operand.vmem [shape: bf16[512,64], index: 3, kind: input, shape index: {}]
  %s4 = inlined_call_operand.vmem [shape: f32[1,64], index: 4, kind: input, shape index: {}]
  %s5 = inlined_call_operand.vmem [shape: bf16[576,64], index: 5, kind: input, shape index: {}]
  %s6 = inlined_call_operand.vmem [shape: f32[1,64], index: 6, kind: input, shape index: {}]
  %s7 = inlined_call_operand.vmem [shape: bf16[64,512], index: 7, kind: input, shape index: {}]
  %s8 = inlined_call_operand.vmem [shape: f32[1,512], index: 8, kind: input, shape index: {}]
  %s9 = inlined_call_operand.vmem [shape: bf16[512,128], index: 9, kind: input, shape index: {}]
  %s10 = inlined_call_operand.vmem [shape: f32[1,128], index: 10, kind: input, shape index: {}]
  %s11 = inlined_call_operand.hbm [shape: f32[2,128], index: 11, kind: output, shape index: {}]
  %s12 = sld [smem:[#allocation0]]
  $region54: #{mario_net_forward.1} parent=0
    _
  %s14 = ssub.s32 1, %s12
  %s15 = scalar_select 0, %s14, %s12
  $region1: #{mario_net_forward.1} parent=0
    #allocation2 [shape = 'u8[1024]{0}', space=vmem, size = 0x400, scoped, tag = 'output window, operand 0, single buffered']
    #allocation3 [shape = 's32[1]{0}', space=sflag, size = 0x4, scoped, tag = 'scoped memory for mario_net_forward.1']
    %16 = vsyncpa [#allocation3], 0
    // Predicated region
    $region2: #{mario_net_forward.1} parent=1 // pred_check
      _
    $region3: #{mario_net_forward.1} parent=1 // pred_check_branch
      %18 = sbr.rel (0) target = $region5
    $region4: #{mario_net_forward.1} parent=1 // pred_region
      _
    $region5: #{mario_net_forward.1} parent=1 // pred_fallthru
      _
    // Predicated region
    $region6: #{mario_net_forward.1} parent=1 // pred_check
      _
    $region7: #{mario_net_forward.1} parent=1 // pred_check_branch
      %20 = sbr.rel (0) target = $region9
    $region8: #{mario_net_forward.1} parent=1 // pred_region
      _
    $region9: #{mario_net_forward.1} parent=1 // pred_fallthru
      _
    // Predicated region
    $region10: #{mario_net_forward.1} parent=1 // pred_check
      _
    $region11: #{mario_net_forward.1} parent=1 // pred_check_branch
      %22 = sbr.rel (0) target = $region13
    $region12: #{mario_net_forward.1} parent=1 // pred_region
      _
    $region13: #{mario_net_forward.1} parent=1 // pred_fallthru
      _
    // Predicated region
    $region14: #{mario_net_forward.1} parent=1 // pred_check
      _
    $region15: #{mario_net_forward.1} parent=1 // pred_check_branch
      %24 = sbr.rel (0) target = $region17
    $region16: #{mario_net_forward.1} parent=1 // pred_region
      _
    $region17: #{mario_net_forward.1} parent=1 // pred_fallthru
      _
    // Predicated region
    $region18: #{mario_net_forward.1} parent=1 // pred_check
      _
    $region19: #{mario_net_forward.1} parent=1 // pred_check_branch
      %26 = sbr.rel (0) target = $region21
    $region20: #{mario_net_forward.1} parent=1 // pred_region
      _
    $region21: #{mario_net_forward.1} parent=1 // pred_fallthru
      _
    // Predicated region
    $region22: #{mario_net_forward.1} parent=1 // pred_check
      _
    $region23: #{mario_net_forward.1} parent=1 // pred_check_branch
      %28 = sbr.rel (0) target = $region25
    $region24: #{mario_net_forward.1} parent=1 // pred_region
      _
    $region25: #{mario_net_forward.1} parent=1 // pred_fallthru
      _
    // Predicated region
    $region26: #{mario_net_forward.1} parent=1 // pred_check
      _
    $region27: #{mario_net_forward.1} parent=1 // pred_check_branch
      %30 = sbr.rel (0) target = $region29
    $region28: #{mario_net_forward.1} parent=1 // pred_region
      _
    $region29: #{mario_net_forward.1} parent=1 // pred_fallthru
      _
    // Predicated region
    $region30: #{mario_net_forward.1} parent=1 // pred_check
      _
    $region31: #{mario_net_forward.1} parent=1 // pred_check_branch
      %32 = sbr.rel (0) target = $region33
    $region32: #{mario_net_forward.1} parent=1 // pred_region
      _
    $region33: #{mario_net_forward.1} parent=1 // pred_fallthru
      _
    // Predicated region
    $region34: #{mario_net_forward.1} parent=1 // pred_check
      _
    $region35: #{mario_net_forward.1} parent=1 // pred_check_branch
      %34 = sbr.rel (0) target = $region37
    $region36: #{mario_net_forward.1} parent=1 // pred_region
      _
    $region37: #{mario_net_forward.1} parent=1 // pred_fallthru
      _
    // Predicated region
    $region38: #{mario_net_forward.1} parent=1 // pred_check
      _
    $region39: #{mario_net_forward.1} parent=1 // pred_check_branch
      %36 = sbr.rel (0) target = $region41
    $region40: #{mario_net_forward.1} parent=1 // pred_region
      _
    $region41: #{mario_net_forward.1} parent=1 // pred_fallthru
      _
    // Predicated region
    $region42: #{mario_net_forward.1} parent=1 // pred_check
      _
    $region43: #{mario_net_forward.1} parent=1 // pred_check_branch
      %38 = sbr.rel (0) target = $region45
    $region44: #{mario_net_forward.1} parent=1 // pred_region
      _
    $region45: #{mario_net_forward.1} parent=1 // pred_fallthru
      _
    %v40 = vld [vmem:[%s0] sm:$0xff]
    %v41 = vld [vmem:[%s0 + $0x8] sm:$0xff]
    %v42 = vld [vmem:[%s0 + $0x10] sm:$0xff]
    %v43 = vld [vmem:[%s0 + $0x18] sm:$0xff]
    %v44 = vld [vmem:[%s0 + $0x20] sm:$0xff]
    %v45 = vld [vmem:[%s0 + $0x28] sm:$0xff]
    %v46 = vld [vmem:[%s0 + $0x30] sm:$0xff]
    %v47 = vld [vmem:[%s0 + $0x38] sm:$0xff]
    %v48 = vld [vmem:[%s0 + $0x40] sm:$0xff]
    %v49 = vld [vmem:[%s0 + $0x48] sm:$0xff]
    %v50 = vld [vmem:[%s0 + $0x50] sm:$0xff]
    %v51 = vld [vmem:[%s0 + $0x58] sm:$0xff]
    %v52 = vld [vmem:[%s0 + $0x60] sm:$0xff]
    %v53 = vld [vmem:[%s0 + $0x68] sm:$0xff]
    %v54 = vld [vmem:[%s0 + $0x70] sm:$0xff]
    %v55 = vld [vmem:[%s0 + $0x78] sm:$0xff]
    %v56 = vld [vmem:[%s1] sm:$0xf]
    %v57 = vld [vmem:[%s1 + $0x4] sm:$0xf]
    %v58 = vld [vmem:[%s1 + $0x8] sm:$0xf]
    %v59 = vld [vmem:[%s1 + $0xc] sm:$0xf]
    %v60 = vld [vmem:[%s1 + $0x10] sm:$0xf]
    %v61 = vld [vmem:[%s1 + $0x14] sm:$0xf]
    %v62 = vld [vmem:[%s1 + $0x18] sm:$0xf]
    %v63 = vld [vmem:[%s1 + $0x1c] sm:$0xf]
    %v64 = vld [vmem:[%s1 + $0x20] sm:$0xf]
    %v65 = vld [vmem:[%s1 + $0x24] sm:$0xf]
    %v66 = vld [vmem:[%s1 + $0x28] sm:$0xf]
    %v67 = vld [vmem:[%s1 + $0x2c] sm:$0xf]
    %v68 = vld [vmem:[%s1 + $0x30] sm:$0xf]
    %v69 = vld [vmem:[%s1 + $0x34] sm:$0xf]
    %v70 = vld [vmem:[%s1 + $0x38] sm:$0xf]
    %v71 = vld [vmem:[%s1 + $0x3c] sm:$0xf]
    %v72 = vld [vmem:[%s1 + $0x40] sm:$0xf]
    %v73 = vld [vmem:[%s1 + $0x44] sm:$0xf]
    %v74 = vld [vmem:[%s1 + $0x48] sm:$0xf]
    %v75 = vld [vmem:[%s1 + $0x4c] sm:$0xf]
    %v76 = vld [vmem:[%s1 + $0x50] sm:$0xf]
    %v77 = vld [vmem:[%s1 + $0x54] sm:$0xf]
    %v78 = vld [vmem:[%s1 + $0x58] sm:$0xf]
    %v79 = vld [vmem:[%s1 + $0x5c] sm:$0xf]
    %v80 = vld [vmem:[%s1 + $0x60] sm:$0xf]
    %v81 = vld [vmem:[%s1 + $0x64] sm:$0xf]
    %v82 = vld [vmem:[%s1 + $0x68] sm:$0xf]
    %v83 = vld [vmem:[%s1 + $0x6c] sm:$0xf]
    %v84 = vld [vmem:[%s1 + $0x70] sm:$0xf]
    %v85 = vld [vmem:[%s1 + $0x74] sm:$0xf]
    %v86 = vld [vmem:[%s1 + $0x78] sm:$0xf]
    %v87 = vld [vmem:[%s1 + $0x7c] sm:$0xf]
    %v88 = vld [vmem:[%s2] sm:$0x1]
    %v90 = vlaneseq
    %v91 = vshrl.u32 %v90, 7
    %v92 = vsub.s32 0, %v91
    %v93 = vrot.slane %v88, %v92
    %v111 = vunpack.c.l.b16 %v40
    %v112 = vunpack.c.h.b16 %v40
    %v113 = vunpack.c.l.b16 %v41
    %v114 = vunpack.c.h.b16 %v41
    %v115 = vunpack.c.l.b16 %v42
    %v116 = vunpack.c.h.b16 %v42
    %v117 = vunpack.c.l.b16 %v43
    %v118 = vunpack.c.h.b16 %v43
    %v119 = vunpack.c.l.b16 %v44
    %v120 = vunpack.c.h.b16 %v44
    %v121 = vunpack.c.l.b16 %v45
    %v122 = vunpack.c.h.b16 %v45
    %v123 = vunpack.c.l.b16 %v46
    %v124 = vunpack.c.h.b16 %v46
    %v125 = vunpack.c.l.b16 %v47
    %v126 = vunpack.c.h.b16 %v47
    %v127 = vunpack.c.l.b16 %v48
    %v128 = vunpack.c.h.b16 %v48
    %v129 = vunpack.c.l.b16 %v49
    %v130 = vunpack.c.h.b16 %v49
    %v131 = vunpack.c.l.b16 %v50
    %v132 = vunpack.c.h.b16 %v50
    %v133 = vunpack.c.l.b16 %v51
    %v134 = vunpack.c.h.b16 %v51
    %v135 = vunpack.c.l.b16 %v52
    %v136 = vunpack.c.h.b16 %v52
    %v137 = vunpack.c.l.b16 %v53
    %v138 = vunpack.c.h.b16 %v53
    %v139 = vunpack.c.l.b16 %v54
    %v140 = vunpack.c.h.b16 %v54
    %v141 = vunpack.c.l.b16 %v55
    %v142 = vunpack.c.h.b16 %v55
    %v143 = vpack.c.b16 %v113, %v111
    %v144 = vpack.c.b16 %v114, %v112
    %v145 = vpack.c.b16 %v117, %v115
    %v146 = vpack.c.b16 %v118, %v116
    %v147 = vpack.c.b16 %v121, %v119
    %v148 = vpack.c.b16 %v122, %v120
    %v149 = vpack.c.b16 %v125, %v123
    %v150 = vpack.c.b16 %v126, %v124
    %v151 = vpack.c.b16 %v129, %v127
    %v152 = vpack.c.b16 %v130, %v128
    %v153 = vpack.c.b16 %v133, %v131
    %v154 = vpack.c.b16 %v134, %v132
    %v155 = vpack.c.b16 %v137, %v135
    %v156 = vpack.c.b16 %v138, %v136
    %v157 = vpack.c.b16 %v141, %v139
    %v158 = vpack.c.b16 %v142, %v140
    %v207 = vunpack.c.l.b16 %v56
    %v208 = vunpack.c.l.b16 %v57
    %v209 = vunpack.c.l.b16 %v58
    %v210 = vunpack.c.l.b16 %v59
    %v211 = vunpack.c.l.b16 %v60
    %v212 = vunpack.c.l.b16 %v61
    %v213 = vunpack.c.l.b16 %v62
    %v214 = vunpack.c.l.b16 %v63
    %v215 = vunpack.c.l.b16 %v64
    %v216 = vunpack.c.l.b16 %v65
    %v217 = vunpack.c.l.b16 %v66
    %v218 = vunpack.c.l.b16 %v67
    %v219 = vunpack.c.l.b16 %v68
    %v220 = vunpack.c.l.b16 %v69
    %v221 = vunpack.c.l.b16 %v70
    %v222 = vunpack.c.l.b16 %v71
    %v223 = vunpack.c.l.b16 %v72
    %v224 = vunpack.c.l.b16 %v73
    %v225 = vunpack.c.l.b16 %v74
    %v226 = vunpack.c.l.b16 %v75
    %v227 = vunpack.c.l.b16 %v76
    %v228 = vunpack.c.l.b16 %v77
    %v229 = vunpack.c.l.b16 %v78
    %v230 = vunpack.c.l.b16 %v79
    %v231 = vunpack.c.l.b16 %v80
    %v232 = vunpack.c.l.b16 %v81
    %v233 = vunpack.c.l.b16 %v82
    %v234 = vunpack.c.l.b16 %v83
    %v235 = vunpack.c.l.b16 %v84
    %v236 = vunpack.c.l.b16 %v85
    %v237 = vunpack.c.l.b16 %v86
    %v238 = vunpack.c.l.b16 %v87
    %v239 = vpack.c.b16 %v208, %v207
    %v240 = vpack.c.b16 %v210, %v209
    %v241 = vpack.c.b16 %v212, %v211
    %v242 = vpack.c.b16 %v214, %v213
    %v243 = vpack.c.b16 %v216, %v215
    %v244 = vpack.c.b16 %v218, %v217
    %v245 = vpack.c.b16 %v220, %v219
    %v246 = vpack.c.b16 %v222, %v221
    %v247 = vpack.c.b16 %v224, %v223
    %v248 = vpack.c.b16 %v226, %v225
    %v249 = vpack.c.b16 %v228, %v227
    %v250 = vpack.c.b16 %v230, %v229
    %v251 = vpack.c.b16 %v232, %v231
    %v252 = vpack.c.b16 %v234, %v233
    %v253 = vpack.c.b16 %v236, %v235
    %v254 = vpack.c.b16 %v238, %v237
    %271 = vmatprep.subr.bf16.mxu0 0
    %272 = vmatpush1.bf16.msra.mxu0 %v246
    %273 = vmatprep.subr.bf16.mxu0 0
    %274 = vmatpush1.bf16.msra.mxu0 %v245
    %275 = vmatprep.subr.bf16.mxu0 0
    %276 = vmatpush1.bf16.msra.mxu0 %v244
    %277 = vmatprep.subr.bf16.mxu0 0
    %278 = vmatpush1.bf16.msra.mxu0 %v243
    %279 = vmatprep.subr.bf16.mxu0 0
    %280 = vmatpush1.bf16.msra.mxu0 %v242
    %281 = vmatprep.subr.bf16.mxu0 0
    %282 = vmatpush1.bf16.msra.mxu0 %v241
    %283 = vmatprep.subr.bf16.mxu0 0
    %284 = vmatpush1.bf16.msra.mxu0 %v240
    %285 = vmatprep.subr.bf16.mxu0 0
    %286 = vmatpush1.bf16.msra.mxu0 %v239
    %287 = vmatprep.subr.bf16.mxu0 0
    %288 = vmatpush2.bf16.msra.mxu0 %v254
    %289 = vmatprep.subr.bf16.mxu0 0
    %290 = vmatpush2.bf16.msra.mxu0 %v253
    %291 = vmatprep.subr.bf16.mxu0 0
    %292 = vmatpush2.bf16.msra.mxu0 %v252
    %293 = vmatprep.subr.bf16.mxu0 0
    %294 = vmatpush2.bf16.msra.mxu0 %v251
    %295 = vmatprep.subr.bf16.mxu0 0
    %296 = vmatpush2.bf16.msra.mxu0 %v250
    %297 = vmatprep.subr.bf16.mxu0 0
    %298 = vmatpush2.bf16.msra.mxu0 %v249
    %299 = vmatprep.subr.bf16.mxu0 0
    %300 = vmatpush2.bf16.msra.mxu0 %v248
    %301 = vmatprep.subr.bf16.mxu0 0
    %302 = vmatpush2.bf16.msra.mxu0 %v247
    %303 = vmatprep.mubr.bf16.mxu0 %v144
    %304 = vmatmul.mubr.bf16.gmra.mxu0 %v143
    %v305 = vpop.f32.mrf.mxu0
    %v306 = vadd.f32 %v93, %v305
    %v307 = vpop.f32.mrf.mxu0
    %v308 = vpop.f32.mrf.mxu0
    %v309 = vadd.f32 %v93, %v308
    %v310 = vpop.f32.mrf.mxu0
    %311 = vmatprep.mubr.bf16.mxu0 %v146
    %312 = vmatmul.mubr.bf16.gmra.mxu0 %v145
    %v313 = vpop.f32.mrf.mxu0
    %v314 = vadd.f32 %v93, %v313
    %v315 = vpop.f32.mrf.mxu0
    %v316 = vpop.f32.mrf.mxu0
    %v317 = vadd.f32 %v93, %v316
    %v318 = vpop.f32.mrf.mxu0
    %319 = vmatprep.mubr.bf16.mxu0 %v148
    %320 = vmatmul.mubr.bf16.gmra.mxu0 %v147
    %v321 = vpop.f32.mrf.mxu0
    %v322 = vadd.f32 %v93, %v321
    %v323 = vpop.f32.mrf.mxu0
    %v324 = vpop.f32.mrf.mxu0
    %v325 = vadd.f32 %v93, %v324
    %v326 = vpop.f32.mrf.mxu0
    %327 = vmatprep.mubr.bf16.mxu0 %v150
    %328 = vmatmul.mubr.bf16.gmra.mxu0 %v149
    %v329 = vpop.f32.mrf.mxu0
    %v330 = vadd.f32 %v93, %v329
    %v331 = vpop.f32.mrf.mxu0
    %v332 = vpop.f32.mrf.mxu0
    %v333 = vadd.f32 %v93, %v332
    %v334 = vpop.f32.mrf.mxu0
    %335 = vmatprep.mubr.bf16.mxu0 %v152
    %336 = vmatmul.mubr.bf16.gmra.mxu0 %v151
    %v337 = vpop.f32.mrf.mxu0
    %v338 = vadd.f32 %v93, %v337
    %v339 = vpop.f32.mrf.mxu0
    %v340 = vpop.f32.mrf.mxu0
    %v341 = vadd.f32 %v93, %v340
    %v342 = vpop.f32.mrf.mxu0
    %343 = vmatprep.mubr.bf16.mxu0 %v154
    %344 = vmatmul.mubr.bf16.gmra.mxu0 %v153
    %v345 = vpop.f32.mrf.mxu0
    %v346 = vadd.f32 %v93, %v345
    %v347 = vpop.f32.mrf.mxu0
    %v348 = vpop.f32.mrf.mxu0
    %v349 = vadd.f32 %v93, %v348
    %v350 = vpop.f32.mrf.mxu0
    %351 = vmatprep.mubr.bf16.mxu0 %v156
    %352 = vmatmul.mubr.bf16.gmra.mxu0 %v155
    %v353 = vpop.f32.mrf.mxu0
    %v354 = vadd.f32 %v93, %v353
    %v355 = vpop.f32.mrf.mxu0
    %v356 = vpop.f32.mrf.mxu0
    %v357 = vadd.f32 %v93, %v356
    %v358 = vpop.f32.mrf.mxu0
    %359 = vmatprep.mubr.bf16.mxu0 %v158
    %360 = vmatmul.mubr.bf16.gmra.mxu0 %v157
    %v361 = vpop.f32.mrf.mxu0
    %v362 = vadd.f32 %v93, %v361
    %v363 = vpop.f32.mrf.mxu0
    %v364 = vpop.f32.mrf.mxu0
    %v365 = vadd.f32 %v93, %v364
    %v366 = vpop.f32.mrf.mxu0
    %367 = vdwg.mxu0
    %v368 = vmax.f32 %v306, 0.0
    %v369 = vmax.f32 %v309, 0.0
    %v370 = vmax.f32 %v314, 0.0
    %v371 = vmax.f32 %v317, 0.0
    %v372 = vmax.f32 %v322, 0.0
    %v373 = vmax.f32 %v325, 0.0
    %v374 = vmax.f32 %v330, 0.0
    %v375 = vmax.f32 %v333, 0.0
    %v376 = vmax.f32 %v338, 0.0
    %v377 = vmax.f32 %v341, 0.0
    %v378 = vmax.f32 %v346, 0.0
    %v379 = vmax.f32 %v349, 0.0
    %v380 = vmax.f32 %v354, 0.0
    %v381 = vmax.f32 %v357, 0.0
    %v382 = vmax.f32 %v362, 0.0
    %v383 = vmax.f32 %v365, 0.0
    %v384 = vpack.c.bf16 %v369, %v368
    %v385 = vpack.c.bf16 %v371, %v370
    %v386 = vpack.c.bf16 %v373, %v372
    %v387 = vpack.c.bf16 %v375, %v374
    %v388 = vpack.c.bf16 %v377, %v376
    %v389 = vpack.c.bf16 %v379, %v378
    %v390 = vpack.c.bf16 %v381, %v380
    %v391 = vpack.c.bf16 %v383, %v382
    %v400 = vcombine.high %v384, %v384
    %v402 = vunpack.c.l.s4 1966171168
    %v403 = vunpack.c.0.s8 %v402
    %v404 = vlaneseq
    %v405 = vshrl.u32 %v404, 7
    %v406 = vsub.s32 %v403, %v405
    %v407 = vrot.slane %v384, %v406
    %v409 = vunpack.c.l.s4 1966171168
    %v410 = vunpack.c.0.s8 %v409
    %v411 = vlaneseq
    %v412 = vshrl.u32 %v411, 7
    %v413 = vsub.s32 %v410, %v412
    %v414 = vrot.slane %v400, %v413
    %v415 = vcombine.high %v407, %v407
    %v416 = vcombine.high %v414, %v414
    %v418 = vunpack.c.l.s4 1966171168
    %v419 = vunpack.c.0.s8 %v418
    %v420 = vlaneseq
    %v421 = vshrl.u32 %v420, 7
    %v422 = vsub.s32 %v419, %v421
    %v423 = vrot.slane %v407, %v422
    %v425 = vunpack.c.l.s4 1966171168
    %v426 = vunpack.c.0.s8 %v425
    %v427 = vlaneseq
    %v428 = vshrl.u32 %v427, 7
    %v429 = vsub.s32 %v426, %v428
    %v430 = vrot.slane %v414, %v429
    %v432 = vunpack.c.l.s4 1966171168
    %v433 = vunpack.c.0.s8 %v432
    %v434 = vlaneseq
    %v435 = vshrl.u32 %v434, 7
    %v436 = vsub.s32 %v433, %v435
    %v437 = vrot.slane %v415, %v436
    %v439 = vunpack.c.l.s4 1966171168
    %v440 = vunpack.c.0.s8 %v439
    %v441 = vlaneseq
    %v442 = vshrl.u32 %v441, 7
    %v443 = vsub.s32 %v440, %v442
    %v444 = vrot.slane %v416, %v443
    %v445 = vcombine.high %v423, %v423
    %v446 = vcombine.high %v430, %v430
    %v447 = vcombine.high %v437, %v437
    %v448 = vcombine.high %v444, %v444
    %v449 = vcombine.high %v385, %v385
    %v451 = vunpack.c.l.s4 1966171168
    %v452 = vunpack.c.0.s8 %v451
    %v453 = vlaneseq
    %v454 = vshrl.u32 %v453, 7
    %v455 = vsub.s32 %v452, %v454
    %v456 = vrot.slane %v385, %v455
    %v458 = vunpack.c.l.s4 1966171168
    %v459 = vunpack.c.0.s8 %v458
    %v460 = vlaneseq
    %v461 = vshrl.u32 %v460, 7
    %v462 = vsub.s32 %v459, %v461
    %v463 = vrot.slane %v449, %v462
    %v464 = vcombine.high %v456, %v456
    %v465 = vcombine.high %v463, %v463
    %v467 = vunpack.c.l.s4 1966171168
    %v468 = vunpack.c.0.s8 %v467
    %v469 = vlaneseq
    %v470 = vshrl.u32 %v469, 7
    %v471 = vsub.s32 %v468, %v470
    %v472 = vrot.slane %v456, %v471
    %v474 = vunpack.c.l.s4 1966171168
    %v475 = vunpack.c.0.s8 %v474
    %v476 = vlaneseq
    %v477 = vshrl.u32 %v476, 7
    %v478 = vsub.s32 %v475, %v477
    %v479 = vrot.slane %v463, %v478
    %v481 = vunpack.c.l.s4 1966171168
    %v482 = vunpack.c.0.s8 %v481
    %v483 = vlaneseq
    %v484 = vshrl.u32 %v483, 7
    %v485 = vsub.s32 %v482, %v484
    %v486 = vrot.slane %v464, %v485
    %v488 = vunpack.c.l.s4 1966171168
    %v489 = vunpack.c.0.s8 %v488
    %v490 = vlaneseq
    %v491 = vshrl.u32 %v490, 7
    %v492 = vsub.s32 %v489, %v491
    %v493 = vrot.slane %v465, %v492
    %v494 = vcombine.high %v472, %v472
    %v495 = vcombine.high %v479, %v479
    %v496 = vcombine.high %v486, %v486
    %v497 = vcombine.high %v493, %v493
    %v498 = vcombine.high %v386, %v386
    %v500 = vunpack.c.l.s4 1966171168
    %v501 = vunpack.c.0.s8 %v500
    %v502 = vlaneseq
    %v503 = vshrl.u32 %v502, 7
    %v504 = vsub.s32 %v501, %v503
    %v505 = vrot.slane %v386, %v504
    %v507 = vunpack.c.l.s4 1966171168
    %v508 = vunpack.c.0.s8 %v507
    %v509 = vlaneseq
    %v510 = vshrl.u32 %v509, 7
    %v511 = vsub.s32 %v508, %v510
    %v512 = vrot.slane %v498, %v511
    %v513 = vcombine.high %v505, %v505
    %v514 = vcombine.high %v512, %v512
    %v516 = vunpack.c.l.s4 1966171168
    %v517 = vunpack.c.0.s8 %v516
    %v518 = vlaneseq
    %v519 = vshrl.u32 %v518, 7
    %v520 = vsub.s32 %v517, %v519
    %v521 = vrot.slane %v505, %v520
    %v523 = vunpack.c.l.s4 1966171168
    %v524 = vunpack.c.0.s8 %v523
    %v525 = vlaneseq
    %v526 = vshrl.u32 %v525, 7
    %v527 = vsub.s32 %v524, %v526
    %v528 = vrot.slane %v512, %v527
    %v530 = vunpack.c.l.s4 1966171168
    %v531 = vunpack.c.0.s8 %v530
    %v532 = vlaneseq
    %v533 = vshrl.u32 %v532, 7
    %v534 = vsub.s32 %v531, %v533
    %v535 = vrot.slane %v513, %v534
    %v537 = vunpack.c.l.s4 1966171168
    %v538 = vunpack.c.0.s8 %v537
    %v539 = vlaneseq
    %v540 = vshrl.u32 %v539, 7
    %v541 = vsub.s32 %v538, %v540
    %v542 = vrot.slane %v514, %v541
    %v543 = vcombine.high %v521, %v521
    %v544 = vcombine.high %v528, %v528
    %v545 = vcombine.high %v535, %v535
    %v546 = vcombine.high %v542, %v542
    %v547 = vcombine.high %v387, %v387
    %v549 = vunpack.c.l.s4 1966171168
    %v550 = vunpack.c.0.s8 %v549
    %v551 = vlaneseq
    %v552 = vshrl.u32 %v551, 7
    %v553 = vsub.s32 %v550, %v552
    %v554 = vrot.slane %v387, %v553
    %v556 = vunpack.c.l.s4 1966171168
    %v557 = vunpack.c.0.s8 %v556
    %v558 = vlaneseq
    %v559 = vshrl.u32 %v558, 7
    %v560 = vsub.s32 %v557, %v559
    %v561 = vrot.slane %v547, %v560
    %v562 = vcombine.high %v554, %v554
    %v563 = vcombine.high %v561, %v561
    %v565 = vunpack.c.l.s4 1966171168
    %v566 = vunpack.c.0.s8 %v565
    %v567 = vlaneseq
    %v568 = vshrl.u32 %v567, 7
    %v569 = vsub.s32 %v566, %v568
    %v570 = vrot.slane %v554, %v569
    %v572 = vunpack.c.l.s4 1966171168
    %v573 = vunpack.c.0.s8 %v572
    %v574 = vlaneseq
    %v575 = vshrl.u32 %v574, 7
    %v576 = vsub.s32 %v573, %v575
    %v577 = vrot.slane %v561, %v576
    %v579 = vunpack.c.l.s4 1966171168
    %v580 = vunpack.c.0.s8 %v579
    %v581 = vlaneseq
    %v582 = vshrl.u32 %v581, 7
    %v583 = vsub.s32 %v580, %v582
    %v584 = vrot.slane %v562, %v583
    %v586 = vunpack.c.l.s4 1966171168
    %v587 = vunpack.c.0.s8 %v586
    %v588 = vlaneseq
    %v589 = vshrl.u32 %v588, 7
    %v590 = vsub.s32 %v587, %v589
    %v591 = vrot.slane %v563, %v590
    %v592 = vcombine.high %v570, %v570
    %v593 = vcombine.high %v577, %v577
    %v594 = vcombine.high %v584, %v584
    %v595 = vcombine.high %v591, %v591
    %v596 = vcombine.high %v388, %v388
    %v598 = vunpack.c.l.s4 1966171168
    %v599 = vunpack.c.0.s8 %v598
    %v600 = vlaneseq
    %v601 = vshrl.u32 %v600, 7
    %v602 = vsub.s32 %v599, %v601
    %v603 = vrot.slane %v388, %v602
    %v605 = vunpack.c.l.s4 1966171168
    %v606 = vunpack.c.0.s8 %v605
    %v607 = vlaneseq
    %v608 = vshrl.u32 %v607, 7
    %v609 = vsub.s32 %v606, %v608
    %v610 = vrot.slane %v596, %v609
    %v611 = vcombine.high %v603, %v603
    %v612 = vcombine.high %v610, %v610
    %v614 = vunpack.c.l.s4 1966171168
    %v615 = vunpack.c.0.s8 %v614
    %v616 = vlaneseq
    %v617 = vshrl.u32 %v616, 7
    %v618 = vsub.s32 %v615, %v617
    %v619 = vrot.slane %v603, %v618
    %v621 = vunpack.c.l.s4 1966171168
    %v622 = vunpack.c.0.s8 %v621
    %v623 = vlaneseq
    %v624 = vshrl.u32 %v623, 7
    %v625 = vsub.s32 %v622, %v624
    %v626 = vrot.slane %v610, %v625
    %v628 = vunpack.c.l.s4 1966171168
    %v629 = vunpack.c.0.s8 %v628
    %v630 = vlaneseq
    %v631 = vshrl.u32 %v630, 7
    %v632 = vsub.s32 %v629, %v631
    %v633 = vrot.slane %v611, %v632
    %v635 = vunpack.c.l.s4 1966171168
    %v636 = vunpack.c.0.s8 %v635
    %v637 = vlaneseq
    %v638 = vshrl.u32 %v637, 7
    %v639 = vsub.s32 %v636, %v638
    %v640 = vrot.slane %v612, %v639
    %v641 = vcombine.high %v619, %v619
    %v642 = vcombine.high %v626, %v626
    %v643 = vcombine.high %v633, %v633
    %v644 = vcombine.high %v640, %v640
    %v645 = vcombine.high %v389, %v389
    %v647 = vunpack.c.l.s4 1966171168
    %v648 = vunpack.c.0.s8 %v647
    %v649 = vlaneseq
    %v650 = vshrl.u32 %v649, 7
    %v651 = vsub.s32 %v648, %v650
    %v652 = vrot.slane %v389, %v651
    %v654 = vunpack.c.l.s4 1966171168
    %v655 = vunpack.c.0.s8 %v654
    %v656 = vlaneseq
    %v657 = vshrl.u32 %v656, 7
    %v658 = vsub.s32 %v655, %v657
    %v659 = vrot.slane %v645, %v658
    %v660 = vcombine.high %v652, %v652
    %v661 = vcombine.high %v659, %v659
    %v663 = vunpack.c.l.s4 1966171168
    %v664 = vunpack.c.0.s8 %v663
    %v665 = vlaneseq
    %v666 = vshrl.u32 %v665, 7
    %v667 = vsub.s32 %v664, %v666
    %v668 = vrot.slane %v652, %v667
    %v670 = vunpack.c.l.s4 1966171168
    %v671 = vunpack.c.0.s8 %v670
    %v672 = vlaneseq
    %v673 = vshrl.u32 %v672, 7
    %v674 = vsub.s32 %v671, %v673
    %v675 = vrot.slane %v659, %v674
    %v677 = vunpack.c.l.s4 1966171168
    %v678 = vunpack.c.0.s8 %v677
    %v679 = vlaneseq
    %v680 = vshrl.u32 %v679, 7
    %v681 = vsub.s32 %v678, %v680
    %v682 = vrot.slane %v660, %v681
    %v684 = vunpack.c.l.s4 1966171168
    %v685 = vunpack.c.0.s8 %v684
    %v686 = vlaneseq
    %v687 = vshrl.u32 %v686, 7
    %v688 = vsub.s32 %v685, %v687
    %v689 = vrot.slane %v661, %v688
    %v690 = vcombine.high %v668, %v668
    %v691 = vcombine.high %v675, %v675
    %v692 = vcombine.high %v682, %v682
    %v693 = vcombine.high %v689, %v689
    %v694 = vcombine.high %v390, %v390
    %v696 = vunpack.c.l.s4 1966171168
    %v697 = vunpack.c.0.s8 %v696
    %v698 = vlaneseq
    %v699 = vshrl.u32 %v698, 7
    %v700 = vsub.s32 %v697, %v699
    %v701 = vrot.slane %v390, %v700
    %v703 = vunpack.c.l.s4 1966171168
    %v704 = vunpack.c.0.s8 %v703
    %v705 = vlaneseq
    %v706 = vshrl.u32 %v705, 7
    %v707 = vsub.s32 %v704, %v706
    %v708 = vrot.slane %v694, %v707
    %v709 = vcombine.high %v701, %v701
    %v710 = vcombine.high %v708, %v708
    %v712 = vunpack.c.l.s4 1966171168
    %v713 = vunpack.c.0.s8 %v712
    %v714 = vlaneseq
    %v715 = vshrl.u32 %v714, 7
    %v716 = vsub.s32 %v713, %v715
    %v717 = vrot.slane %v701, %v716
    %v719 = vunpack.c.l.s4 1966171168
    %v720 = vunpack.c.0.s8 %v719
    %v721 = vlaneseq
    %v722 = vshrl.u32 %v721, 7
    %v723 = vsub.s32 %v720, %v722
    %v724 = vrot.slane %v708, %v723
    %v726 = vunpack.c.l.s4 1966171168
    %v727 = vunpack.c.0.s8 %v726
    %v728 = vlaneseq
    %v729 = vshrl.u32 %v728, 7
    %v730 = vsub.s32 %v727, %v729
    %v731 = vrot.slane %v709, %v730
    %v733 = vunpack.c.l.s4 1966171168
    %v734 = vunpack.c.0.s8 %v733
    %v735 = vlaneseq
    %v736 = vshrl.u32 %v735, 7
    %v737 = vsub.s32 %v734, %v736
    %v738 = vrot.slane %v710, %v737
    %v739 = vcombine.high %v717, %v717
    %v740 = vcombine.high %v724, %v724
    %v741 = vcombine.high %v731, %v731
    %v742 = vcombine.high %v738, %v738
    %v743 = vcombine.high %v391, %v391
    %v745 = vunpack.c.l.s4 1966171168
    %v746 = vunpack.c.0.s8 %v745
    %v747 = vlaneseq
    %v748 = vshrl.u32 %v747, 7
    %v749 = vsub.s32 %v746, %v748
    %v750 = vrot.slane %v391, %v749
    %v752 = vunpack.c.l.s4 1966171168
    %v753 = vunpack.c.0.s8 %v752
    %v754 = vlaneseq
    %v755 = vshrl.u32 %v754, 7
    %v756 = vsub.s32 %v753, %v755
    %v757 = vrot.slane %v743, %v756
    %v758 = vcombine.high %v750, %v750
    %v759 = vcombine.high %v757, %v757
    %v761 = vunpack.c.l.s4 1966171168
    %v762 = vunpack.c.0.s8 %v761
    %v763 = vlaneseq
    %v764 = vshrl.u32 %v763, 7
    %v765 = vsub.s32 %v762, %v764
    %v766 = vrot.slane %v750, %v765
    %v768 = vunpack.c.l.s4 1966171168
    %v769 = vunpack.c.0.s8 %v768
    %v770 = vlaneseq
    %v771 = vshrl.u32 %v770, 7
    %v772 = vsub.s32 %v769, %v771
    %v773 = vrot.slane %v757, %v772
    %v775 = vunpack.c.l.s4 1966171168
    %v776 = vunpack.c.0.s8 %v775
    %v777 = vlaneseq
    %v778 = vshrl.u32 %v777, 7
    %v779 = vsub.s32 %v776, %v778
    %v780 = vrot.slane %v758, %v779
    %v782 = vunpack.c.l.s4 1966171168
    %v783 = vunpack.c.0.s8 %v782
    %v784 = vlaneseq
    %v785 = vshrl.u32 %v784, 7
    %v786 = vsub.s32 %v783, %v785
    %v787 = vrot.slane %v759, %v786
    %v788 = vcombine.high %v766, %v766
    %v789 = vcombine.high %v773, %v773
    %v790 = vcombine.high %v780, %v780
    %v791 = vcombine.high %v787, %v787
    %v793 = vunpack.c.l.s4 1966171168
    %v794 = vunpack.c.0.s8 %v793
    %v795 = vlaneseq
    %v796 = vshrl.u32 %v795, 7
    %v797 = vsub.s32 %v794, %v796
    %v798 = vrot.slane %v423, %v797
    %v800 = vunpack.c.l.s4 1966171168
    %v801 = vunpack.c.0.s8 %v800
    %v802 = vlaneseq
    %v803 = vshrl.u32 %v802, 7
    %v804 = vsub.s32 %v801, %v803
    %v805 = vrot.slane %v798, %v804
    %v807 = vunpack.c.l.s4 1966171168
    %v808 = vunpack.c.0.s8 %v807
    %v809 = vlaneseq
    %v810 = vshrl.u32 %v809, 7
    %v811 = vsub.s32 %v808, %v810
    %v812 = vrot.slane %v437, %v811
    %v814 = vunpack.c.l.s4 1966171168
    %v815 = vunpack.c.0.s8 %v814
    %v816 = vlaneseq
    %v817 = vshrl.u32 %v816, 7
    %v818 = vsub.s32 %v815, %v817
    %v819 = vrot.slane %v812, %v818
    %v821 = vunpack.c.l.s4 1966171168
    %v822 = vunpack.c.0.s8 %v821
    %v823 = vlaneseq
    %v824 = vshrl.u32 %v823, 7
    %v825 = vsub.s32 %v822, %v824
    %v826 = vrot.slane %v445, %v825
    %v828 = vunpack.c.l.s4 1966171168
    %v829 = vunpack.c.0.s8 %v828
    %v830 = vlaneseq
    %v831 = vshrl.u32 %v830, 7
    %v832 = vsub.s32 %v829, %v831
    %v833 = vrot.slane %v826, %v832
    %v835 = vunpack.c.l.s4 1966171168
    %v836 = vunpack.c.0.s8 %v835
    %v837 = vlaneseq
    %v838 = vshrl.u32 %v837, 7
    %v839 = vsub.s32 %v836, %v838
    %v840 = vrot.slane %v472, %v839
    %v842 = vunpack.c.l.s4 1966171168
    %v843 = vunpack.c.0.s8 %v842
    %v844 = vlaneseq
    %v845 = vshrl.u32 %v844, 7
    %v846 = vsub.s32 %v843, %v845
    %v847 = vrot.slane %v840, %v846
    %v849 = vunpack.c.l.s4 1966171168
    %v850 = vunpack.c.0.s8 %v849
    %v851 = vlaneseq
    %v852 = vshrl.u32 %v851, 7
    %v853 = vsub.s32 %v850, %v852
    %v854 = vrot.slane %v486, %v853
    %v856 = vunpack.c.l.s4 1966171168
    %v857 = vunpack.c.0.s8 %v856
    %v858 = vlaneseq
    %v859 = vshrl.u32 %v858, 7
    %v860 = vsub.s32 %v857, %v859
    %v861 = vrot.slane %v854, %v860
    %v863 = vunpack.c.l.s4 1966171168
    %v864 = vunpack.c.0.s8 %v863
    %v865 = vlaneseq
    %v866 = vshrl.u32 %v865, 7
    %v867 = vsub.s32 %v864, %v866
    %v868 = vrot.slane %v494, %v867
    %v870 = vunpack.c.l.s4 1966171168
    %v871 = vunpack.c.0.s8 %v870
    %v872 = vlaneseq
    %v873 = vshrl.u32 %v872, 7
    %v874 = vsub.s32 %v871, %v873
    %v875 = vrot.slane %v868, %v874
    %v877 = vunpack.c.l.s4 1966171168
    %v878 = vunpack.c.0.s8 %v877
    %v879 = vlaneseq
    %v880 = vshrl.u32 %v879, 7
    %v881 = vsub.s32 %v878, %v880
    %v882 = vrot.slane %v521, %v881
    %v884 = vunpack.c.l.s4 1966171168
    %v885 = vunpack.c.0.s8 %v884
    %v886 = vlaneseq
    %v887 = vshrl.u32 %v886, 7
    %v888 = vsub.s32 %v885, %v887
    %v889 = vrot.slane %v882, %v888
    %v891 = vunpack.c.l.s4 1966171168
    %v892 = vunpack.c.0.s8 %v891
    %v893 = vlaneseq
    %v894 = vshrl.u32 %v893, 7
    %v895 = vsub.s32 %v892, %v894
    %v896 = vrot.slane %v535, %v895
    %v898 = vunpack.c.l.s4 1966171168
    %v899 = vunpack.c.0.s8 %v898
    %v900 = vlaneseq
    %v901 = vshrl.u32 %v900, 7
    %v902 = vsub.s32 %v899, %v901
    %v903 = vrot.slane %v896, %v902
    %v905 = vunpack.c.l.s4 1966171168
    %v906 = vunpack.c.0.s8 %v905
    %v907 = vlaneseq
    %v908 = vshrl.u32 %v907, 7
    %v909 = vsub.s32 %v906, %v908
    %v910 = vrot.slane %v543, %v909
    %v912 = vunpack.c.l.s4 1966171168
    %v913 = vunpack.c.0.s8 %v912
    %v914 = vlaneseq
    %v915 = vshrl.u32 %v914, 7
    %v916 = vsub.s32 %v913, %v915
    %v917 = vrot.slane %v910, %v916
    %v919 = vunpack.c.l.s4 1966171168
    %v920 = vunpack.c.0.s8 %v919
    %v921 = vlaneseq
    %v922 = vshrl.u32 %v921, 7
    %v923 = vsub.s32 %v920, %v922
    %v924 = vrot.slane %v619, %v923
    %v926 = vunpack.c.l.s4 1966171168
    %v927 = vunpack.c.0.s8 %v926
    %v928 = vlaneseq
    %v929 = vshrl.u32 %v928, 7
    %v930 = vsub.s32 %v927, %v929
    %v931 = vrot.slane %v924, %v930
    %v933 = vunpack.c.l.s4 1966171168
    %v934 = vunpack.c.0.s8 %v933
    %v935 = vlaneseq
    %v936 = vshrl.u32 %v935, 7
    %v937 = vsub.s32 %v934, %v936
    %v938 = vrot.slane %v633, %v937
    %v940 = vunpack.c.l.s4 1966171168
    %v941 = vunpack.c.0.s8 %v940
    %v942 = vlaneseq
    %v943 = vshrl.u32 %v942, 7
    %v944 = vsub.s32 %v941, %v943
    %v945 = vrot.slane %v938, %v944
    %v947 = vunpack.c.l.s4 1966171168
    %v948 = vunpack.c.0.s8 %v947
    %v949 = vlaneseq
    %v950 = vshrl.u32 %v949, 7
    %v951 = vsub.s32 %v948, %v950
    %v952 = vrot.slane %v641, %v951
    %v954 = vunpack.c.l.s4 1966171168
    %v955 = vunpack.c.0.s8 %v954
    %v956 = vlaneseq
    %v957 = vshrl.u32 %v956, 7
    %v958 = vsub.s32 %v955, %v957
    %v959 = vrot.slane %v952, %v958
    %v961 = vunpack.c.l.s4 1966171168
    %v962 = vunpack.c.0.s8 %v961
    %v963 = vlaneseq
    %v964 = vshrl.u32 %v963, 7
    %v965 = vsub.s32 %v962, %v964
    %v966 = vrot.slane %v668, %v965
    %v968 = vunpack.c.l.s4 1966171168
    %v969 = vunpack.c.0.s8 %v968
    %v970 = vlaneseq
    %v971 = vshrl.u32 %v970, 7
    %v972 = vsub.s32 %v969, %v971
    %v973 = vrot.slane %v966, %v972
    %v975 = vunpack.c.l.s4 1966171168
    %v976 = vunpack.c.0.s8 %v975
    %v977 = vlaneseq
    %v978 = vshrl.u32 %v977, 7
    %v979 = vsub.s32 %v976, %v978
    %v980 = vrot.slane %v682, %v979
    %v982 = vunpack.c.l.s4 1966171168
    %v983 = vunpack.c.0.s8 %v982
    %v984 = vlaneseq
    %v985 = vshrl.u32 %v984, 7
    %v986 = vsub.s32 %v983, %v985
    %v987 = vrot.slane %v980, %v986
    %v989 = vunpack.c.l.s4 1966171168
    %v990 = vunpack.c.0.s8 %v989
    %v991 = vlaneseq
    %v992 = vshrl.u32 %v991, 7
    %v993 = vsub.s32 %v990, %v992
    %v994 = vrot.slane %v690, %v993
    %v996 = vunpack.c.l.s4 1966171168
    %v997 = vunpack.c.0.s8 %v996
    %v998 = vlaneseq
    %v999 = vshrl.u32 %v998, 7
    %v1000 = vsub.s32 %v997, %v999
    %v1001 = vrot.slane %v994, %v1000
    %v1003 = vunpack.c.l.s4 1966171168
    %v1004 = vunpack.c.0.s8 %v1003
    %v1005 = vlaneseq
    %v1006 = vshrl.u32 %v1005, 7
    %v1007 = vsub.s32 %v1004, %v1006
    %v1008 = vrot.slane %v717, %v1007
    %v1010 = vunpack.c.l.s4 1966171168
    %v1011 = vunpack.c.0.s8 %v1010
    %v1012 = vlaneseq
    %v1013 = vshrl.u32 %v1012, 7
    %v1014 = vsub.s32 %v1011, %v1013
    %v1015 = vrot.slane %v1008, %v1014
    %v1017 = vunpack.c.l.s4 1966171168
    %v1018 = vunpack.c.0.s8 %v1017
    %v1019 = vlaneseq
    %v1020 = vshrl.u32 %v1019, 7
    %v1021 = vsub.s32 %v1018, %v1020
    %v1022 = vrot.slane %v731, %v1021
    %v1024 = vunpack.c.l.s4 1966171168
    %v1025 = vunpack.c.0.s8 %v1024
    %v1026 = vlaneseq
    %v1027 = vshrl.u32 %v1026, 7
    %v1028 = vsub.s32 %v1025, %v1027
    %v1029 = vrot.slane %v1022, %v1028
    %v1031 = vunpack.c.l.s4 1966171168
    %v1032 = vunpack.c.0.s8 %v1031
    %v1033 = vlaneseq
    %v1034 = vshrl.u32 %v1033, 7
    %v1035 = vsub.s32 %v1032, %v1034
    %v1036 = vrot.slane %v739, %v1035
    %v1038 = vunpack.c.l.s4 1966171168
    %v1039 = vunpack.c.0.s8 %v1038
    %v1040 = vlaneseq
    %v1041 = vshrl.u32 %v1040, 7
    %v1042 = vsub.s32 %v1039, %v1041
    %v1043 = vrot.slane %v1036, %v1042
    %v1044 = vunpack.c.l.b16 %v805
    %v1045 = vunpack.c.l.b16 %v819
    %v1046 = vunpack.c.l.b16 %v833
    %v1047 = vunpack.c.l.b16 %v847
    %v1048 = vunpack.c.l.b16 %v861
    %v1049 = vunpack.c.l.b16 %v875
    %v1050 = vunpack.c.l.b16 %v889
    %v1051 = vunpack.c.l.b16 %v903
    %v1052 = vunpack.c.l.b16 %v917
    %v1053 = vunpack.c.l.b16 %v931
    %v1054 = vunpack.c.l.b16 %v945
    %v1055 = vunpack.c.l.b16 %v959
    %v1056 = vunpack.c.l.b16 %v973
    %v1057 = vunpack.c.l.b16 %v987
    %v1058 = vunpack.c.l.b16 %v1001
    %v1059 = vunpack.c.l.b16 %v1015
    %v1060 = vunpack.c.l.b16 %v1029
    %v1061 = vunpack.c.l.b16 %v1043
    %v1062 = vrot.slane %v1045, 7
    %vm1063 = vcmask 1041409
    %v1064 = vsel %vm1063, %v1062, %v1044
    %v1065 = vrot.slane %v1046, 6
    %vm1066 = vcmask 1042434
    %v1067 = vsel %vm1066, %v1065, %v1064
    %v1068 = vrot.slane %v1048, 7
    %v1069 = vsel %vm1063, %v1068, %v1047
    %v1070 = vrot.slane %v1049, 6
    %v1071 = vsel %vm1066, %v1070, %v1069
    %v1072 = vrot.slane %v1051, 7
    %v1073 = vsel %vm1063, %v1072, %v1050
    %v1074 = vrot.slane %v1052, 6
    %v1075 = vsel %vm1066, %v1074, %v1073
    %v1076 = vrot.slane %v1054, 7
    %v1077 = vsel %vm1063, %v1076, %v1053
    %v1078 = vrot.slane %v1055, 6
    %v1079 = vsel %vm1066, %v1078, %v1077
    %v1080 = vrot.slane %v1057, 7
    %v1081 = vsel %vm1063, %v1080, %v1056
    %v1082 = vrot.slane %v1058, 6
    %v1083 = vsel %vm1066, %v1082, %v1081
    %v1084 = vrot.slane %v1060, 7
    %v1085 = vsel %vm1063, %v1084, %v1059
    %v1086 = vrot.slane %v1061, 6
    %v1087 = vsel %vm1066, %v1086, %v1085
    %v1088 = vpack.c.b16 %v1067, %v1067
    %v1089 = vpack.c.b16 %v1071, %v1071
    %v1090 = vpack.c.b16 %v1075, %v1075
    %v1091 = vpack.c.b16 %v1079, %v1079
    %v1092 = vpack.c.b16 %v1083, %v1083
    %v1093 = vpack.c.b16 %v1087, %v1087
    %v1094 = vrot.slane %v1044, 1
    %v1095 = vsel %vm1063, %v1045, %v1094
    %v1096 = vrot.slane %v1046, 7
    %v1097 = vsel %vm1066, %v1096, %v1095
    %v1098 = vrot.slane %v1047, 1
    %v1099 = vsel %vm1063, %v1048, %v1098
    %v1100 = vrot.slane %v1049, 7
    %v1101 = vsel %vm1066, %v1100, %v1099
    %v1102 = vrot.slane %v1050, 1
    %v1103 = vsel %vm1063, %v1051, %v1102
    %v1104 = vrot.slane %v1052, 7
    %v1105 = vsel %vm1066, %v1104, %v1103
    %v1106 = vrot.slane %v1053, 1
    %v1107 = vsel %vm1063, %v1054, %v1106
    %v1108 = vrot.slane %v1055, 7
    %v1109 = vsel %vm1066, %v1108, %v1107
    %v1110 = vrot.slane %v1056, 1
    %v1111 = vsel %vm1063, %v1057, %v1110
    %v1112 = vrot.slane %v1058, 7
    %v1113 = vsel %vm1066, %v1112, %v1111
    %v1114 = vrot.slane %v1059, 1
    %v1115 = vsel %vm1063, %v1060, %v1114
    %v1116 = vrot.slane %v1061, 7
    %v1117 = vsel %vm1066, %v1116, %v1115
    %v1118 = vpack.c.b16 %v1097, %v1097
    %v1119 = vpack.c.b16 %v1101, %v1101
    %v1120 = vpack.c.b16 %v1105, %v1105
    %v1121 = vpack.c.b16 %v1109, %v1109
    %v1122 = vpack.c.b16 %v1113, %v1113
    %v1123 = vpack.c.b16 %v1117, %v1117
    %1124 = vrot.lane.b32.xlu0 %v1118, 32
    %v1125 = vpop.permute.xlu0 %1124
    %1126 = vrot.lane.b32.xlu0 %v1119, 32
    %v1127 = vpop.permute.xlu0 %1126
    %1128 = vrot.lane.b32.xlu0 %v1120, 32
    %v1129 = vpop.permute.xlu0 %1128
    %1130 = vrot.lane.b32.xlu0 %v1121, 32
    %v1131 = vpop.permute.xlu0 %1130
    %1132 = vrot.lane.b32.xlu0 %v1122, 32
    %v1133 = vpop.permute.xlu0 %1132
    %1134 = vrot.lane.b32.xlu0 %v1123, 32
    %v1135 = vpop.permute.xlu0 %1134
    %v1137 = vunpack.c.l.s4 1966171168
    %v1138 = vunpack.c.0.s8 %v1137
    %v1139 = vlaneseq
    %v1140 = vshrl.u32 %v1139, 7
    %v1141 = vsub.s32 %v1138, %v1140
    %v1142 = vrot.slane %v447, %v1141
    %v1144 = vunpack.c.l.s4 1966171168
    %v1145 = vunpack.c.0.s8 %v1144
    %v1146 = vlaneseq
    %v1147 = vshrl.u32 %v1146, 7
    %v1148 = vsub.s32 %v1145, %v1147
    %v1149 = vrot.slane %v1142, %v1148
    %v1151 = vunpack.c.l.s4 1966171168
    %v1152 = vunpack.c.0.s8 %v1151
    %v1153 = vlaneseq
    %v1154 = vshrl.u32 %v1153, 7
    %v1155 = vsub.s32 %v1152, %v1154
    %v1156 = vrot.slane %v496, %v1155
    %v1158 = vunpack.c.l.s4 1966171168
    %v1159 = vunpack.c.0.s8 %v1158
    %v1160 = vlaneseq
    %v1161 = vshrl.u32 %v1160, 7
    %v1162 = vsub.s32 %v1159, %v1161
    %v1163 = vrot.slane %v1156, %v1162
    %v1165 = vunpack.c.l.s4 1966171168
    %v1166 = vunpack.c.0.s8 %v1165
    %v1167 = vlaneseq
    %v1168 = vshrl.u32 %v1167, 7
    %v1169 = vsub.s32 %v1166, %v1168
    %v1170 = vrot.slane %v545, %v1169
    %v1172 = vunpack.c.l.s4 1966171168
    %v1173 = vunpack.c.0.s8 %v1172
    %v1174 = vlaneseq
    %v1175 = vshrl.u32 %v1174, 7
    %v1176 = vsub.s32 %v1173, %v1175
    %v1177 = vrot.slane %v1170, %v1176
    %v1179 = vunpack.c.l.s4 1966171168
    %v1180 = vunpack.c.0.s8 %v1179
    %v1181 = vlaneseq
    %v1182 = vshrl.u32 %v1181, 7
    %v1183 = vsub.s32 %v1180, %v1182
    %v1184 = vrot.slane %v643, %v1183
    %v1186 = vunpack.c.l.s4 1966171168
    %v1187 = vunpack.c.0.s8 %v1186
    %v1188 = vlaneseq
    %v1189 = vshrl.u32 %v1188, 7
    %v1190 = vsub.s32 %v1187, %v1189
    %v1191 = vrot.slane %v1184, %v1190
    %v1193 = vunpack.c.l.s4 1966171168
    %v1194 = vunpack.c.0.s8 %v1193
    %v1195 = vlaneseq
    %v1196 = vshrl.u32 %v1195, 7
    %v1197 = vsub.s32 %v1194, %v1196
    %v1198 = vrot.slane %v692, %v1197
    %v1200 = vunpack.c.l.s4 1966171168
    %v1201 = vunpack.c.0.s8 %v1200
    %v1202 = vlaneseq
    %v1203 = vshrl.u32 %v1202, 7
    %v1204 = vsub.s32 %v1201, %v1203
    %v1205 = vrot.slane %v1198, %v1204
    %v1207 = vunpack.c.l.s4 1966171168
    %v1208 = vunpack.c.0.s8 %v1207
    %v1209 = vlaneseq
    %v1210 = vshrl.u32 %v1209, 7
    %v1211 = vsub.s32 %v1208, %v1210
    %v1212 = vrot.slane %v741, %v1211
    %v1214 = vunpack.c.l.s4 1966171168
    %v1215 = vunpack.c.0.s8 %v1214
    %v1216 = vlaneseq
    %v1217 = vshrl.u32 %v1216, 7
    %v1218 = vsub.s32 %v1215, %v1217
    %v1219 = vrot.slane %v1212, %v1218
    %v1220 = vunpack.c.l.b16 %v1149
    %v1221 = vunpack.c.l.b16 %v1163
    %v1222 = vunpack.c.l.b16 %v1177
    %v1223 = vunpack.c.l.b16 %v1191
    %v1224 = vunpack.c.l.b16 %v1205
    %v1225 = vunpack.c.l.b16 %v1219
    %v1226 = vsel %vm1063, %v1096, %v1045
    %v1227 = vrot.slane %v1220, 6
    %v1228 = vsel %vm1066, %v1227, %v1226
    %v1229 = vsel %vm1063, %v1100, %v1048
    %v1230 = vrot.slane %v1221, 6
    %v1231 = vsel %vm1066, %v1230, %v1229
    %v1232 = vsel %vm1063, %v1104, %v1051
    %v1233 = vrot.slane %v1222, 6
    %v1234 = vsel %vm1066, %v1233, %v1232
    %v1235 = vsel %vm1063, %v1108, %v1054
    %v1236 = vrot.slane %v1223, 6
    %v1237 = vsel %vm1066, %v1236, %v1235
    %v1238 = vsel %vm1063, %v1112, %v1057
    %v1239 = vrot.slane %v1224, 6
    %v1240 = vsel %vm1066, %v1239, %v1238
    %v1241 = vsel %vm1063, %v1116, %v1060
    %v1242 = vrot.slane %v1225, 6
    %v1243 = vsel %vm1066, %v1242, %v1241
    %v1244 = vpack.c.b16 %v1228, %v1228
    %v1245 = vpack.c.b16 %v1231, %v1231
    %v1246 = vpack.c.b16 %v1234, %v1234
    %v1247 = vpack.c.b16 %v1237, %v1237
    %v1248 = vpack.c.b16 %v1240, %v1240
    %v1249 = vpack.c.b16 %v1243, %v1243
    %1250 = vrot.lane.b32.xlu0 %v1244, 64
    %v1251 = vpop.permute.xlu0 %1250
    %1252 = vrot.lane.b32.xlu0 %v1245, 64
    %v1253 = vpop.permute.xlu0 %1252
    %1254 = vrot.lane.b32.xlu0 %v1246, 64
    %v1255 = vpop.permute.xlu0 %1254
    %1256 = vrot.lane.b32.xlu0 %v1247, 64
    %v1257 = vpop.permute.xlu0 %1256
    %1258 = vrot.lane.b32.xlu0 %v1248, 64
    %v1259 = vpop.permute.xlu0 %1258
    %1260 = vrot.lane.b32.xlu0 %v1249, 64
    %v1261 = vpop.permute.xlu0 %1260
    %v1262 = vrot.slane %v1045, 1
    %v1263 = vsel %vm1063, %v1046, %v1262
    %v1264 = vrot.slane %v1220, 7
    %v1265 = vsel %vm1066, %v1264, %v1263
    %v1266 = vrot.slane %v1048, 1
    %v1267 = vsel %vm1063, %v1049, %v1266
    %v1268 = vrot.slane %v1221, 7
    %v1269 = vsel %vm1066, %v1268, %v1267
    %v1270 = vrot.slane %v1051, 1
    %v1271 = vsel %vm1063, %v1052, %v1270
    %v1272 = vrot.slane %v1222, 7
    %v1273 = vsel %vm1066, %v1272, %v1271
    %v1274 = vrot.slane %v1054, 1
    %v1275 = vsel %vm1063, %v1055, %v1274
    %v1276 = vrot.slane %v1223, 7
    %v1277 = vsel %vm1066, %v1276, %v1275
    %v1278 = vrot.slane %v1057, 1
    %v1279 = vsel %vm1063, %v1058, %v1278
    %v1280 = vrot.slane %v1224, 7
    %v1281 = vsel %vm1066, %v1280, %v1279
    %v1282 = vrot.slane %v1060, 1
    %v1283 = vsel %vm1063, %v1061, %v1282
    %v1284 = vrot.slane %v1225, 7
    %v1285 = vsel %vm1066, %v1284, %v1283
    %v1286 = vpack.c.b16 %v1265, %v1265
    %v1287 = vpack.c.b16 %v1269, %v1269
    %v1288 = vpack.c.b16 %v1273, %v1273
    %v1289 = vpack.c.b16 %v1277, %v1277
    %v1290 = vpack.c.b16 %v1281, %v1281
    %v1291 = vpack.c.b16 %v1285, %v1285
    %1292 = vrot.lane.b32.xlu0 %v1286, 96
    %v1293 = vpop.permute.xlu0 %1292
    %1294 = vrot.lane.b32.xlu0 %v1287, 96
    %v1295 = vpop.permute.xlu0 %1294
    %1296 = vrot.lane.b32.xlu0 %v1288, 96
    %v1297 = vpop.permute.xlu0 %1296
    %1298 = vrot.lane.b32.xlu0 %v1289, 96
    %v1299 = vpop.permute.xlu0 %1298
    %1300 = vrot.lane.b32.xlu0 %v1290, 96
    %v1301 = vpop.permute.xlu0 %1300
    %1302 = vrot.lane.b32.xlu0 %v1291, 96
    %v1303 = vpop.permute.xlu0 %1302
    %v1305 = vunpack.c.l.s4 1966171168
    %v1306 = vunpack.c.0.s8 %v1305
    %v1307 = vlaneseq
    %v1308 = vshrl.u32 %v1307, 7
    %v1309 = vsub.s32 %v1306, %v1308
    %v1310 = vrot.slane %v430, %v1309
    %v1312 = vunpack.c.l.s4 1966171168
    %v1313 = vunpack.c.0.s8 %v1312
    %v1314 = vlaneseq
    %v1315 = vshrl.u32 %v1314, 7
    %v1316 = vsub.s32 %v1313, %v1315
    %v1317 = vrot.slane %v1310, %v1316
    %v1319 = vunpack.c.l.s4 1966171168
    %v1320 = vunpack.c.0.s8 %v1319
    %v1321 = vlaneseq
    %v1322 = vshrl.u32 %v1321, 7
    %v1323 = vsub.s32 %v1320, %v1322
    %v1324 = vrot.slane %v444, %v1323
    %v1326 = vunpack.c.l.s4 1966171168
    %v1327 = vunpack.c.0.s8 %v1326
    %v1328 = vlaneseq
    %v1329 = vshrl.u32 %v1328, 7
    %v1330 = vsub.s32 %v1327, %v1329
    %v1331 = vrot.slane %v1324, %v1330
    %v1333 = vunpack.c.l.s4 1966171168
    %v1334 = vunpack.c.0.s8 %v1333
    %v1335 = vlaneseq
    %v1336 = vshrl.u32 %v1335, 7
    %v1337 = vsub.s32 %v1334, %v1336
    %v1338 = vrot.slane %v446, %v1337
    %v1340 = vunpack.c.l.s4 1966171168
    %v1341 = vunpack.c.0.s8 %v1340
    %v1342 = vlaneseq
    %v1343 = vshrl.u32 %v1342, 7
    %v1344 = vsub.s32 %v1341, %v1343
    %v1345 = vrot.slane %v1338, %v1344
    %v1347 = vunpack.c.l.s4 1966171168
    %v1348 = vunpack.c.0.s8 %v1347
    %v1349 = vlaneseq
    %v1350 = vshrl.u32 %v1349, 7
    %v1351 = vsub.s32 %v1348, %v1350
    %v1352 = vrot.slane %v479, %v1351
    %v1354 = vunpack.c.l.s4 1966171168
    %v1355 = vunpack.c.0.s8 %v1354
    %v1356 = vlaneseq
    %v1357 = vshrl.u32 %v1356, 7
    %v1358 = vsub.s32 %v1355, %v1357
    %v1359 = vrot.slane %v1352, %v1358
    %v1361 = vunpack.c.l.s4 1966171168
    %v1362 = vunpack.c.0.s8 %v1361
    %v1363 = vlaneseq
    %v1364 = vshrl.u32 %v1363, 7
    %v1365 = vsub.s32 %v1362, %v1364
    %v1366 = vrot.slane %v493, %v1365
    %v1368 = vunpack.c.l.s4 1966171168
    %v1369 = vunpack.c.0.s8 %v1368
    %v1370 = vlaneseq
    %v1371 = vshrl.u32 %v1370, 7
    %v1372 = vsub.s32 %v1369, %v1371
    %v1373 = vrot.slane %v1366, %v1372
    %v1375 = vunpack.c.l.s4 1966171168
    %v1376 = vunpack.c.0.s8 %v1375
    %v1377 = vlaneseq
    %v1378 = vshrl.u32 %v1377, 7
    %v1379 = vsub.s32 %v1376, %v1378
    %v1380 = vrot.slane %v495, %v1379
    %v1382 = vunpack.c.l.s4 1966171168
    %v1383 = vunpack.c.0.s8 %v1382
    %v1384 = vlaneseq
    %v1385 = vshrl.u32 %v1384, 7
    %v1386 = vsub.s32 %v1383, %v1385
    %v1387 = vrot.slane %v1380, %v1386
    %v1389 = vunpack.c.l.s4 1966171168
    %v1390 = vunpack.c.0.s8 %v1389
    %v1391 = vlaneseq
    %v1392 = vshrl.u32 %v1391, 7
    %v1393 = vsub.s32 %v1390, %v1392
    %v1394 = vrot.slane %v528, %v1393
    %v1396 = vunpack.c.l.s4 1966171168
    %v1397 = vunpack.c.0.s8 %v1396
    %v1398 = vlaneseq
    %v1399 = vshrl.u32 %v1398, 7
    %v1400 = vsub.s32 %v1397, %v1399
    %v1401 = vrot.slane %v1394, %v1400
    %v1403 = vunpack.c.l.s4 1966171168
    %v1404 = vunpack.c.0.s8 %v1403
    %v1405 = vlaneseq
    %v1406 = vshrl.u32 %v1405, 7
    %v1407 = vsub.s32 %v1404, %v1406
    %v1408 = vrot.slane %v542, %v1407
    %v1410 = vunpack.c.l.s4 1966171168
    %v1411 = vunpack.c.0.s8 %v1410
    %v1412 = vlaneseq
    %v1413 = vshrl.u32 %v1412, 7
    %v1414 = vsub.s32 %v1411, %v1413
    %v1415 = vrot.slane %v1408, %v1414
    %v1417 = vunpack.c.l.s4 1966171168
    %v1418 = vunpack.c.0.s8 %v1417
    %v1419 = vlaneseq
    %v1420 = vshrl.u32 %v1419, 7
    %v1421 = vsub.s32 %v1418, %v1420
    %v1422 = vrot.slane %v544, %v1421
    %v1424 = vunpack.c.l.s4 1966171168
    %v1425 = vunpack.c.0.s8 %v1424
    %v1426 = vlaneseq
    %v1427 = vshrl.u32 %v1426, 7
    %v1428 = vsub.s32 %v1425, %v1427
    %v1429 = vrot.slane %v1422, %v1428
    %v1431 = vunpack.c.l.s4 1966171168
    %v1432 = vunpack.c.0.s8 %v1431
    %v1433 = vlaneseq
    %v1434 = vshrl.u32 %v1433, 7
    %v1435 = vsub.s32 %v1432, %v1434
    %v1436 = vrot.slane %v626, %v1435
    %v1438 = vunpack.c.l.s4 1966171168
    %v1439 = vunpack.c.0.s8 %v1438
    %v1440 = vlaneseq
    %v1441 = vshrl.u32 %v1440, 7
    %v1442 = vsub.s32 %v1439, %v1441
    %v1443 = vrot.slane %v1436, %v1442
    %v1445 = vunpack.c.l.s4 1966171168
    %v1446 = vunpack.c.0.s8 %v1445
    %v1447 = vlaneseq
    %v1448 = vshrl.u32 %v1447, 7
    %v1449 = vsub.s32 %v1446, %v1448
    %v1450 = vrot.slane %v640, %v1449
    %v1452 = vunpack.c.l.s4 1966171168
    %v1453 = vunpack.c.0.s8 %v1452
    %v1454 = vlaneseq
    %v1455 = vshrl.u32 %v1454, 7
    %v1456 = vsub.s32 %v1453, %v1455
    %v1457 = vrot.slane %v1450, %v1456
    %v1459 = vunpack.c.l.s4 1966171168
    %v1460 = vunpack.c.0.s8 %v1459
    %v1461 = vlaneseq
    %v1462 = vshrl.u32 %v1461, 7
    %v1463 = vsub.s32 %v1460, %v1462
    %v1464 = vrot.slane %v642, %v1463
    %v1466 = vunpack.c.l.s4 1966171168
    %v1467 = vunpack.c.0.s8 %v1466
    %v1468 = vlaneseq
    %v1469 = vshrl.u32 %v1468, 7
    %v1470 = vsub.s32 %v1467, %v1469
    %v1471 = vrot.slane %v1464, %v1470
    %v1473 = vunpack.c.l.s4 1966171168
    %v1474 = vunpack.c.0.s8 %v1473
    %v1475 = vlaneseq
    %v1476 = vshrl.u32 %v1475, 7
    %v1477 = vsub.s32 %v1474, %v1476
    %v1478 = vrot.slane %v675, %v1477
    %v1480 = vunpack.c.l.s4 1966171168
    %v1481 = vunpack.c.0.s8 %v1480
    %v1482 = vlaneseq
    %v1483 = vshrl.u32 %v1482, 7
    %v1484 = vsub.s32 %v1481, %v1483
    %v1485 = vrot.slane %v1478, %v1484
    %v1487 = vunpack.c.l.s4 1966171168
    %v1488 = vunpack.c.0.s8 %v1487
    %v1489 = vlaneseq
    %v1490 = vshrl.u32 %v1489, 7
    %v1491 = vsub.s32 %v1488, %v1490
    %v1492 = vrot.slane %v689, %v1491
    %v1494 = vunpack.c.l.s4 1966171168
    %v1495 = vunpack.c.0.s8 %v1494
    %v1496 = vlaneseq
    %v1497 = vshrl.u32 %v1496, 7
    %v1498 = vsub.s32 %v1495, %v1497
    %v1499 = vrot.slane %v1492, %v1498
    %v1501 = vunpack.c.l.s4 1966171168
    %v1502 = vunpack.c.0.s8 %v1501
    %v1503 = vlaneseq
    %v1504 = vshrl.u32 %v1503, 7
    %v1505 = vsub.s32 %v1502, %v1504
    %v1506 = vrot.slane %v691, %v1505
    %v1508 = vunpack.c.l.s4 1966171168
    %v1509 = vunpack.c.0.s8 %v1508
    %v1510 = vlaneseq
    %v1511 = vshrl.u32 %v1510, 7
    %v1512 = vsub.s32 %v1509, %v1511
    %v1513 = vrot.slane %v1506, %v1512
    %v1515 = vunpack.c.l.s4 1966171168
    %v1516 = vunpack.c.0.s8 %v1515
    %v1517 = vlaneseq
    %v1518 = vshrl.u32 %v1517, 7
    %v1519 = vsub.s32 %v1516, %v1518
    %v1520 = vrot.slane %v724, %v1519
    %v1522 = vunpack.c.l.s4 1966171168
    %v1523 = vunpack.c.0.s8 %v1522
    %v1524 = vlaneseq
    %v1525 = vshrl.u32 %v1524, 7
    %v1526 = vsub.s32 %v1523, %v1525
    %v1527 = vrot.slane %v1520, %v1526
    %v1529 = vunpack.c.l.s4 1966171168
    %v1530 = vunpack.c.0.s8 %v1529
    %v1531 = vlaneseq
    %v1532 = vshrl.u32 %v1531, 7
    %v1533 = vsub.s32 %v1530, %v1532
    %v1534 = vrot.slane %v738, %v1533
    %v1536 = vunpack.c.l.s4 1966171168
    %v1537 = vunpack.c.0.s8 %v1536
    %v1538 = vlaneseq
    %v1539 = vshrl.u32 %v1538, 7
    %v1540 = vsub.s32 %v1537, %v1539
    %v1541 = vrot.slane %v1534, %v1540
    %v1543 = vunpack.c.l.s4 1966171168
    %v1544 = vunpack.c.0.s8 %v1543
    %v1545 = vlaneseq
    %v1546 = vshrl.u32 %v1545, 7
    %v1547 = vsub.s32 %v1544, %v1546
    %v1548 = vrot.slane %v740, %v1547
    %v1550 = vunpack.c.l.s4 1966171168
    %v1551 = vunpack.c.0.s8 %v1550
    %v1552 = vlaneseq
    %v1553 = vshrl.u32 %v1552, 7
    %v1554 = vsub.s32 %v1551, %v1553
    %v1555 = vrot.slane %v1548, %v1554
    %v1556 = vunpack.c.l.b16 %v1317
    %v1557 = vunpack.c.l.b16 %v1331
    %v1558 = vunpack.c.l.b16 %v1345
    %v1559 = vunpack.c.l.b16 %v1359
    %v1560 = vunpack.c.l.b16 %v1373
    %v1561 = vunpack.c.l.b16 %v1387
    %v1562 = vunpack.c.l.b16 %v1401
    %v1563 = vunpack.c.l.b16 %v1415
    %v1564 = vunpack.c.l.b16 %v1429
    %v1565 = vunpack.c.l.b16 %v1443
    %v1566 = vunpack.c.l.b16 %v1457
    %v1567 = vunpack.c.l.b16 %v1471
    %v1568 = vunpack.c.l.b16 %v1485
    %v1569 = vunpack.c.l.b16 %v1499
    %v1570 = vunpack.c.l.b16 %v1513
    %v1571 = vunpack.c.l.b16 %v1527
    %v1572 = vunpack.c.l.b16 %v1541
    %v1573 = vunpack.c.l.b16 %v1555
    %v1574 = vrot.slane %v1557, 7
    %v1575 = vsel %vm1063, %v1574, %v1556
    %v1576 = vrot.slane %v1558, 6
    %v1577 = vsel %vm1066, %v1576, %v1575
    %v1578 = vrot.slane %v1560, 7
    %v1579 = vsel %vm1063, %v1578, %v1559
    %v1580 = vrot.slane %v1561, 6
    %v1581 = vsel %vm1066, %v1580, %v1579
    %v1582 = vrot.slane %v1563, 7
    %v1583 = vsel %vm1063, %v1582, %v1562
    %v1584 = vrot.slane %v1564, 6
    %v1585 = vsel %vm1066, %v1584, %v1583
    %v1586 = vrot.slane %v1566, 7
    %v1587 = vsel %vm1063, %v1586, %v1565
    %v1588 = vrot.slane %v1567, 6
    %v1589 = vsel %vm1066, %v1588, %v1587
    %v1590 = vrot.slane %v1569, 7
    %v1591 = vsel %vm1063, %v1590, %v1568
    %v1592 = vrot.slane %v1570, 6
    %v1593 = vsel %vm1066, %v1592, %v1591
    %v1594 = vrot.slane %v1572, 7
    %v1595 = vsel %vm1063, %v1594, %v1571
    %v1596 = vrot.slane %v1573, 6
    %v1597 = vsel %vm1066, %v1596, %v1595
    %v1598 = vpack.c.b16 %v1577, %v1577
    %v1599 = vpack.c.b16 %v1581, %v1581
    %v1600 = vpack.c.b16 %v1585, %v1585
    %v1601 = vpack.c.b16 %v1589, %v1589
    %v1602 = vpack.c.b16 %v1593, %v1593
    %v1603 = vpack.c.b16 %v1597, %v1597
    %v1604 = vrot.slane %v1556, 1
    %v1605 = vsel %vm1063, %v1557, %v1604
    %v1606 = vrot.slane %v1558, 7
    %v1607 = vsel %vm1066, %v1606, %v1605
    %v1608 = vrot.slane %v1559, 1
    %v1609 = vsel %vm1063, %v1560, %v1608
    %v1610 = vrot.slane %v1561, 7
    %v1611 = vsel %vm1066, %v1610, %v1609
    %v1612 = vrot.slane %v1562, 1
    %v1613 = vsel %vm1063, %v1563, %v1612
    %v1614 = vrot.slane %v1564, 7
    %v1615 = vsel %vm1066, %v1614, %v1613
    %v1616 = vrot.slane %v1565, 1
    %v1617 = vsel %vm1063, %v1566, %v1616
    %v1618 = vrot.slane %v1567, 7
    %v1619 = vsel %vm1066, %v1618, %v1617
    %v1620 = vrot.slane %v1568, 1
    %v1621 = vsel %vm1063, %v1569, %v1620
    %v1622 = vrot.slane %v1570, 7
    %v1623 = vsel %vm1066, %v1622, %v1621
    %v1624 = vrot.slane %v1571, 1
    %v1625 = vsel %vm1063, %v1572, %v1624
    %v1626 = vrot.slane %v1573, 7
    %v1627 = vsel %vm1066, %v1626, %v1625
    %v1628 = vpack.c.b16 %v1607, %v1607
    %v1629 = vpack.c.b16 %v1611, %v1611
    %v1630 = vpack.c.b16 %v1615, %v1615
    %v1631 = vpack.c.b16 %v1619, %v1619
    %v1632 = vpack.c.b16 %v1623, %v1623
    %v1633 = vpack.c.b16 %v1627, %v1627
    %1634 = vrot.lane.b32.xlu0 %v1628, 32
    %v1635 = vpop.permute.xlu0 %1634
    %1636 = vrot.lane.b32.xlu0 %v1629, 32
    %v1637 = vpop.permute.xlu0 %1636
    %1638 = vrot.lane.b32.xlu0 %v1630, 32
    %v1639 = vpop.permute.xlu0 %1638
    %1640 = vrot.lane.b32.xlu0 %v1631, 32
    %v1641 = vpop.permute.xlu0 %1640
    %1642 = vrot.lane.b32.xlu0 %v1632, 32
    %v1643 = vpop.permute.xlu0 %1642
    %1644 = vrot.lane.b32.xlu0 %v1633, 32
    %v1645 = vpop.permute.xlu0 %1644
    %v1647 = vunpack.c.l.s4 1966171168
    %v1648 = vunpack.c.0.s8 %v1647
    %v1649 = vlaneseq
    %v1650 = vshrl.u32 %v1649, 7
    %v1651 = vsub.s32 %v1648, %v1650
    %v1652 = vrot.slane %v448, %v1651
    %v1654 = vunpack.c.l.s4 1966171168
    %v1655 = vunpack.c.0.s8 %v1654
    %v1656 = vlaneseq
    %v1657 = vshrl.u32 %v1656, 7
    %v1658 = vsub.s32 %v1655, %v1657
    %v1659 = vrot.slane %v1652, %v1658
    %v1661 = vunpack.c.l.s4 1966171168
    %v1662 = vunpack.c.0.s8 %v1661
    %v1663 = vlaneseq
    %v1664 = vshrl.u32 %v1663, 7
    %v1665 = vsub.s32 %v1662, %v1664
    %v1666 = vrot.slane %v497, %v1665
    %v1668 = vunpack.c.l.s4 1966171168
    %v1669 = vunpack.c.0.s8 %v1668
    %v1670 = vlaneseq
    %v1671 = vshrl.u32 %v1670, 7
    %v1672 = vsub.s32 %v1669, %v1671
    %v1673 = vrot.slane %v1666, %v1672
    %v1675 = vunpack.c.l.s4 1966171168
    %v1676 = vunpack.c.0.s8 %v1675
    %v1677 = vlaneseq
    %v1678 = vshrl.u32 %v1677, 7
    %v1679 = vsub.s32 %v1676, %v1678
    %v1680 = vrot.slane %v546, %v1679
    %v1682 = vunpack.c.l.s4 1966171168
    %v1683 = vunpack.c.0.s8 %v1682
    %v1684 = vlaneseq
    %v1685 = vshrl.u32 %v1684, 7
    %v1686 = vsub.s32 %v1683, %v1685
    %v1687 = vrot.slane %v1680, %v1686
    %v1689 = vunpack.c.l.s4 1966171168
    %v1690 = vunpack.c.0.s8 %v1689
    %v1691 = vlaneseq
    %v1692 = vshrl.u32 %v1691, 7
    %v1693 = vsub.s32 %v1690, %v1692
    %v1694 = vrot.slane %v644, %v1693
    %v1696 = vunpack.c.l.s4 1966171168
    %v1697 = vunpack.c.0.s8 %v1696
    %v1698 = vlaneseq
    %v1699 = vshrl.u32 %v1698, 7
    %v1700 = vsub.s32 %v1697, %v1699
    %v1701 = vrot.slane %v1694, %v1700
    %v1703 = vunpack.c.l.s4 1966171168
    %v1704 = vunpack.c.0.s8 %v1703
    %v1705 = vlaneseq
    %v1706 = vshrl.u32 %v1705, 7
    %v1707 = vsub.s32 %v1704, %v1706
    %v1708 = vrot.slane %v693, %v1707
    %v1710 = vunpack.c.l.s4 1966171168
    %v1711 = vunpack.c.0.s8 %v1710
    %v1712 = vlaneseq
    %v1713 = vshrl.u32 %v1712, 7
    %v1714 = vsub.s32 %v1711, %v1713
    %v1715 = vrot.slane %v1708, %v1714
    %v1717 = vunpack.c.l.s4 1966171168
    %v1718 = vunpack.c.0.s8 %v1717
    %v1719 = vlaneseq
    %v1720 = vshrl.u32 %v1719, 7
    %v1721 = vsub.s32 %v1718, %v1720
    %v1722 = vrot.slane %v742, %v1721
    %v1724 = vunpack.c.l.s4 1966171168
    %v1725 = vunpack.c.0.s8 %v1724
    %v1726 = vlaneseq
    %v1727 = vshrl.u32 %v1726, 7
    %v1728 = vsub.s32 %v1725, %v1727
    %v1729 = vrot.slane %v1722, %v1728
    %v1730 = vunpack.c.l.b16 %v1659
    %v1731 = vunpack.c.l.b16 %v1673
    %v1732 = vunpack.c.l.b16 %v1687
    %v1733 = vunpack.c.l.b16 %v1701
    %v1734 = vunpack.c.l.b16 %v1715
    %v1735 = vunpack.c.l.b16 %v1729
    %v1736 = vsel %vm1063, %v1606, %v1557
    %v1737 = vrot.slane %v1730, 6
    %v1738 = vsel %vm1066, %v1737, %v1736
    %v1739 = vsel %vm1063, %v1610, %v1560
    %v1740 = vrot.slane %v1731, 6
    %v1741 = vsel %vm1066, %v1740, %v1739
    %v1742 = vsel %vm1063, %v1614, %v1563
    %v1743 = vrot.slane %v1732, 6
    %v1744 = vsel %vm1066, %v1743, %v1742
    %v1745 = vsel %vm1063, %v1618, %v1566
    %v1746 = vrot.slane %v1733, 6
    %v1747 = vsel %vm1066, %v1746, %v1745
    %v1748 = vsel %vm1063, %v1622, %v1569
    %v1749 = vrot.slane %v1734, 6
    %v1750 = vsel %vm1066, %v1749, %v1748
    %v1751 = vsel %vm1063, %v1626, %v1572
    %v1752 = vrot.slane %v1735, 6
    %v1753 = vsel %vm1066, %v1752, %v1751
    %v1754 = vpack.c.b16 %v1738, %v1738
    %v1755 = vpack.c.b16 %v1741, %v1741
    %v1756 = vpack.c.b16 %v1744, %v1744
    %v1757 = vpack.c.b16 %v1747, %v1747
    %v1758 = vpack.c.b16 %v1750, %v1750
    %v1759 = vpack.c.b16 %v1753, %v1753
    %1760 = vrot.lane.b32.xlu0 %v1754, 64
    %v1761 = vpop.permute.xlu0 %1760
    %1762 = vrot.lane.b32.xlu0 %v1755, 64
    %v1763 = vpop.permute.xlu0 %1762
    %1764 = vrot.lane.b32.xlu0 %v1756, 64
    %v1765 = vpop.permute.xlu0 %1764
    %1766 = vrot.lane.b32.xlu0 %v1757, 64
    %v1767 = vpop.permute.xlu0 %1766
    %1768 = vrot.lane.b32.xlu0 %v1758, 64
    %v1769 = vpop.permute.xlu0 %1768
    %1770 = vrot.lane.b32.xlu0 %v1759, 64
    %v1771 = vpop.permute.xlu0 %1770
    %v1772 = vrot.slane %v1557, 1
    %v1773 = vsel %vm1063, %v1558, %v1772
    %v1774 = vrot.slane %v1730, 7
    %v1775 = vsel %vm1066, %v1774, %v1773
    %v1776 = vrot.slane %v1560, 1
    %v1777 = vsel %vm1063, %v1561, %v1776
    %v1778 = vrot.slane %v1731, 7
    %v1779 = vsel %vm1066, %v1778, %v1777
    %v1780 = vrot.slane %v1563, 1
    %v1781 = vsel %vm1063, %v1564, %v1780
    %v1782 = vrot.slane %v1732, 7
    %v1783 = vsel %vm1066, %v1782, %v1781
    %v1784 = vrot.slane %v1566, 1
    %v1785 = vsel %vm1063, %v1567, %v1784
    %v1786 = vrot.slane %v1733, 7
    %v1787 = vsel %vm1066, %v1786, %v1785
    %v1788 = vrot.slane %v1569, 1
    %v1789 = vsel %vm1063, %v1570, %v1788
    %v1790 = vrot.slane %v1734, 7
    %v1791 = vsel %vm1066, %v1790, %v1789
    %v1792 = vrot.slane %v1572, 1
    %v1793 = vsel %vm1063, %v1573, %v1792
    %v1794 = vrot.slane %v1735, 7
    %v1795 = vsel %vm1066, %v1794, %v1793
    %v1796 = vpack.c.b16 %v1775, %v1775
    %v1797 = vpack.c.b16 %v1779, %v1779
    %v1798 = vpack.c.b16 %v1783, %v1783
    %v1799 = vpack.c.b16 %v1787, %v1787
    %v1800 = vpack.c.b16 %v1791, %v1791
    %v1801 = vpack.c.b16 %v1795, %v1795
    %1802 = vrot.lane.b32.xlu0 %v1796, 96
    %v1803 = vpop.permute.xlu0 %1802
    %1804 = vrot.lane.b32.xlu0 %v1797, 96
    %v1805 = vpop.permute.xlu0 %1804
    %1806 = vrot.lane.b32.xlu0 %v1798, 96
    %v1807 = vpop.permute.xlu0 %1806
    %1808 = vrot.lane.b32.xlu0 %v1799, 96
    %v1809 = vpop.permute.xlu0 %1808
    %1810 = vrot.lane.b32.xlu0 %v1800, 96
    %v1811 = vpop.permute.xlu0 %1810
    %1812 = vrot.lane.b32.xlu0 %v1801, 96
    %v1813 = vpop.permute.xlu0 %1812
    %v1815 = vunpack.c.l.s4 1966171168
    %v1816 = vunpack.c.0.s8 %v1815
    %v1817 = vlaneseq
    %v1818 = vshrl.u32 %v1817, 7
    %v1819 = vsub.s32 %v1816, %v1818
    %v1820 = vrot.slane %v570, %v1819
    %v1822 = vunpack.c.l.s4 1966171168
    %v1823 = vunpack.c.0.s8 %v1822
    %v1824 = vlaneseq
    %v1825 = vshrl.u32 %v1824, 7
    %v1826 = vsub.s32 %v1823, %v1825
    %v1827 = vrot.slane %v1820, %v1826
    %v1829 = vunpack.c.l.s4 1966171168
    %v1830 = vunpack.c.0.s8 %v1829
    %v1831 = vlaneseq
    %v1832 = vshrl.u32 %v1831, 7
    %v1833 = vsub.s32 %v1830, %v1832
    %v1834 = vrot.slane %v584, %v1833
    %v1836 = vunpack.c.l.s4 1966171168
    %v1837 = vunpack.c.0.s8 %v1836
    %v1838 = vlaneseq
    %v1839 = vshrl.u32 %v1838, 7
    %v1840 = vsub.s32 %v1837, %v1839
    %v1841 = vrot.slane %v1834, %v1840
    %v1843 = vunpack.c.l.s4 1966171168
    %v1844 = vunpack.c.0.s8 %v1843
    %v1845 = vlaneseq
    %v1846 = vshrl.u32 %v1845, 7
    %v1847 = vsub.s32 %v1844, %v1846
    %v1848 = vrot.slane %v592, %v1847
    %v1850 = vunpack.c.l.s4 1966171168
    %v1851 = vunpack.c.0.s8 %v1850
    %v1852 = vlaneseq
    %v1853 = vshrl.u32 %v1852, 7
    %v1854 = vsub.s32 %v1851, %v1853
    %v1855 = vrot.slane %v1848, %v1854
    %v1857 = vunpack.c.l.s4 1966171168
    %v1858 = vunpack.c.0.s8 %v1857
    %v1859 = vlaneseq
    %v1860 = vshrl.u32 %v1859, 7
    %v1861 = vsub.s32 %v1858, %v1860
    %v1862 = vrot.slane %v766, %v1861
    %v1864 = vunpack.c.l.s4 1966171168
    %v1865 = vunpack.c.0.s8 %v1864
    %v1866 = vlaneseq
    %v1867 = vshrl.u32 %v1866, 7
    %v1868 = vsub.s32 %v1865, %v1867
    %v1869 = vrot.slane %v1862, %v1868
    %v1871 = vunpack.c.l.s4 1966171168
    %v1872 = vunpack.c.0.s8 %v1871
    %v1873 = vlaneseq
    %v1874 = vshrl.u32 %v1873, 7
    %v1875 = vsub.s32 %v1872, %v1874
    %v1876 = vrot.slane %v780, %v1875
    %v1878 = vunpack.c.l.s4 1966171168
    %v1879 = vunpack.c.0.s8 %v1878
    %v1880 = vlaneseq
    %v1881 = vshrl.u32 %v1880, 7
    %v1882 = vsub.s32 %v1879, %v1881
    %v1883 = vrot.slane %v1876, %v1882
    %v1885 = vunpack.c.l.s4 1966171168
    %v1886 = vunpack.c.0.s8 %v1885
    %v1887 = vlaneseq
    %v1888 = vshrl.u32 %v1887, 7
    %v1889 = vsub.s32 %v1886, %v1888
    %v1890 = vrot.slane %v788, %v1889
    %v1892 = vunpack.c.l.s4 1966171168
    %v1893 = vunpack.c.0.s8 %v1892
    %v1894 = vlaneseq
    %v1895 = vshrl.u32 %v1894, 7
    %v1896 = vsub.s32 %v1893, %v1895
    %v1897 = vrot.slane %v1890, %v1896
    %v1898 = vunpack.c.l.b16 %v1827
    %v1899 = vunpack.c.l.b16 %v1841
    %v1900 = vunpack.c.l.b16 %v1855
    %v1901 = vunpack.c.l.b16 %v1869
    %v1902 = vunpack.c.l.b16 %v1883
    %v1903 = vunpack.c.l.b16 %v1897
    %v1904 = vrot.slane %v1899, 7
    %v1905 = vsel %vm1063, %v1904, %v1898
    %v1906 = vrot.slane %v1900, 6
    %v1907 = vsel %vm1066, %v1906, %v1905
    %v1908 = vrot.slane %v1902, 7
    %v1909 = vsel %vm1063, %v1908, %v1901
    %v1910 = vrot.slane %v1903, 6
    %v1911 = vsel %vm1066, %v1910, %v1909
    %v1912 = vpack.c.b16 %v1907, %v1907
    %v1913 = vpack.c.b16 %v1911, %v1911
    %v1914 = vrot.slane %v1898, 1
    %v1915 = vsel %vm1063, %v1899, %v1914
    %v1916 = vrot.slane %v1900, 7
    %v1917 = vsel %vm1066, %v1916, %v1915
    %v1918 = vrot.slane %v1901, 1
    %v1919 = vsel %vm1063, %v1902, %v1918
    %v1920 = vrot.slane %v1903, 7
    %v1921 = vsel %vm1066, %v1920, %v1919
    %v1922 = vpack.c.b16 %v1917, %v1917
    %v1923 = vpack.c.b16 %v1921, %v1921
    %1924 = vrot.lane.b32.xlu0 %v1922, 32
    %v1925 = vpop.permute.xlu0 %1924
    %1926 = vrot.lane.b32.xlu0 %v1923, 32
    %v1927 = vpop.permute.xlu0 %1926
    %v1929 = vunpack.c.l.s4 1966171168
    %v1930 = vunpack.c.0.s8 %v1929
    %v1931 = vlaneseq
    %v1932 = vshrl.u32 %v1931, 7
    %v1933 = vsub.s32 %v1930, %v1932
    %v1934 = vrot.slane %v594, %v1933
    %v1936 = vunpack.c.l.s4 1966171168
    %v1937 = vunpack.c.0.s8 %v1936
    %v1938 = vlaneseq
    %v1939 = vshrl.u32 %v1938, 7
    %v1940 = vsub.s32 %v1937, %v1939
    %v1941 = vrot.slane %v1934, %v1940
    %v1943 = vunpack.c.l.s4 1966171168
    %v1944 = vunpack.c.0.s8 %v1943
    %v1945 = vlaneseq
    %v1946 = vshrl.u32 %v1945, 7
    %v1947 = vsub.s32 %v1944, %v1946
    %v1948 = vrot.slane %v790, %v1947
    %v1950 = vunpack.c.l.s4 1966171168
    %v1951 = vunpack.c.0.s8 %v1950
    %v1952 = vlaneseq
    %v1953 = vshrl.u32 %v1952, 7
    %v1954 = vsub.s32 %v1951, %v1953
    %v1955 = vrot.slane %v1948, %v1954
    %v1956 = vunpack.c.l.b16 %v1941
    %v1957 = vunpack.c.l.b16 %v1955
    %v1958 = vsel %vm1063, %v1916, %v1899
    %v1959 = vrot.slane %v1956, 6
    %v1960 = vsel %vm1066, %v1959, %v1958
    %v1961 = vsel %vm1063, %v1920, %v1902
    %v1962 = vrot.slane %v1957, 6
    %v1963 = vsel %vm1066, %v1962, %v1961
    %v1964 = vpack.c.b16 %v1960, %v1960
    %v1965 = vpack.c.b16 %v1963, %v1963
    %1966 = vrot.lane.b32.xlu0 %v1964, 64
    %v1967 = vpop.permute.xlu0 %1966
    %1968 = vrot.lane.b32.xlu0 %v1965, 64
    %v1969 = vpop.permute.xlu0 %1968
    %v1970 = vrot.slane %v1899, 1
    %v1971 = vsel %vm1063, %v1900, %v1970
    %v1972 = vrot.slane %v1956, 7
    %v1973 = vsel %vm1066, %v1972, %v1971
    %v1974 = vrot.slane %v1902, 1
    %v1975 = vsel %vm1063, %v1903, %v1974
    %v1976 = vrot.slane %v1957, 7
    %v1977 = vsel %vm1066, %v1976, %v1975
    %v1978 = vpack.c.b16 %v1973, %v1973
    %v1979 = vpack.c.b16 %v1977, %v1977
    %1980 = vrot.lane.b32.xlu0 %v1978, 96
    %v1981 = vpop.permute.xlu0 %1980
    %1982 = vrot.lane.b32.xlu0 %v1979, 96
    %v1983 = vpop.permute.xlu0 %1982
    %v1985 = vunpack.c.l.s4 1966171168
    %v1986 = vunpack.c.0.s8 %v1985
    %v1987 = vlaneseq
    %v1988 = vshrl.u32 %v1987, 7
    %v1989 = vsub.s32 %v1986, %v1988
    %v1990 = vrot.slane %v577, %v1989
    %v1992 = vunpack.c.l.s4 1966171168
    %v1993 = vunpack.c.0.s8 %v1992
    %v1994 = vlaneseq
    %v1995 = vshrl.u32 %v1994, 7
    %v1996 = vsub.s32 %v1993, %v1995
    %v1997 = vrot.slane %v1990, %v1996
    %v1999 = vunpack.c.l.s4 1966171168
    %v2000 = vunpack.c.0.s8 %v1999
    %v2001 = vlaneseq
    %v2002 = vshrl.u32 %v2001, 7
    %v2003 = vsub.s32 %v2000, %v2002
    %v2004 = vrot.slane %v591, %v2003
    %v2006 = vunpack.c.l.s4 1966171168
    %v2007 = vunpack.c.0.s8 %v2006
    %v2008 = vlaneseq
    %v2009 = vshrl.u32 %v2008, 7
    %v2010 = vsub.s32 %v2007, %v2009
    %v2011 = vrot.slane %v2004, %v2010
    %v2013 = vunpack.c.l.s4 1966171168
    %v2014 = vunpack.c.0.s8 %v2013
    %v2015 = vlaneseq
    %v2016 = vshrl.u32 %v2015, 7
    %v2017 = vsub.s32 %v2014, %v2016
    %v2018 = vrot.slane %v593, %v2017
    %v2020 = vunpack.c.l.s4 1966171168
    %v2021 = vunpack.c.0.s8 %v2020
    %v2022 = vlaneseq
    %v2023 = vshrl.u32 %v2022, 7
    %v2024 = vsub.s32 %v2021, %v2023
    %v2025 = vrot.slane %v2018, %v2024
    %v2027 = vunpack.c.l.s4 1966171168
    %v2028 = vunpack.c.0.s8 %v2027
    %v2029 = vlaneseq
    %v2030 = vshrl.u32 %v2029, 7
    %v2031 = vsub.s32 %v2028, %v2030
    %v2032 = vrot.slane %v773, %v2031
    %v2034 = vunpack.c.l.s4 1966171168
    %v2035 = vunpack.c.0.s8 %v2034
    %v2036 = vlaneseq
    %v2037 = vshrl.u32 %v2036, 7
    %v2038 = vsub.s32 %v2035, %v2037
    %v2039 = vrot.slane %v2032, %v2038
    %v2041 = vunpack.c.l.s4 1966171168
    %v2042 = vunpack.c.0.s8 %v2041
    %v2043 = vlaneseq
    %v2044 = vshrl.u32 %v2043, 7
    %v2045 = vsub.s32 %v2042, %v2044
    %v2046 = vrot.slane %v787, %v2045
    %v2048 = vunpack.c.l.s4 1966171168
    %v2049 = vunpack.c.0.s8 %v2048
    %v2050 = vlaneseq
    %v2051 = vshrl.u32 %v2050, 7
    %v2052 = vsub.s32 %v2049, %v2051
    %v2053 = vrot.slane %v2046, %v2052
    %v2055 = vunpack.c.l.s4 1966171168
    %v2056 = vunpack.c.0.s8 %v2055
    %v2057 = vlaneseq
    %v2058 = vshrl.u32 %v2057, 7
    %v2059 = vsub.s32 %v2056, %v2058
    %v2060 = vrot.slane %v789, %v2059
    %v2062 = vunpack.c.l.s4 1966171168
    %v2063 = vunpack.c.0.s8 %v2062
    %v2064 = vlaneseq
    %v2065 = vshrl.u32 %v2064, 7
    %v2066 = vsub.s32 %v2063, %v2065
    %v2067 = vrot.slane %v2060, %v2066
    %v2068 = vunpack.c.l.b16 %v1997
    %v2069 = vunpack.c.l.b16 %v2011
    %v2070 = vunpack.c.l.b16 %v2025
    %v2071 = vunpack.c.l.b16 %v2039
    %v2072 = vunpack.c.l.b16 %v2053
    %v2073 = vunpack.c.l.b16 %v2067
    %v2074 = vrot.slane %v2069, 7
    %v2075 = vsel %vm1063, %v2074, %v2068
    %v2076 = vrot.slane %v2070, 6
    %v2077 = vsel %vm1066, %v2076, %v2075
    %v2078 = vrot.slane %v2072, 7
    %v2079 = vsel %vm1063, %v2078, %v2071
    %v2080 = vrot.slane %v2073, 6
    %v2081 = vsel %vm1066, %v2080, %v2079
    %v2082 = vpack.c.b16 %v2077, %v2077
    %v2083 = vpack.c.b16 %v2081, %v2081
    %v2084 = vrot.slane %v2068, 1
    %v2085 = vsel %vm1063, %v2069, %v2084
    %v2086 = vrot.slane %v2070, 7
    %v2087 = vsel %vm1066, %v2086, %v2085
    %v2088 = vrot.slane %v2071, 1
    %v2089 = vsel %vm1063, %v2072, %v2088
    %v2090 = vrot.slane %v2073, 7
    %v2091 = vsel %vm1066, %v2090, %v2089
    %v2092 = vpack.c.b16 %v2087, %v2087
    %v2093 = vpack.c.b16 %v2091, %v2091
    %2094 = vrot.lane.b32.xlu0 %v2092, 32
    %v2095 = vpop.permute.xlu0 %2094
    %2096 = vrot.lane.b32.xlu0 %v2093, 32
    %v2097 = vpop.permute.xlu0 %2096
    %v2099 = vunpack.c.l.s4 1966171168
    %v2100 = vunpack.c.0.s8 %v2099
    %v2101 = vlaneseq
    %v2102 = vshrl.u32 %v2101, 7
    %v2103 = vsub.s32 %v2100, %v2102
    %v2104 = vrot.slane %v595, %v2103
    %v2106 = vunpack.c.l.s4 1966171168
    %v2107 = vunpack.c.0.s8 %v2106
    %v2108 = vlaneseq
    %v2109 = vshrl.u32 %v2108, 7
    %v2110 = vsub.s32 %v2107, %v2109
    %v2111 = vrot.slane %v2104, %v2110
    %v2113 = vunpack.c.l.s4 1966171168
    %v2114 = vunpack.c.0.s8 %v2113
    %v2115 = vlaneseq
    %v2116 = vshrl.u32 %v2115, 7
    %v2117 = vsub.s32 %v2114, %v2116
    %v2118 = vrot.slane %v791, %v2117
    %v2120 = vunpack.c.l.s4 1966171168
    %v2121 = vunpack.c.0.s8 %v2120
    %v2122 = vlaneseq
    %v2123 = vshrl.u32 %v2122, 7
    %v2124 = vsub.s32 %v2121, %v2123
    %v2125 = vrot.slane %v2118, %v2124
    %v2126 = vunpack.c.l.b16 %v2111
    %v2127 = vunpack.c.l.b16 %v2125
    %v2128 = vsel %vm1063, %v2086, %v2069
    %v2129 = vrot.slane %v2126, 6
    %v2130 = vsel %vm1066, %v2129, %v2128
    %v2131 = vsel %vm1063, %v2090, %v2072
    %v2132 = vrot.slane %v2127, 6
    %v2133 = vsel %vm1066, %v2132, %v2131
    %v2134 = vpack.c.b16 %v2130, %v2130
    %v2135 = vpack.c.b16 %v2133, %v2133
    %2136 = vrot.lane.b32.xlu0 %v2134, 64
    %v2137 = vpop.permute.xlu0 %2136
    %2138 = vrot.lane.b32.xlu0 %v2135, 64
    %v2139 = vpop.permute.xlu0 %2138
    %v2140 = vrot.slane %v2069, 1
    %v2141 = vsel %vm1063, %v2070, %v2140
    %v2142 = vrot.slane %v2126, 7
    %v2143 = vsel %vm1066, %v2142, %v2141
    %v2144 = vrot.slane %v2072, 1
    %v2145 = vsel %vm1063, %v2073, %v2144
    %v2146 = vrot.slane %v2127, 7
    %v2147 = vsel %vm1066, %v2146, %v2145
    %v2148 = vpack.c.b16 %v2143, %v2143
    %v2149 = vpack.c.b16 %v2147, %v2147
    %2150 = vrot.lane.b32.xlu0 %v2148, 96
    %v2151 = vpop.permute.xlu0 %2150
    %2152 = vrot.lane.b32.xlu0 %v2149, 96
    %v2153 = vpop.permute.xlu0 %2152
    %vm2154 = vcmask 261120
    %v2157 = vsel %vm2154, %v1088, %v1125
    %v2160 = vsel %vm2154, %v1089, %v1127
    %v2163 = vsel %vm2154, %v1090, %v1129
    %v2166 = vsel %vm2154, %v1091, %v1131
    %v2169 = vsel %vm2154, %v1092, %v1133
    %v2172 = vsel %vm2154, %v1093, %v1135
    %vm2173 = vcmask 523264
    %v2175 = vsel %vm2173, %v2157, %v1251
    %v2177 = vsel %vm2173, %v2160, %v1253
    %v2179 = vsel %vm2173, %v2163, %v1255
    %v2181 = vsel %vm2173, %v2166, %v1257
    %v2183 = vsel %vm2173, %v2169, %v1259
    %v2185 = vsel %vm2173, %v2172, %v1261
    %vm2186 = vcmask 785408
    %v2188 = vsel %vm2186, %v2175, %v1293
    %v2190 = vsel %vm2186, %v2177, %v1295
    %v2192 = vsel %vm2186, %v2179, %v1297
    %v2194 = vsel %vm2186, %v2181, %v1299
    %v2196 = vsel %vm2186, %v2183, %v1301
    %v2198 = vsel %vm2186, %v2185, %v1303
    %v2201 = vsel %vm2154, %v1598, %v1635
    %v2204 = vsel %vm2154, %v1599, %v1637
    %v2207 = vsel %vm2154, %v1600, %v1639
    %v2210 = vsel %vm2154, %v1601, %v1641
    %v2213 = vsel %vm2154, %v1602, %v1643
    %v2216 = vsel %vm2154, %v1603, %v1645
    %v2218 = vsel %vm2173, %v2201, %v1761
    %v2220 = vsel %vm2173, %v2204, %v1763
    %v2222 = vsel %vm2173, %v2207, %v1765
    %v2224 = vsel %vm2173, %v2210, %v1767
    %v2226 = vsel %vm2173, %v2213, %v1769
    %v2228 = vsel %vm2173, %v2216, %v1771
    %v2230 = vsel %vm2186, %v2218, %v1803
    %v2232 = vsel %vm2186, %v2220, %v1805
    %v2234 = vsel %vm2186, %v2222, %v1807
    %v2236 = vsel %vm2186, %v2224, %v1809
    %v2238 = vsel %vm2186, %v2226, %v1811
    %v2240 = vsel %vm2186, %v2228, %v1813
    %v2243 = vsel %vm2154, %v1912, %v1925
    %v2246 = vsel %vm2154, %v1913, %v1927
    %v2248 = vsel %vm2173, %v2243, %v1967
    %v2250 = vsel %vm2173, %v2246, %v1969
    %v2252 = vsel %vm2186, %v2248, %v1981
    %v2254 = vsel %vm2186, %v2250, %v1983
    %v2257 = vsel %vm2154, %v2082, %v2095
    %v2260 = vsel %vm2154, %v2083, %v2097
    %v2262 = vsel %vm2173, %v2257, %v2137
    %v2264 = vsel %vm2173, %v2260, %v2139
    %v2266 = vsel %vm2186, %v2262, %v2151
    %v2268 = vsel %vm2186, %v2264, %v2153
    %v2285 = vcombine.low %v2188, %v2230
    %v2286 = vcombine.low %v2190, %v2232
    %v2288 = vunpack.c.l.s4 1966171168
    %v2289 = vunpack.c.0.s8 %v2288
    %v2290 = vlaneseq
    %v2291 = vshrl.u32 %v2290, 7
    %v2292 = vsub.s32 %v2289, %v2291
    %v2293 = vrot.slane %v2285, %v2292
    %v2295 = vunpack.c.l.s4 1966171168
    %v2296 = vunpack.c.0.s8 %v2295
    %v2297 = vlaneseq
    %v2298 = vshrl.u32 %v2297, 7
    %v2299 = vsub.s32 %v2296, %v2298
    %v2300 = vrot.slane %v2286, %v2299
    %v2301 = vcombine.low %v2293, %v2300
    %v2302 = vcombine.high %v2293, %v2300
    %v2304 = vunpack.c.l.s4 1966171168
    %v2305 = vunpack.c.0.s8 %v2304
    %v2306 = vlaneseq
    %v2307 = vshrl.u32 %v2306, 7
    %v2308 = vsub.s32 %v2305, %v2307
    %v2309 = vrot.slane %v2301, %v2308
    %v2311 = vunpack.c.l.s4 1966171168
    %v2312 = vunpack.c.0.s8 %v2311
    %v2313 = vlaneseq
    %v2314 = vshrl.u32 %v2313, 7
    %v2315 = vsub.s32 %v2312, %v2314
    %v2316 = vrot.slane %v2302, %v2315
    %v2317 = vcombine.low %v2192, %v2234
    %v2319 = vunpack.c.l.s4 1966171168
    %v2320 = vunpack.c.0.s8 %v2319
    %v2321 = vlaneseq
    %v2322 = vshrl.u32 %v2321, 7
    %v2323 = vsub.s32 %v2320, %v2322
    %v2324 = vrot.slane %v2317, %v2323
    %v2325 = vcombine.low %v2300, %v2324
    %v2326 = vcombine.high %v2300, %v2324
    %v2328 = vunpack.c.l.s4 1966171168
    %v2329 = vunpack.c.0.s8 %v2328
    %v2330 = vlaneseq
    %v2331 = vshrl.u32 %v2330, 7
    %v2332 = vsub.s32 %v2329, %v2331
    %v2333 = vrot.slane %v2325, %v2332
    %v2335 = vunpack.c.l.s4 1966171168
    %v2336 = vunpack.c.0.s8 %v2335
    %v2337 = vlaneseq
    %v2338 = vshrl.u32 %v2337, 7
    %v2339 = vsub.s32 %v2336, %v2338
    %v2340 = vrot.slane %v2326, %v2339
    %v2341 = vcombine.low %v2252, %v2266
    %v2343 = vunpack.c.l.s4 1966171168
    %v2344 = vunpack.c.0.s8 %v2343
    %v2345 = vlaneseq
    %v2346 = vshrl.u32 %v2345, 7
    %v2347 = vsub.s32 %v2344, %v2346
    %v2348 = vrot.slane %v2341, %v2347
    %v2349 = vcombine.low %v2324, %v2348
    %v2350 = vcombine.high %v2324, %v2348
    %v2352 = vunpack.c.l.s4 1966171168
    %v2353 = vunpack.c.0.s8 %v2352
    %v2354 = vlaneseq
    %v2355 = vshrl.u32 %v2354, 7
    %v2356 = vsub.s32 %v2353, %v2355
    %v2357 = vrot.slane %v2349, %v2356
    %v2359 = vunpack.c.l.s4 1966171168
    %v2360 = vunpack.c.0.s8 %v2359
    %v2361 = vlaneseq
    %v2362 = vshrl.u32 %v2361, 7
    %v2363 = vsub.s32 %v2360, %v2362
    %v2364 = vrot.slane %v2350, %v2363
    %v2365 = vcombine.low %v2194, %v2236
    %v2366 = vcombine.low %v2196, %v2238
    %v2368 = vunpack.c.l.s4 1966171168
    %v2369 = vunpack.c.0.s8 %v2368
    %v2370 = vlaneseq
    %v2371 = vshrl.u32 %v2370, 7
    %v2372 = vsub.s32 %v2369, %v2371
    %v2373 = vrot.slane %v2365, %v2372
    %v2375 = vunpack.c.l.s4 1966171168
    %v2376 = vunpack.c.0.s8 %v2375
    %v2377 = vlaneseq
    %v2378 = vshrl.u32 %v2377, 7
    %v2379 = vsub.s32 %v2376, %v2378
    %v2380 = vrot.slane %v2366, %v2379
    %v2381 = vcombine.low %v2373, %v2380
    %v2382 = vcombine.high %v2373, %v2380
    %v2384 = vunpack.c.l.s4 1966171168
    %v2385 = vunpack.c.0.s8 %v2384
    %v2386 = vlaneseq
    %v2387 = vshrl.u32 %v2386, 7
    %v2388 = vsub.s32 %v2385, %v2387
    %v2389 = vrot.slane %v2381, %v2388
    %v2391 = vunpack.c.l.s4 1966171168
    %v2392 = vunpack.c.0.s8 %v2391
    %v2393 = vlaneseq
    %v2394 = vshrl.u32 %v2393, 7
    %v2395 = vsub.s32 %v2392, %v2394
    %v2396 = vrot.slane %v2382, %v2395
    %v2397 = vcombine.low %v2198, %v2240
    %v2399 = vunpack.c.l.s4 1966171168
    %v2400 = vunpack.c.0.s8 %v2399
    %v2401 = vlaneseq
    %v2402 = vshrl.u32 %v2401, 7
    %v2403 = vsub.s32 %v2400, %v2402
    %v2404 = vrot.slane %v2397, %v2403
    %v2405 = vcombine.low %v2380, %v2404
    %v2406 = vcombine.high %v2380, %v2404
    %v2408 = vunpack.c.l.s4 1966171168
    %v2409 = vunpack.c.0.s8 %v2408
    %v2410 = vlaneseq
    %v2411 = vshrl.u32 %v2410, 7
    %v2412 = vsub.s32 %v2409, %v2411
    %v2413 = vrot.slane %v2405, %v2412
    %v2415 = vunpack.c.l.s4 1966171168
    %v2416 = vunpack.c.0.s8 %v2415
    %v2417 = vlaneseq
    %v2418 = vshrl.u32 %v2417, 7
    %v2419 = vsub.s32 %v2416, %v2418
    %v2420 = vrot.slane %v2406, %v2419
    %v2421 = vcombine.low %v2254, %v2268
    %v2423 = vunpack.c.l.s4 1966171168
    %v2424 = vunpack.c.0.s8 %v2423
    %v2425 = vlaneseq
    %v2426 = vshrl.u32 %v2425, 7
    %v2427 = vsub.s32 %v2424, %v2426
    %v2428 = vrot.slane %v2421, %v2427
    %v2429 = vcombine.low %v2404, %v2428
    %v2430 = vcombine.high %v2404, %v2428
    %v2432 = vunpack.c.l.s4 1966171168
    %v2433 = vunpack.c.0.s8 %v2432
    %v2434 = vlaneseq
    %v2435 = vshrl.u32 %v2434, 7
    %v2436 = vsub.s32 %v2433, %v2435
    %v2437 = vrot.slane %v2429, %v2436
    %v2439 = vunpack.c.l.s4 1966171168
    %v2440 = vunpack.c.0.s8 %v2439
    %v2441 = vlaneseq
    %v2442 = vshrl.u32 %v2441, 7
    %v2443 = vsub.s32 %v2440, %v2442
    %v2444 = vrot.slane %v2430, %v2443
    %v2445 = vunpack.i.l.s16 %v2309
    %v2446 = vunpack.i.h.s16 %v2309
    %v2447 = vunpack.i.l.s16 %v2316
    %v2448 = vunpack.i.l.s16 %v2333
    %v2449 = vunpack.i.h.s16 %v2333
    %v2450 = vunpack.i.l.s16 %v2340
    %v2451 = vunpack.i.l.s16 %v2357
    %v2452 = vunpack.i.h.s16 %v2357
    %v2453 = vunpack.i.l.s16 %v2364
    %v2454 = vunpack.i.l.s16 %v2389
    %v2455 = vunpack.i.h.s16 %v2389
    %v2456 = vunpack.i.l.s16 %v2396
    %v2457 = vunpack.i.l.s16 %v2413
    %v2458 = vunpack.i.h.s16 %v2413
    %v2459 = vunpack.i.l.s16 %v2420
    %v2460 = vunpack.i.l.s16 %v2437
    %v2461 = vunpack.i.h.s16 %v2437
    %v2462 = vunpack.i.l.s16 %v2444
    %v2463 = vld [vmem:[%s3] sm:$0xf]
    %v2464 = vld [vmem:[%s3 + $0x4] sm:$0xf]
    %v2465 = vld [vmem:[%s3 + $0x8] sm:$0xf]
    %v2466 = vld [vmem:[%s3 + $0xc] sm:$0xf]
    %v2467 = vld [vmem:[%s3 + $0x10] sm:$0xf]
    %v2468 = vld [vmem:[%s3 + $0x14] sm:$0xf]
    %v2469 = vld [vmem:[%s3 + $0x18] sm:$0xf]
    %v2470 = vld [vmem:[%s3 + $0x1c] sm:$0xf]
    %v2471 = vld [vmem:[%s3 + $0x20] sm:$0xf]
    %v2472 = vld [vmem:[%s3 + $0x24] sm:$0xf]
    %v2473 = vld [vmem:[%s3 + $0x28] sm:$0xf]
    %v2474 = vld [vmem:[%s3 + $0x2c] sm:$0xf]
    %v2475 = vld [vmem:[%s3 + $0x30] sm:$0xf]
    %v2476 = vld [vmem:[%s3 + $0x34] sm:$0xf]
    %v2477 = vld [vmem:[%s3 + $0x38] sm:$0xf]
    %v2478 = vld [vmem:[%s3 + $0x3c] sm:$0xf]
    %v2479 = vld [vmem:[%s3 + $0x40] sm:$0xf]
    %v2480 = vld [vmem:[%s3 + $0x44] sm:$0xf]
    %v2481 = vld [vmem:[%s3 + $0x48] sm:$0xf]
    %v2482 = vld [vmem:[%s3 + $0x4c] sm:$0xf]
    %v2483 = vld [vmem:[%s3 + $0x50] sm:$0xf]
    %v2484 = vld [vmem:[%s3 + $0x54] sm:$0xf]
    %v2485 = vld [vmem:[%s3 + $0x58] sm:$0xf]
    %v2486 = vld [vmem:[%s3 + $0x5c] sm:$0xf]
    %v2487 = vld [vmem:[%s3 + $0x60] sm:$0xf]
    %v2488 = vld [vmem:[%s3 + $0x64] sm:$0xf]
    %v2489 = vld [vmem:[%s3 + $0x68] sm:$0xf]
    %v2490 = vld [vmem:[%s3 + $0x6c] sm:$0xf]
    %v2491 = vld [vmem:[%s3 + $0x70] sm:$0xf]
    %v2492 = vld [vmem:[%s3 + $0x74] sm:$0xf]
    %v2493 = vld [vmem:[%s3 + $0x78] sm:$0xf]
    %v2494 = vld [vmem:[%s3 + $0x7c] sm:$0xf]
    %v2495 = vld [vmem:[%s3 + $0x80] sm:$0xf]
    %v2496 = vld [vmem:[%s3 + $0x84] sm:$0xf]
    %v2497 = vld [vmem:[%s3 + $0x88] sm:$0xf]
    %v2498 = vld [vmem:[%s3 + $0x8c] sm:$0xf]
    %v2499 = vld [vmem:[%s3 + $0x90] sm:$0xf]
    %v2500 = vld [vmem:[%s3 + $0x94] sm:$0xf]
    %v2501 = vld [vmem:[%s3 + $0x98] sm:$0xf]
    %v2502 = vld [vmem:[%s3 + $0x9c] sm:$0xf]
    %v2503 = vld [vmem:[%s3 + $0xa0] sm:$0xf]
    %v2504 = vld [vmem:[%s3 + $0xa4] sm:$0xf]
    %v2505 = vld [vmem:[%s3 + $0xa8] sm:$0xf]
    %v2506 = vld [vmem:[%s3 + $0xac] sm:$0xf]
    %v2507 = vld [vmem:[%s3 + $0xb0] sm:$0xf]
    %v2508 = vld [vmem:[%s3 + $0xb4] sm:$0xf]
    %v2509 = vld [vmem:[%s3 + $0xb8] sm:$0xf]
    %v2510 = vld [vmem:[%s3 + $0xbc] sm:$0xf]
    %v2511 = vld [vmem:[%s3 + $0xc0] sm:$0xf]
    %v2512 = vld [vmem:[%s3 + $0xc4] sm:$0xf]
    %v2513 = vld [vmem:[%s3 + $0xc8] sm:$0xf]
    %v2514 = vld [vmem:[%s3 + $0xcc] sm:$0xf]
    %v2515 = vld [vmem:[%s3 + $0xd0] sm:$0xf]
    %v2516 = vld [vmem:[%s3 + $0xd4] sm:$0xf]
    %v2517 = vld [vmem:[%s3 + $0xd8] sm:$0xf]
    %v2518 = vld [vmem:[%s3 + $0xdc] sm:$0xf]
    %v2519 = vld [vmem:[%s3 + $0xe0] sm:$0xf]
    %v2520 = vld [vmem:[%s3 + $0xe4] sm:$0xf]
    %v2521 = vld [vmem:[%s3 + $0xe8] sm:$0xf]
    %v2522 = vld [vmem:[%s3 + $0xec] sm:$0xf]
    %v2523 = vld [vmem:[%s3 + $0xf0] sm:$0xf]
    %v2524 = vld [vmem:[%s3 + $0xf4] sm:$0xf]
    %v2525 = vld [vmem:[%s3 + $0xf8] sm:$0xf]
    %v2526 = vld [vmem:[%s3 + $0xfc] sm:$0xf]
    %v2527 = vld [vmem:[%s4] sm:$0x1]
    %v2529 = vlaneseq
    %v2530 = vshrl.u32 %v2529, 7
    %v2531 = vsub.s32 0, %v2530
    %v2532 = vrot.slane %v2527, %v2531
    %v2534 = vpack.i.b16 %v2446, %v2445
    %v2535 = vpack.i.b16 %v2448, %v2447
    %v2536 = vpack.i.b16 %v2450, %v2449
    %v2537 = vpack.i.b16 %v2452, %v2451
    %v2538 = vpack.i.b16 %v2454, %v2453
    %v2539 = vpack.i.b16 %v2456, %v2455
    %v2540 = vpack.i.b16 %v2458, %v2457
    %v2541 = vpack.i.b16 %v2460, %v2459
    %v2542 = vpack.i.b16 %v2462, %v2461
    %v2543 = vcombine.low %v2534, %v2535
    %v2544 = vcombine.low %v2536, %v2537
    %v2545 = vcombine.low %v2538, %v2539
    %v2546 = vcombine.low %v2540, %v2541
    %v2548 = vunpack.c.l.s4 1966171168
    %v2549 = vunpack.c.0.s8 %v2548
    %v2550 = vlaneseq
    %v2551 = vshrl.u32 %v2550, 7
    %v2552 = vsub.s32 %v2549, %v2551
    %v2553 = vrot.slane %v2543, %v2552
    %v2555 = vunpack.c.l.s4 1966171168
    %v2556 = vunpack.c.0.s8 %v2555
    %v2557 = vlaneseq
    %v2558 = vshrl.u32 %v2557, 7
    %v2559 = vsub.s32 %v2556, %v2558
    %v2560 = vrot.slane %v2544, %v2559
    %v2562 = vunpack.c.l.s4 1966171168
    %v2563 = vunpack.c.0.s8 %v2562
    %v2564 = vlaneseq
    %v2565 = vshrl.u32 %v2564, 7
    %v2566 = vsub.s32 %v2563, %v2565
    %v2567 = vrot.slane %v2545, %v2566
    %v2569 = vunpack.c.l.s4 1966171168
    %v2570 = vunpack.c.0.s8 %v2569
    %v2571 = vlaneseq
    %v2572 = vshrl.u32 %v2571, 7
    %v2573 = vsub.s32 %v2570, %v2572
    %v2574 = vrot.slane %v2546, %v2573
    %v2575 = vcombine.low %v2553, %v2560
    %v2576 = vcombine.high %v2553, %v2560
    %v2577 = vcombine.low %v2567, %v2574
    %v2578 = vcombine.high %v2567, %v2574
    %v2580 = vunpack.c.l.s4 1966171168
    %v2581 = vunpack.c.0.s8 %v2580
    %v2582 = vlaneseq
    %v2583 = vshrl.u32 %v2582, 7
    %v2584 = vsub.s32 %v2581, %v2583
    %v2585 = vrot.slane %v2575, %v2584
    %v2587 = vunpack.c.l.s4 1966171168
    %v2588 = vunpack.c.0.s8 %v2587
    %v2589 = vlaneseq
    %v2590 = vshrl.u32 %v2589, 7
    %v2591 = vsub.s32 %v2588, %v2590
    %v2592 = vrot.slane %v2576, %v2591
    %v2594 = vunpack.c.l.s4 1966171168
    %v2595 = vunpack.c.0.s8 %v2594
    %v2596 = vlaneseq
    %v2597 = vshrl.u32 %v2596, 7
    %v2598 = vsub.s32 %v2595, %v2597
    %v2599 = vrot.slane %v2577, %v2598
    %v2601 = vunpack.c.l.s4 1966171168
    %v2602 = vunpack.c.0.s8 %v2601
    %v2603 = vlaneseq
    %v2604 = vshrl.u32 %v2603, 7
    %v2605 = vsub.s32 %v2602, %v2604
    %v2606 = vrot.slane %v2578, %v2605
    %v2607 = vcombine.low %v2585, %v2599
    %v2608 = vcombine.high %v2585, %v2599
    %v2609 = vcombine.low %v2592, %v2606
    %v2610 = vcombine.high %v2592, %v2606
    %v2612 = vunpack.c.l.s4 1966171168
    %v2613 = vunpack.c.0.s8 %v2612
    %v2614 = vlaneseq
    %v2615 = vshrl.u32 %v2614, 7
    %v2616 = vsub.s32 %v2613, %v2615
    %v2617 = vrot.slane %v2542, %v2616
    %v2618 = vcombine.high %v2617, %v2617
    %v2620 = vunpack.c.l.s4 1966171168
    %v2621 = vunpack.c.0.s8 %v2620
    %v2622 = vlaneseq
    %v2623 = vshrl.u32 %v2622, 7
    %v2624 = vsub.s32 %v2621, %v2623
    %v2625 = vrot.slane %v2617, %v2624
    %v2627 = vunpack.c.l.s4 1966171168
    %v2628 = vunpack.c.0.s8 %v2627
    %v2629 = vlaneseq
    %v2630 = vshrl.u32 %v2629, 7
    %v2631 = vsub.s32 %v2628, %v2630
    %v2632 = vrot.slane %v2618, %v2631
    %v2633 = vcombine.high %v2625, %v2625
    %v2634 = vcombine.high %v2632, %v2632
    %v2707 = vunpack.c.l.b16 %v2463
    %v2708 = vunpack.c.l.b16 %v2464
    %v2709 = vunpack.c.l.b16 %v2465
    %v2710 = vunpack.c.l.b16 %v2466
    %v2711 = vunpack.c.l.b16 %v2467
    %v2712 = vunpack.c.l.b16 %v2468
    %v2713 = vunpack.c.l.b16 %v2469
    %v2714 = vunpack.c.l.b16 %v2470
    %v2715 = vunpack.c.l.b16 %v2471
    %v2716 = vunpack.c.l.b16 %v2472
    %v2717 = vunpack.c.l.b16 %v2473
    %v2718 = vunpack.c.l.b16 %v2474
    %v2719 = vunpack.c.l.b16 %v2475
    %v2720 = vunpack.c.l.b16 %v2476
    %v2721 = vunpack.c.l.b16 %v2477
    %v2722 = vunpack.c.l.b16 %v2478
    %v2723 = vunpack.c.l.b16 %v2479
    %v2724 = vunpack.c.l.b16 %v2480
    %v2725 = vunpack.c.l.b16 %v2481
    %v2726 = vunpack.c.l.b16 %v2482
    %v2727 = vunpack.c.l.b16 %v2483
    %v2728 = vunpack.c.l.b16 %v2484
    %v2729 = vunpack.c.l.b16 %v2485
    %v2730 = vunpack.c.l.b16 %v2486
    %v2731 = vunpack.c.l.b16 %v2487
    %v2732 = vunpack.c.l.b16 %v2488
    %v2733 = vunpack.c.l.b16 %v2489
    %v2734 = vunpack.c.l.b16 %v2490
    %v2735 = vunpack.c.l.b16 %v2491
    %v2736 = vunpack.c.l.b16 %v2492
    %v2737 = vunpack.c.l.b16 %v2493
    %v2738 = vunpack.c.l.b16 %v2494
    %v2739 = vunpack.c.l.b16 %v2495
    %v2740 = vunpack.c.l.b16 %v2496
    %v2741 = vunpack.c.l.b16 %v2497
    %v2742 = vunpack.c.l.b16 %v2498
    %v2743 = vunpack.c.l.b16 %v2499
    %v2744 = vunpack.c.l.b16 %v2500
    %v2745 = vunpack.c.l.b16 %v2501
    %v2746 = vunpack.c.l.b16 %v2502
    %v2747 = vunpack.c.l.b16 %v2503
    %v2748 = vunpack.c.l.b16 %v2504
    %v2749 = vunpack.c.l.b16 %v2505
    %v2750 = vunpack.c.l.b16 %v2506
    %v2751 = vunpack.c.l.b16 %v2507
    %v2752 = vunpack.c.l.b16 %v2508
    %v2753 = vunpack.c.l.b16 %v2509
    %v2754 = vunpack.c.l.b16 %v2510
    %v2755 = vunpack.c.l.b16 %v2511
    %v2756 = vunpack.c.l.b16 %v2512
    %v2757 = vunpack.c.l.b16 %v2513
    %v2758 = vunpack.c.l.b16 %v2514
    %v2759 = vunpack.c.l.b16 %v2515
    %v2760 = vunpack.c.l.b16 %v2516
    %v2761 = vunpack.c.l.b16 %v2517
    %v2762 = vunpack.c.l.b16 %v2518
    %v2763 = vunpack.c.l.b16 %v2519
    %v2764 = vunpack.c.l.b16 %v2520
    %v2765 = vunpack.c.l.b16 %v2521
    %v2766 = vunpack.c.l.b16 %v2522
    %v2767 = vunpack.c.l.b16 %v2523
    %v2768 = vunpack.c.l.b16 %v2524
    %v2769 = vunpack.c.l.b16 %v2525
    %v2770 = vunpack.c.l.b16 %v2526
    %v2771 = vpack.c.b16 %v2708, %v2707
    %v2772 = vpack.c.b16 %v2710, %v2709
    %v2773 = vpack.c.b16 %v2712, %v2711
    %v2774 = vpack.c.b16 %v2714, %v2713
    %v2775 = vpack.c.b16 %v2716, %v2715
    %v2776 = vpack.c.b16 %v2718, %v2717
    %v2777 = vpack.c.b16 %v2720, %v2719
    %v2778 = vpack.c.b16 %v2722, %v2721
    %v2779 = vpack.c.b16 %v2724, %v2723
    %v2780 = vpack.c.b16 %v2726, %v2725
    %v2781 = vpack.c.b16 %v2728, %v2727
    %v2782 = vpack.c.b16 %v2730, %v2729
    %v2783 = vpack.c.b16 %v2732, %v2731
    %v2784 = vpack.c.b16 %v2734, %v2733
    %v2785 = vpack.c.b16 %v2736, %v2735
    %v2786 = vpack.c.b16 %v2738, %v2737
    %v2787 = vpack.c.b16 %v2740, %v2739
    %v2788 = vpack.c.b16 %v2742, %v2741
    %v2789 = vpack.c.b16 %v2744, %v2743
    %v2790 = vpack.c.b16 %v2746, %v2745
    %v2791 = vpack.c.b16 %v2748, %v2747
    %v2792 = vpack.c.b16 %v2750, %v2749
    %v2793 = vpack.c.b16 %v2752, %v2751
    %v2794 = vpack.c.b16 %v2754, %v2753
    %v2795 = vpack.c.b16 %v2756, %v2755
    %v2796 = vpack.c.b16 %v2758, %v2757
    %v2797 = vpack.c.b16 %v2760, %v2759
    %v2798 = vpack.c.b16 %v2762, %v2761
    %v2799 = vpack.c.b16 %v2764, %v2763
    %v2800 = vpack.c.b16 %v2766, %v2765
    %v2801 = vpack.c.b16 %v2768, %v2767
    %v2802 = vpack.c.b16 %v2770, %v2769
    %2835 = vmatprep.subr.bf16.mxu0 0
    %2836 = vmatpush1.bf16.msra.mxu0 %v2778
    %2837 = vmatprep.subr.bf16.mxu0 0
    %2838 = vmatpush1.bf16.msra.mxu0 %v2777
    %2839 = vmatprep.subr.bf16.mxu0 0
    %2840 = vmatpush1.bf16.msra.mxu0 %v2776
    %2841 = vmatprep.subr.bf16.mxu0 0
    %2842 = vmatpush1.bf16.msra.mxu0 %v2775
    %2843 = vmatprep.subr.bf16.mxu0 0
    %2844 = vmatpush1.bf16.msra.mxu0 %v2774
    %2845 = vmatprep.subr.bf16.mxu0 0
    %2846 = vmatpush1.bf16.msra.mxu0 %v2773
    %2847 = vmatprep.subr.bf16.mxu0 0
    %2848 = vmatpush1.bf16.msra.mxu0 %v2772
    %2849 = vmatprep.subr.bf16.mxu0 0
    %2850 = vmatpush1.bf16.msra.mxu0 %v2771
    %2851 = vmatprep.subr.bf16.mxu0 0
    %2852 = vmatpush2.bf16.msra.mxu0 %v2786
    %2853 = vmatprep.subr.bf16.mxu0 0
    %2854 = vmatpush2.bf16.msra.mxu0 %v2785
    %2855 = vmatprep.subr.bf16.mxu0 0
    %2856 = vmatpush2.bf16.msra.mxu0 %v2784
    %2857 = vmatprep.subr.bf16.mxu0 0
    %2858 = vmatpush2.bf16.msra.mxu0 %v2783
    %2859 = vmatprep.subr.bf16.mxu0 0
    %2860 = vmatpush2.bf16.msra.mxu0 %v2782
    %2861 = vmatprep.subr.bf16.mxu0 0
    %2862 = vmatpush2.bf16.msra.mxu0 %v2781
    %2863 = vmatprep.subr.bf16.mxu0 0
    %2864 = vmatpush2.bf16.msra.mxu0 %v2780
    %2865 = vmatprep.subr.bf16.mxu0 0
    %2866 = vmatpush2.bf16.msra.mxu0 %v2779
    %2867 = vmatprep.mubr.bf16.mxu0 %v2609
    %2868 = vmatmul.mubr.bf16.gmra.mxu0 %v2607
    %v2869 = vpop.f32.mrf.mxu0
    %v2870 = vadd.f32 %v2532, %v2869
    %v2871 = vpop.f32.mrf.mxu0
    %v2872 = vpop.f32.mrf.mxu0
    %v2873 = vadd.f32 %v2532, %v2872
    %v2874 = vpop.f32.mrf.mxu0
    %2875 = vmatprep.mubr.bf16.mxu0 %v2632
    %2876 = vmatmul.mubr.bf16.gmra.mxu0 %v2625
    %v2877 = vpop.f32.mrf.mxu0
    %v2878 = vadd.f32 %v2532, %v2877
    %v2879 = vpop.f32.mrf.mxu0
    %v2880 = vpop.f32.mrf.mxu0
    %v2881 = vpop.f32.mrf.mxu0
    %2882 = vdwg.mxu0
    %2883 = vmatprep.subr.bf16.mxu0 0
    %2884 = vmatpush1.bf16.msra.mxu0 %v2794
    %2885 = vmatprep.subr.bf16.mxu0 0
    %2886 = vmatpush1.bf16.msra.mxu0 %v2793
    %2887 = vmatprep.subr.bf16.mxu0 0
    %2888 = vmatpush1.bf16.msra.mxu0 %v2792
    %2889 = vmatprep.subr.bf16.mxu0 0
    %2890 = vmatpush1.bf16.msra.mxu0 %v2791
    %2891 = vmatprep.subr.bf16.mxu0 0
    %2892 = vmatpush1.bf16.msra.mxu0 %v2790
    %2893 = vmatprep.subr.bf16.mxu0 0
    %2894 = vmatpush1.bf16.msra.mxu0 %v2789
    %2895 = vmatprep.subr.bf16.mxu0 0
    %2896 = vmatpush1.bf16.msra.mxu0 %v2788
    %2897 = vmatprep.subr.bf16.mxu0 0
    %2898 = vmatpush1.bf16.msra.mxu0 %v2787
    %2899 = vmatprep.subr.bf16.mxu0 0
    %2900 = vmatpush2.bf16.msra.mxu0 %v2802
    %2901 = vmatprep.subr.bf16.mxu0 0
    %2902 = vmatpush2.bf16.msra.mxu0 %v2801
    %2903 = vmatprep.subr.bf16.mxu0 0
    %2904 = vmatpush2.bf16.msra.mxu0 %v2800
    %2905 = vmatprep.subr.bf16.mxu0 0
    %2906 = vmatpush2.bf16.msra.mxu0 %v2799
    %2907 = vmatprep.subr.bf16.mxu0 0
    %2908 = vmatpush2.bf16.msra.mxu0 %v2798
    %2909 = vmatprep.subr.bf16.mxu0 0
    %2910 = vmatpush2.bf16.msra.mxu0 %v2797
    %2911 = vmatprep.subr.bf16.mxu0 0
    %2912 = vmatpush2.bf16.msra.mxu0 %v2796
    %2913 = vmatprep.subr.bf16.mxu0 0
    %2914 = vmatpush2.bf16.msra.mxu0 %v2795
    %2915 = vmatprep.mubr.bf16.mxu0 %v2610
    %2916 = vmatmul.mubr.bf16.gmra.mxu0 %v2608
    %v2917 = vpop.f32.mrf.mxu0
    %v2918 = vadd.f32 %v2870, %v2917
    %v2919 = vpop.f32.mrf.mxu0
    %v2920 = vpop.f32.mrf.mxu0
    %v2921 = vadd.f32 %v2873, %v2920
    %v2922 = vpop.f32.mrf.mxu0
    %2923 = vmatprep.mubr.bf16.mxu0 %v2634
    %2924 = vmatmul.mubr.bf16.gmra.mxu0 %v2633
    %v2925 = vpop.f32.mrf.mxu0
    %v2926 = vadd.f32 %v2878, %v2925
    %v2927 = vpop.f32.mrf.mxu0
    %v2928 = vpop.f32.mrf.mxu0
    %v2929 = vpop.f32.mrf.mxu0
    %2930 = vdwg.mxu0
    %v2931 = vmax.f32 %v2918, 0.0
    %v2932 = vmax.f32 %v2921, 0.0
    %v2933 = vmax.f32 %v2926, 0.0
    %v2934 = vpack.c.bf16 %v2932, %v2931
    %v2935 = vpack.c.bf16 %v2933, %v2933
    %v2938 = vcombine.high %v2934, %v2934
    %v2940 = vunpack.c.l.s4 1966171168
    %v2941 = vunpack.c.0.s8 %v2940
    %v2942 = vlaneseq
    %v2943 = vshrl.u32 %v2942, 7
    %v2944 = vsub.s32 %v2941, %v2943
    %v2945 = vrot.slane %v2934, %v2944
    %v2947 = vunpack.c.l.s4 1966171168
    %v2948 = vunpack.c.0.s8 %v2947
    %v2949 = vlaneseq
    %v2950 = vshrl.u32 %v2949, 7
    %v2951 = vsub.s32 %v2948, %v2950
    %v2952 = vrot.slane %v2938, %v2951
    %v2953 = vcombine.high %v2945, %v2945
    %v2954 = vcombine.high %v2952, %v2952
    %v2956 = vunpack.c.l.s4 1966171168
    %v2957 = vunpack.c.0.s8 %v2956
    %v2958 = vlaneseq
    %v2959 = vshrl.u32 %v2958, 7
    %v2960 = vsub.s32 %v2957, %v2959
    %v2961 = vrot.slane %v2945, %v2960
    %v2963 = vunpack.c.l.s4 1966171168
    %v2964 = vunpack.c.0.s8 %v2963
    %v2965 = vlaneseq
    %v2966 = vshrl.u32 %v2965, 7
    %v2967 = vsub.s32 %v2964, %v2966
    %v2968 = vrot.slane %v2952, %v2967
    %v2970 = vunpack.c.l.s4 1966171168
    %v2971 = vunpack.c.0.s8 %v2970
    %v2972 = vlaneseq
    %v2973 = vshrl.u32 %v2972, 7
    %v2974 = vsub.s32 %v2971, %v2973
    %v2975 = vrot.slane %v2953, %v2974
    %v2977 = vunpack.c.l.s4 1966171168
    %v2978 = vunpack.c.0.s8 %v2977
    %v2979 = vlaneseq
    %v2980 = vshrl.u32 %v2979, 7
    %v2981 = vsub.s32 %v2978, %v2980
    %v2982 = vrot.slane %v2954, %v2981
    %v2983 = vcombine.high %v2961, %v2961
    %v2984 = vcombine.high %v2968, %v2968
    %v2985 = vcombine.high %v2975, %v2975
    %v2986 = vcombine.high %v2982, %v2982
    %v2988 = vunpack.c.l.s4 1966171168
    %v2989 = vunpack.c.0.s8 %v2988
    %v2990 = vlaneseq
    %v2991 = vshrl.u32 %v2990, 7
    %v2992 = vsub.s32 %v2989, %v2991
    %v2993 = vrot.slane %v2935, %v2992
    %v2995 = vunpack.c.l.s4 1966171168
    %v2996 = vunpack.c.0.s8 %v2995
    %v2997 = vlaneseq
    %v2998 = vshrl.u32 %v2997, 7
    %v2999 = vsub.s32 %v2996, %v2998
    %v3000 = vrot.slane %v2993, %v2999
    %v3001 = vunpack.i.l.s16 %v2961
    %v3002 = vunpack.i.h.s16 %v2961
    %v3003 = vunpack.i.l.s16 %v2975
    %v3004 = vunpack.i.h.s16 %v2975
    %v3005 = vunpack.i.l.s16 %v2983
    %v3006 = vunpack.i.h.s16 %v2983
    %v3007 = vunpack.i.l.s16 %v2985
    %v3008 = vunpack.i.h.s16 %v2985
    %v3009 = vunpack.i.l.s16 %v2968
    %v3010 = vunpack.i.h.s16 %v2968
    %v3011 = vunpack.i.l.s16 %v2982
    %v3012 = vunpack.i.h.s16 %v2982
    %v3013 = vunpack.i.l.s16 %v2984
    %v3014 = vunpack.i.h.s16 %v2984
    %v3015 = vunpack.i.l.s16 %v2986
    %v3016 = vunpack.i.h.s16 %v2986
    %v3017 = vunpack.i.l.s16 %v3000
    %v3018 = vunpack.i.h.s16 %v3000
    %v3019 = vpack.i.b16 %v3001, %v3001
    %v3020 = vpack.i.b16 %v3010, %v3010
    %v3021 = vlaneseq
    %v3022 = vshrl.u32 %v3021, 7
    %v3023 = vsub.s32 0, %v3022
    %v3024 = vrot.slane %v3019, %v3023
    %v3025 = vlaneseq
    %v3026 = vshrl.u32 %v3025, 7
    %v3027 = vsub.s32 0, %v3026
    %v3028 = vrot.slane %v3020, %v3027
    %v3029 = vpack.i.b16 %v3002, %v3002
    %v3030 = vpack.i.b16 %v3011, %v3011
    %v3031 = vlaneseq
    %v3032 = vshrl.u32 %v3031, 7
    %v3033 = vsub.s32 0, %v3032
    %v3034 = vrot.slane %v3029, %v3033
    %v3035 = vlaneseq
    %v3036 = vshrl.u32 %v3035, 7
    %v3037 = vsub.s32 0, %v3036
    %v3038 = vrot.slane %v3030, %v3037
    %3039 = vrot.lane.b32.xlu0 %v3034, 64
    %v3040 = vpop.permute.xlu0 %3039
    %3041 = vrot.lane.b32.xlu0 %v3038, 64
    %v3042 = vpop.permute.xlu0 %3041
    %v3043 = vpack.i.b16 %v3003, %v3003
    %v3044 = vpack.i.b16 %v3012, %v3012
    %v3045 = vlaneseq
    %v3046 = vshrl.u32 %v3045, 7
    %v3047 = vsub.s32 0, %v3046
    %v3048 = vrot.slane %v3043, %v3047
    %v3049 = vlaneseq
    %v3050 = vshrl.u32 %v3049, 7
    %v3051 = vsub.s32 0, %v3050
    %v3052 = vrot.slane %v3044, %v3051
    %v3053 = vpack.i.b16 %v3004, %v3004
    %v3054 = vpack.i.b16 %v3013, %v3013
    %v3055 = vlaneseq
    %v3056 = vshrl.u32 %v3055, 7
    %v3057 = vsub.s32 0, %v3056
    %v3058 = vrot.slane %v3053, %v3057
    %v3059 = vlaneseq
    %v3060 = vshrl.u32 %v3059, 7
    %v3061 = vsub.s32 0, %v3060
    %v3062 = vrot.slane %v3054, %v3061
    %3063 = vrot.lane.b32.xlu0 %v3058, 64
    %v3064 = vpop.permute.xlu0 %3063
    %3065 = vrot.lane.b32.xlu0 %v3062, 64
    %v3066 = vpop.permute.xlu0 %3065
    %v3067 = vpack.i.b16 %v3005, %v3005
    %v3068 = vpack.i.b16 %v3014, %v3014
    %v3069 = vlaneseq
    %v3070 = vshrl.u32 %v3069, 7
    %v3071 = vsub.s32 0, %v3070
    %v3072 = vrot.slane %v3067, %v3071
    %v3073 = vlaneseq
    %v3074 = vshrl.u32 %v3073, 7
    %v3075 = vsub.s32 0, %v3074
    %v3076 = vrot.slane %v3068, %v3075
    %v3077 = vpack.i.b16 %v3006, %v3006
    %v3078 = vpack.i.b16 %v3015, %v3015
    %v3079 = vlaneseq
    %v3080 = vshrl.u32 %v3079, 7
    %v3081 = vsub.s32 0, %v3080
    %v3082 = vrot.slane %v3077, %v3081
    %v3083 = vlaneseq
    %v3084 = vshrl.u32 %v3083, 7
    %v3085 = vsub.s32 0, %v3084
    %v3086 = vrot.slane %v3078, %v3085
    %3087 = vrot.lane.b32.xlu0 %v3082, 64
    %v3088 = vpop.permute.xlu0 %3087
    %3089 = vrot.lane.b32.xlu0 %v3086, 64
    %v3090 = vpop.permute.xlu0 %3089
    %v3091 = vpack.i.b16 %v3007, %v3007
    %v3092 = vpack.i.b16 %v3016, %v3016
    %v3093 = vlaneseq
    %v3094 = vshrl.u32 %v3093, 7
    %v3095 = vsub.s32 0, %v3094
    %v3096 = vrot.slane %v3091, %v3095
    %v3097 = vlaneseq
    %v3098 = vshrl.u32 %v3097, 7
    %v3099 = vsub.s32 0, %v3098
    %v3100 = vrot.slane %v3092, %v3099
    %v3101 = vpack.i.b16 %v3008, %v3008
    %v3102 = vpack.i.b16 %v3017, %v3017
    %v3103 = vlaneseq
    %v3104 = vshrl.u32 %v3103, 7
    %v3105 = vsub.s32 0, %v3104
    %v3106 = vrot.slane %v3101, %v3105
    %v3107 = vlaneseq
    %v3108 = vshrl.u32 %v3107, 7
    %v3109 = vsub.s32 0, %v3108
    %v3110 = vrot.slane %v3102, %v3109
    %3111 = vrot.lane.b32.xlu0 %v3106, 64
    %v3112 = vpop.permute.xlu0 %3111
    %3113 = vrot.lane.b32.xlu0 %v3110, 64
    %v3114 = vpop.permute.xlu0 %3113
    %v3115 = vpack.i.b16 %v3009, %v3009
    %v3116 = vpack.i.b16 %v3018, %v3018
    %v3117 = vlaneseq
    %v3118 = vshrl.u32 %v3117, 7
    %v3119 = vsub.s32 0, %v3118
    %v3120 = vrot.slane %v3115, %v3119
    %v3121 = vlaneseq
    %v3122 = vshrl.u32 %v3121, 7
    %v3123 = vsub.s32 0, %v3122
    %v3124 = vrot.slane %v3116, %v3123
    %v3127 = vsel %vm2173, %v3024, %v3040
    %v3130 = vsel %vm2173, %v3028, %v3042
    %v3133 = vsel %vm2173, %v3048, %v3064
    %v3136 = vsel %vm2173, %v3052, %v3066
    %v3139 = vsel %vm2173, %v3072, %v3088
    %v3142 = vsel %vm2173, %v3076, %v3090
    %v3145 = vsel %vm2173, %v3096, %v3112
    %v3148 = vsel %vm2173, %v3100, %v3114
    %v3149 = vld [vmem:[%s5] sm:$0xf]
    %v3150 = vld [vmem:[%s5 + $0x4] sm:$0xf]
    %v3151 = vld [vmem:[%s5 + $0x8] sm:$0xf]
    %v3152 = vld [vmem:[%s5 + $0xc] sm:$0xf]
    %v3153 = vld [vmem:[%s5 + $0x10] sm:$0xf]
    %v3154 = vld [vmem:[%s5 + $0x14] sm:$0xf]
    %v3155 = vld [vmem:[%s5 + $0x18] sm:$0xf]
    %v3156 = vld [vmem:[%s5 + $0x1c] sm:$0xf]
    %v3157 = vld [vmem:[%s5 + $0x20] sm:$0xf]
    %v3158 = vld [vmem:[%s5 + $0x24] sm:$0xf]
    %v3159 = vld [vmem:[%s5 + $0x28] sm:$0xf]
    %v3160 = vld [vmem:[%s5 + $0x2c] sm:$0xf]
    %v3161 = vld [vmem:[%s5 + $0x30] sm:$0xf]
    %v3162 = vld [vmem:[%s5 + $0x34] sm:$0xf]
    %v3163 = vld [vmem:[%s5 + $0x38] sm:$0xf]
    %v3164 = vld [vmem:[%s5 + $0x3c] sm:$0xf]
    %v3165 = vld [vmem:[%s5 + $0x40] sm:$0xf]
    %v3166 = vld [vmem:[%s5 + $0x44] sm:$0xf]
    %v3167 = vld [vmem:[%s5 + $0x48] sm:$0xf]
    %v3168 = vld [vmem:[%s5 + $0x4c] sm:$0xf]
    %v3169 = vld [vmem:[%s5 + $0x50] sm:$0xf]
    %v3170 = vld [vmem:[%s5 + $0x54] sm:$0xf]
    %v3171 = vld [vmem:[%s5 + $0x58] sm:$0xf]
    %v3172 = vld [vmem:[%s5 + $0x5c] sm:$0xf]
    %v3173 = vld [vmem:[%s5 + $0x60] sm:$0xf]
    %v3174 = vld [vmem:[%s5 + $0x64] sm:$0xf]
    %v3175 = vld [vmem:[%s5 + $0x68] sm:$0xf]
    %v3176 = vld [vmem:[%s5 + $0x6c] sm:$0xf]
    %v3177 = vld [vmem:[%s5 + $0x70] sm:$0xf]
    %v3178 = vld [vmem:[%s5 + $0x74] sm:$0xf]
    %v3179 = vld [vmem:[%s5 + $0x78] sm:$0xf]
    %v3180 = vld [vmem:[%s5 + $0x7c] sm:$0xf]
    %v3181 = vld [vmem:[%s5 + $0x80] sm:$0xf]
    %v3182 = vld [vmem:[%s5 + $0x84] sm:$0xf]
    %v3183 = vld [vmem:[%s5 + $0x88] sm:$0xf]
    %v3184 = vld [vmem:[%s5 + $0x8c] sm:$0xf]
    %v3185 = vld [vmem:[%s5 + $0x90] sm:$0xf]
    %v3186 = vld [vmem:[%s5 + $0x94] sm:$0xf]
    %v3187 = vld [vmem:[%s5 + $0x98] sm:$0xf]
    %v3188 = vld [vmem:[%s5 + $0x9c] sm:$0xf]
    %v3189 = vld [vmem:[%s5 + $0xa0] sm:$0xf]
    %v3190 = vld [vmem:[%s5 + $0xa4] sm:$0xf]
    %v3191 = vld [vmem:[%s5 + $0xa8] sm:$0xf]
    %v3192 = vld [vmem:[%s5 + $0xac] sm:$0xf]
    %v3193 = vld [vmem:[%s5 + $0xb0] sm:$0xf]
    %v3194 = vld [vmem:[%s5 + $0xb4] sm:$0xf]
    %v3195 = vld [vmem:[%s5 + $0xb8] sm:$0xf]
    %v3196 = vld [vmem:[%s5 + $0xbc] sm:$0xf]
    %v3197 = vld [vmem:[%s5 + $0xc0] sm:$0xf]
    %v3198 = vld [vmem:[%s5 + $0xc4] sm:$0xf]
    %v3199 = vld [vmem:[%s5 + $0xc8] sm:$0xf]
    %v3200 = vld [vmem:[%s5 + $0xcc] sm:$0xf]
    %v3201 = vld [vmem:[%s5 + $0xd0] sm:$0xf]
    %v3202 = vld [vmem:[%s5 + $0xd4] sm:$0xf]
    %v3203 = vld [vmem:[%s5 + $0xd8] sm:$0xf]
    %v3204 = vld [vmem:[%s5 + $0xdc] sm:$0xf]
    %v3205 = vld [vmem:[%s5 + $0xe0] sm:$0xf]
    %v3206 = vld [vmem:[%s5 + $0xe4] sm:$0xf]
    %v3207 = vld [vmem:[%s5 + $0xe8] sm:$0xf]
    %v3208 = vld [vmem:[%s5 + $0xec] sm:$0xf]
    %v3209 = vld [vmem:[%s5 + $0xf0] sm:$0xf]
    %v3210 = vld [vmem:[%s5 + $0xf4] sm:$0xf]
    %v3211 = vld [vmem:[%s5 + $0xf8] sm:$0xf]
    %v3212 = vld [vmem:[%s5 + $0xfc] sm:$0xf]
    %v3213 = vld [vmem:[%s5 + $0x100] sm:$0xf]
    %v3214 = vld [vmem:[%s5 + $0x104] sm:$0xf]
    %v3215 = vld [vmem:[%s5 + $0x108] sm:$0xf]
    %v3216 = vld [vmem:[%s5 + $0x10c] sm:$0xf]
    %v3217 = vld [vmem:[%s5 + $0x110] sm:$0xf]
    %v3218 = vld [vmem:[%s5 + $0x114] sm:$0xf]
    %v3219 = vld [vmem:[%s5 + $0x118] sm:$0xf]
    %v3220 = vld [vmem:[%s5 + $0x11c] sm:$0xf]
    %v3221 = vld [vmem:[%s6] sm:$0x1]
    %v3223 = vlaneseq
    %v3224 = vshrl.u32 %v3223, 7
    %v3225 = vsub.s32 0, %v3224
    %v3226 = vrot.slane %v3221, %v3225
    %v3236 = vunpack.c.l.b16 %v3127
    %v3237 = vunpack.c.l.b16 %v3133
    %v3238 = vunpack.c.l.b16 %v3139
    %v3239 = vunpack.c.l.b16 %v3145
    %v3240 = vunpack.c.l.b16 %v3120
    %v3241 = vunpack.c.l.b16 %v3130
    %v3242 = vunpack.c.l.b16 %v3136
    %v3243 = vunpack.c.l.b16 %v3142
    %v3244 = vunpack.c.l.b16 %v3148
    %v3245 = vunpack.c.l.b16 %v3124
    %v3246 = vrot.slane %v3241, 7
    %v3247 = vsel %vm1063, %v3246, %v3236
    %v3248 = vrot.slane %v3242, 7
    %v3249 = vsel %vm1063, %v3248, %v3237
    %v3250 = vrot.slane %v3243, 7
    %v3251 = vsel %vm1063, %v3250, %v3238
    %v3252 = vrot.slane %v3244, 7
    %v3253 = vsel %vm1063, %v3252, %v3239
    %v3254 = vrot.slane %v3245, 7
    %v3255 = vsel %vm1063, %v3254, %v3240
    %v3256 = vpack.c.b16 %v3247, %v3247
    %v3257 = vpack.c.b16 %v3249, %v3249
    %v3258 = vpack.c.b16 %v3251, %v3251
    %v3259 = vpack.c.b16 %v3253, %v3253
    %v3260 = vpack.c.b16 %v3255, %v3255
    %v3337 = vunpack.c.l.b16 %v3149
    %v3338 = vunpack.c.l.b16 %v3150
    %v3339 = vunpack.c.l.b16 %v3151
    %v3340 = vunpack.c.l.b16 %v3152
    %v3341 = vunpack.c.l.b16 %v3153
    %v3342 = vunpack.c.l.b16 %v3154
    %v3343 = vunpack.c.l.b16 %v3155
    %v3344 = vunpack.c.l.b16 %v3156
    %v3345 = vunpack.c.l.b16 %v3157
    %v3346 = vunpack.c.l.b16 %v3158
    %v3347 = vunpack.c.l.b16 %v3159
    %v3348 = vunpack.c.l.b16 %v3160
    %v3349 = vunpack.c.l.b16 %v3161
    %v3350 = vunpack.c.l.b16 %v3162
    %v3351 = vunpack.c.l.b16 %v3163
    %v3352 = vunpack.c.l.b16 %v3164
    %v3353 = vunpack.c.l.b16 %v3165
    %v3354 = vunpack.c.l.b16 %v3166
    %v3355 = vunpack.c.l.b16 %v3167
    %v3356 = vunpack.c.l.b16 %v3168
    %v3357 = vunpack.c.l.b16 %v3169
    %v3358 = vunpack.c.l.b16 %v3170
    %v3359 = vunpack.c.l.b16 %v3171
    %v3360 = vunpack.c.l.b16 %v3172
    %v3361 = vunpack.c.l.b16 %v3173
    %v3362 = vunpack.c.l.b16 %v3174
    %v3363 = vunpack.c.l.b16 %v3175
    %v3364 = vunpack.c.l.b16 %v3176
    %v3365 = vunpack.c.l.b16 %v3177
    %v3366 = vunpack.c.l.b16 %v3178
    %v3367 = vunpack.c.l.b16 %v3179
    %v3368 = vunpack.c.l.b16 %v3180
    %v3369 = vunpack.c.l.b16 %v3181
    %v3370 = vunpack.c.l.b16 %v3182
    %v3371 = vunpack.c.l.b16 %v3183
    %v3372 = vunpack.c.l.b16 %v3184
    %v3373 = vunpack.c.l.b16 %v3185
    %v3374 = vunpack.c.l.b16 %v3186
    %v3375 = vunpack.c.l.b16 %v3187
    %v3376 = vunpack.c.l.b16 %v3188
    %v3377 = vunpack.c.l.b16 %v3189
    %v3378 = vunpack.c.l.b16 %v3190
    %v3379 = vunpack.c.l.b16 %v3191
    %v3380 = vunpack.c.l.b16 %v3192
    %v3381 = vunpack.c.l.b16 %v3193
    %v3382 = vunpack.c.l.b16 %v3194
    %v3383 = vunpack.c.l.b16 %v3195
    %v3384 = vunpack.c.l.b16 %v3196
    %v3385 = vunpack.c.l.b16 %v3197
    %v3386 = vunpack.c.l.b16 %v3198
    %v3387 = vunpack.c.l.b16 %v3199
    %v3388 = vunpack.c.l.b16 %v3200
    %v3389 = vunpack.c.l.b16 %v3201
    %v3390 = vunpack.c.l.b16 %v3202
    %v3391 = vunpack.c.l.b16 %v3203
    %v3392 = vunpack.c.l.b16 %v3204
    %v3393 = vunpack.c.l.b16 %v3205
    %v3394 = vunpack.c.l.b16 %v3206
    %v3395 = vunpack.c.l.b16 %v3207
    %v3396 = vunpack.c.l.b16 %v3208
    %v3397 = vunpack.c.l.b16 %v3209
    %v3398 = vunpack.c.l.b16 %v3210
    %v3399 = vunpack.c.l.b16 %v3211
    %v3400 = vunpack.c.l.b16 %v3212
    %v3401 = vunpack.c.l.b16 %v3213
    %v3402 = vunpack.c.l.b16 %v3214
    %v3403 = vunpack.c.l.b16 %v3215
    %v3404 = vunpack.c.l.b16 %v3216
    %v3405 = vunpack.c.l.b16 %v3217
    %v3406 = vunpack.c.l.b16 %v3218
    %v3407 = vunpack.c.l.b16 %v3219
    %v3408 = vunpack.c.l.b16 %v3220
    %v3409 = vpack.c.b16 %v3338, %v3337
    %v3410 = vpack.c.b16 %v3340, %v3339
    %v3411 = vpack.c.b16 %v3342, %v3341
    %v3412 = vpack.c.b16 %v3344, %v3343
    %v3413 = vpack.c.b16 %v3346, %v3345
    %v3414 = vpack.c.b16 %v3348, %v3347
    %v3415 = vpack.c.b16 %v3350, %v3349
    %v3416 = vpack.c.b16 %v3352, %v3351
    %v3417 = vpack.c.b16 %v3354, %v3353
    %v3418 = vpack.c.b16 %v3356, %v3355
    %v3419 = vpack.c.b16 %v3358, %v3357
    %v3420 = vpack.c.b16 %v3360, %v3359
    %v3421 = vpack.c.b16 %v3362, %v3361
    %v3422 = vpack.c.b16 %v3364, %v3363
    %v3423 = vpack.c.b16 %v3366, %v3365
    %v3424 = vpack.c.b16 %v3368, %v3367
    %v3425 = vpack.c.b16 %v3370, %v3369
    %v3426 = vpack.c.b16 %v3372, %v3371
    %v3427 = vpack.c.b16 %v3374, %v3373
    %v3428 = vpack.c.b16 %v3376, %v3375
    %v3429 = vpack.c.b16 %v3378, %v3377
    %v3430 = vpack.c.b16 %v3380, %v3379
    %v3431 = vpack.c.b16 %v3382, %v3381
    %v3432 = vpack.c.b16 %v3384, %v3383
    %v3433 = vpack.c.b16 %v3386, %v3385
    %v3434 = vpack.c.b16 %v3388, %v3387
    %v3435 = vpack.c.b16 %v3390, %v3389
    %v3436 = vpack.c.b16 %v3392, %v3391
    %v3437 = vpack.c.b16 %v3394, %v3393
    %v3438 = vpack.c.b16 %v3396, %v3395
    %v3439 = vpack.c.b16 %v3398, %v3397
    %v3440 = vpack.c.b16 %v3400, %v3399
    %v3441 = vpack.c.b16 %v3402, %v3401
    %v3442 = vpack.c.b16 %v3404, %v3403
    %v3443 = vpack.c.b16 %v3406, %v3405
    %v3444 = vpack.c.b16 %v3408, %v3407
    %v3482 = vsel %vm2173, %v3260, 0
    %3484 = vmatprep.subr.bf16.mxu0 0
    %3485 = vmatpush1.bf16.msra.mxu0 %v3416
    %3486 = vmatprep.subr.bf16.mxu0 0
    %3487 = vmatpush1.bf16.msra.mxu0 %v3415
    %3488 = vmatprep.subr.bf16.mxu0 0
    %3489 = vmatpush1.bf16.msra.mxu0 %v3414
    %3490 = vmatprep.subr.bf16.mxu0 0
    %3491 = vmatpush1.bf16.msra.mxu0 %v3413
    %3492 = vmatprep.subr.bf16.mxu0 0
    %3493 = vmatpush1.bf16.msra.mxu0 %v3412
    %3494 = vmatprep.subr.bf16.mxu0 0
    %3495 = vmatpush1.bf16.msra.mxu0 %v3411
    %3496 = vmatprep.subr.bf16.mxu0 0
    %3497 = vmatpush1.bf16.msra.mxu0 %v3410
    %3498 = vmatprep.subr.bf16.mxu0 0
    %3499 = vmatpush1.bf16.msra.mxu0 %v3409
    %3500 = vmatprep.subr.bf16.mxu0 0
    %3501 = vmatpush2.bf16.msra.mxu0 %v3424
    %3502 = vmatprep.subr.bf16.mxu0 0
    %3503 = vmatpush2.bf16.msra.mxu0 %v3423
    %3504 = vmatprep.subr.bf16.mxu0 0
    %3505 = vmatpush2.bf16.msra.mxu0 %v3422
    %3506 = vmatprep.subr.bf16.mxu0 0
    %3507 = vmatpush2.bf16.msra.mxu0 %v3421
    %3508 = vmatprep.subr.bf16.mxu0 0
    %3509 = vmatpush2.bf16.msra.mxu0 %v3420
    %3510 = vmatprep.subr.bf16.mxu0 0
    %3511 = vmatpush2.bf16.msra.mxu0 %v3419
    %3512 = vmatprep.subr.bf16.mxu0 0
    %3513 = vmatpush2.bf16.msra.mxu0 %v3418
    %3514 = vmatprep.subr.bf16.mxu0 0
    %3515 = vmatpush2.bf16.msra.mxu0 %v3417
    %3516 = vmatprep.mubr.bf16.mxu0 %v3257
    %3517 = vmatmul.mubr.bf16.gmra.mxu0 %v3256
    %v3518 = vpop.f32.mrf.mxu0
    %v3519 = vadd.f32 %v3226, %v3518
    %v3520 = vpop.f32.mrf.mxu0
    %v3521 = vpop.f32.mrf.mxu0
    %v3522 = vpop.f32.mrf.mxu0
    %3523 = vdwg.mxu0
    %3524 = vmatprep.subr.bf16.mxu0 0
    %3525 = vmatpush1.bf16.msra.mxu0 %v3432
    %3526 = vmatprep.subr.bf16.mxu0 0
    %3527 = vmatpush1.bf16.msra.mxu0 %v3431
    %3528 = vmatprep.subr.bf16.mxu0 0
    %3529 = vmatpush1.bf16.msra.mxu0 %v3430
    %3530 = vmatprep.subr.bf16.mxu0 0
    %3531 = vmatpush1.bf16.msra.mxu0 %v3429
    %3532 = vmatprep.subr.bf16.mxu0 0
    %3533 = vmatpush1.bf16.msra.mxu0 %v3428
    %3534 = vmatprep.subr.bf16.mxu0 0
    %3535 = vmatpush1.bf16.msra.mxu0 %v3427
    %3536 = vmatprep.subr.bf16.mxu0 0
    %3537 = vmatpush1.bf16.msra.mxu0 %v3426
    %3538 = vmatprep.subr.bf16.mxu0 0
    %3539 = vmatpush1.bf16.msra.mxu0 %v3425
    %3540 = vmatprep.subr.bf16.mxu0 0
    %3541 = vmatpush2.bf16.msra.mxu0 %v3440
    %3542 = vmatprep.subr.bf16.mxu0 0
    %3543 = vmatpush2.bf16.msra.mxu0 %v3439
    %3544 = vmatprep.subr.bf16.mxu0 0
    %3545 = vmatpush2.bf16.msra.mxu0 %v3438
    %3546 = vmatprep.subr.bf16.mxu0 0
    %3547 = vmatpush2.bf16.msra.mxu0 %v3437
    %3548 = vmatprep.subr.bf16.mxu0 0
    %3549 = vmatpush2.bf16.msra.mxu0 %v3436
    %3550 = vmatprep.subr.bf16.mxu0 0
    %3551 = vmatpush2.bf16.msra.mxu0 %v3435
    %3552 = vmatprep.subr.bf16.mxu0 0
    %3553 = vmatpush2.bf16.msra.mxu0 %v3434
    %3554 = vmatprep.subr.bf16.mxu0 0
    %3555 = vmatpush2.bf16.msra.mxu0 %v3433
    %3556 = vmatprep.mubr.bf16.mxu0 %v3259
    %3557 = vmatmul.mubr.bf16.gmra.mxu0 %v3258
    %v3558 = vpop.f32.mrf.mxu0
    %v3559 = vadd.f32 %v3519, %v3558
    %v3560 = vpop.f32.mrf.mxu0
    %v3561 = vpop.f32.mrf.mxu0
    %v3562 = vpop.f32.mrf.mxu0
    %3563 = vdwg.mxu0
    %3564 = vmatprep.subr.bf16.mxu0 0
    %3565 = vmatpush1.bf16.msra.mxu0 0
    %3566 = vmatprep.subr.bf16.mxu0 0
    %3567 = vmatpush1.bf16.msra.mxu0 0
    %3568 = vmatprep.subr.bf16.mxu0 0
    %3569 = vmatpush1.bf16.msra.mxu0 0
    %3570 = vmatprep.subr.bf16.mxu0 0
    %3571 = vmatpush1.bf16.msra.mxu0 0
    %3572 = vmatprep.subr.bf16.mxu0 0
    %3573 = vmatpush1.bf16.msra.mxu0 %v3444
    %3574 = vmatprep.subr.bf16.mxu0 0
    %3575 = vmatpush1.bf16.msra.mxu0 %v3443
    %3576 = vmatprep.subr.bf16.mxu0 0
    %3577 = vmatpush1.bf16.msra.mxu0 %v3442
    %3578 = vmatprep.subr.bf16.mxu0 0
    %3579 = vmatpush1.bf16.msra.mxu0 %v3441
    %3580 = vmatprep.subr.bf16.mxu0 0
    %3581 = vmatpush2.bf16.msra.mxu0 0
    %3582 = vmatprep.subr.bf16.mxu0 0
    %3583 = vmatpush2.bf16.msra.mxu0 0
    %3584 = vmatprep.subr.bf16.mxu0 0
    %3585 = vmatpush2.bf16.msra.mxu0 0
    %3586 = vmatprep.subr.bf16.mxu0 0
    %3587 = vmatpush2.bf16.msra.mxu0 0
    %3588 = vmatprep.subr.bf16.mxu0 0
    %3589 = vmatpush2.bf16.msra.mxu0 0
    %3590 = vmatprep.subr.bf16.mxu0 0
    %3591 = vmatpush2.bf16.msra.mxu0 0
    %3592 = vmatprep.subr.bf16.mxu0 0
    %3593 = vmatpush2.bf16.msra.mxu0 0
    %3594 = vmatprep.subr.bf16.mxu0 0
    %3595 = vmatpush2.bf16.msra.mxu0 0
    %3596 = vmatprep.mubr.bf16.mxu0 0
    %3597 = vmatmul.mubr.bf16.gmra.mxu0 %v3482
    %v3598 = vpop.f32.mrf.mxu0
    %v3599 = vadd.f32 %v3559, %v3598
    %v3600 = vpop.f32.mrf.mxu0
    %v3601 = vpop.f32.mrf.mxu0
    %v3602 = vpop.f32.mrf.mxu0
    %3603 = vdwg.mxu0
    %v3604 = vmax.f32 %v3599, 0.0
    %v3605 = vpack.c.bf16 %v3604, %v3604
    %v3606 = vld [vmem:[%s7] sm:$0xff]
    %v3607 = vld [vmem:[%s7 + $0x8] sm:$0xff]
    %v3608 = vld [vmem:[%s7 + $0x10] sm:$0xff]
    %v3609 = vld [vmem:[%s7 + $0x18] sm:$0xff]
    %v3610 = vld [vmem:[%s7 + $0x20] sm:$0xff]
    %v3611 = vld [vmem:[%s7 + $0x28] sm:$0xff]
    %v3612 = vld [vmem:[%s7 + $0x30] sm:$0xff]
    %v3613 = vld [vmem:[%s7 + $0x38] sm:$0xff]
    %v3614 = vld [vmem:[%s7 + $0x40] sm:$0xff]
    %v3615 = vld [vmem:[%s7 + $0x48] sm:$0xff]
    %v3616 = vld [vmem:[%s7 + $0x50] sm:$0xff]
    %v3617 = vld [vmem:[%s7 + $0x58] sm:$0xff]
    %v3618 = vld [vmem:[%s7 + $0x60] sm:$0xff]
    %v3619 = vld [vmem:[%s7 + $0x68] sm:$0xff]
    %v3620 = vld [vmem:[%s7 + $0x70] sm:$0xff]
    %v3621 = vld [vmem:[%s7 + $0x78] sm:$0xff]
    %v3622 = vld [vmem:[%s8] sm:$0xf]
    %v3624 = vlaneseq
    %v3625 = vshrl.u32 %v3624, 7
    %v3626 = vsub.s32 0, %v3625
    %v3627 = vrot.slane %v3622, %v3626
    %v3628 = vlaneseq
    %v3629 = vshrl.u32 %v3628, 7
    %v3630 = vsub.s32 1, %v3629
    %v3631 = vrot.slane %v3622, %v3630
    %v3632 = vlaneseq
    %v3633 = vshrl.u32 %v3632, 7
    %v3634 = vsub.s32 2, %v3633
    %v3635 = vrot.slane %v3622, %v3634
    %v3636 = vlaneseq
    %v3637 = vshrl.u32 %v3636, 7
    %v3638 = vsub.s32 3, %v3637
    %v3639 = vrot.slane %v3622, %v3638
    %v3660 = vunpack.c.l.b16 %v3606
    %v3661 = vunpack.c.h.b16 %v3606
    %v3662 = vunpack.c.l.b16 %v3607
    %v3663 = vunpack.c.h.b16 %v3607
    %v3664 = vunpack.c.l.b16 %v3608
    %v3665 = vunpack.c.h.b16 %v3608
    %v3666 = vunpack.c.l.b16 %v3609
    %v3667 = vunpack.c.h.b16 %v3609
    %v3668 = vunpack.c.l.b16 %v3610
    %v3669 = vunpack.c.h.b16 %v3610
    %v3670 = vunpack.c.l.b16 %v3611
    %v3671 = vunpack.c.h.b16 %v3611
    %v3672 = vunpack.c.l.b16 %v3612
    %v3673 = vunpack.c.h.b16 %v3612
    %v3674 = vunpack.c.l.b16 %v3613
    %v3675 = vunpack.c.h.b16 %v3613
    %v3676 = vunpack.c.l.b16 %v3614
    %v3677 = vunpack.c.h.b16 %v3614
    %v3678 = vunpack.c.l.b16 %v3615
    %v3679 = vunpack.c.h.b16 %v3615
    %v3680 = vunpack.c.l.b16 %v3616
    %v3681 = vunpack.c.h.b16 %v3616
    %v3682 = vunpack.c.l.b16 %v3617
    %v3683 = vunpack.c.h.b16 %v3617
    %v3684 = vunpack.c.l.b16 %v3618
    %v3685 = vunpack.c.h.b16 %v3618
    %v3686 = vunpack.c.l.b16 %v3619
    %v3687 = vunpack.c.h.b16 %v3619
    %v3688 = vunpack.c.l.b16 %v3620
    %v3689 = vunpack.c.h.b16 %v3620
    %v3690 = vunpack.c.l.b16 %v3621
    %v3691 = vunpack.c.h.b16 %v3621
    %v3692 = vpack.c.b16 %v3664, %v3660
    %v3693 = vpack.c.b16 %v3665, %v3661
    %v3694 = vpack.c.b16 %v3666, %v3662
    %v3695 = vpack.c.b16 %v3667, %v3663
    %v3696 = vpack.c.b16 %v3672, %v3668
    %v3697 = vpack.c.b16 %v3673, %v3669
    %v3698 = vpack.c.b16 %v3674, %v3670
    %v3699 = vpack.c.b16 %v3675, %v3671
    %v3700 = vpack.c.b16 %v3680, %v3676
    %v3701 = vpack.c.b16 %v3681, %v3677
    %v3702 = vpack.c.b16 %v3682, %v3678
    %v3703 = vpack.c.b16 %v3683, %v3679
    %v3704 = vpack.c.b16 %v3688, %v3684
    %v3705 = vpack.c.b16 %v3689, %v3685
    %v3706 = vpack.c.b16 %v3690, %v3686
    %v3707 = vpack.c.b16 %v3691, %v3687
    %v3725 = vsel %vm2173, %v3605, 0
    %3727 = vmatprep.subr.bf16.mxu0 0
    %3728 = vmatpush1.bf16.msra.mxu0 0
    %3729 = vmatprep.subr.bf16.mxu0 0
    %3730 = vmatpush1.bf16.msra.mxu0 0
    %3731 = vmatprep.subr.bf16.mxu0 0
    %3732 = vmatpush1.bf16.msra.mxu0 0
    %3733 = vmatprep.subr.bf16.mxu0 0
    %3734 = vmatpush1.bf16.msra.mxu0 0
    %3735 = vmatprep.subr.bf16.mxu0 %v3705
    %3736 = vmatpush1.bf16.msra.mxu0 %v3704
    %3737 = vmatprep.subr.bf16.mxu0 %v3701
    %3738 = vmatpush1.bf16.msra.mxu0 %v3700
    %3739 = vmatprep.subr.bf16.mxu0 %v3697
    %3740 = vmatpush1.bf16.msra.mxu0 %v3696
    %3741 = vmatprep.subr.bf16.mxu0 %v3693
    %3742 = vmatpush1.bf16.msra.mxu0 %v3692
    %3743 = vmatprep.subr.bf16.mxu0 0
    %3744 = vmatpush2.bf16.msra.mxu0 0
    %3745 = vmatprep.subr.bf16.mxu0 0
    %3746 = vmatpush2.bf16.msra.mxu0 0
    %3747 = vmatprep.subr.bf16.mxu0 0
    %3748 = vmatpush2.bf16.msra.mxu0 0
    %3749 = vmatprep.subr.bf16.mxu0 0
    %3750 = vmatpush2.bf16.msra.mxu0 0
    %3751 = vmatprep.subr.bf16.mxu0 0
    %3752 = vmatpush2.bf16.msra.mxu0 0
    %3753 = vmatprep.subr.bf16.mxu0 0
    %3754 = vmatpush2.bf16.msra.mxu0 0
    %3755 = vmatprep.subr.bf16.mxu0 0
    %3756 = vmatpush2.bf16.msra.mxu0 0
    %3757 = vmatprep.subr.bf16.mxu0 0
    %3758 = vmatpush2.bf16.msra.mxu0 0
    %3759 = vmatprep.mubr.bf16.mxu0 0
    %3760 = vmatmul.mubr.bf16.gmra.mxu0 %v3725
    %v3761 = vpop.f32.mrf.mxu0
    %v3762 = vadd.f32 %v3627, %v3761
    %v3763 = vpop.f32.mrf.mxu0
    %v3764 = vadd.f32 %v3631, %v3763
    %v3765 = vpop.f32.mrf.mxu0
    %v3766 = vpop.f32.mrf.mxu0
    %3767 = vdwg.mxu0
    %3768 = vmatprep.subr.bf16.mxu0 0
    %3769 = vmatpush1.bf16.msra.mxu0 0
    %3770 = vmatprep.subr.bf16.mxu0 0
    %3771 = vmatpush1.bf16.msra.mxu0 0
    %3772 = vmatprep.subr.bf16.mxu0 0
    %3773 = vmatpush1.bf16.msra.mxu0 0
    %3774 = vmatprep.subr.bf16.mxu0 0
    %3775 = vmatpush1.bf16.msra.mxu0 0
    %3776 = vmatprep.subr.bf16.mxu0 %v3707
    %3777 = vmatpush1.bf16.msra.mxu0 %v3706
    %3778 = vmatprep.subr.bf16.mxu0 %v3703
    %3779 = vmatpush1.bf16.msra.mxu0 %v3702
    %3780 = vmatprep.subr.bf16.mxu0 %v3699
    %3781 = vmatpush1.bf16.msra.mxu0 %v3698
    %3782 = vmatprep.subr.bf16.mxu0 %v3695
    %3783 = vmatpush1.bf16.msra.mxu0 %v3694
    %3784 = vmatprep.subr.bf16.mxu0 0
    %3785 = vmatpush2.bf16.msra.mxu0 0
    %3786 = vmatprep.subr.bf16.mxu0 0
    %3787 = vmatpush2.bf16.msra.mxu0 0
    %3788 = vmatprep.subr.bf16.mxu0 0
    %3789 = vmatpush2.bf16.msra.mxu0 0
    %3790 = vmatprep.subr.bf16.mxu0 0
    %3791 = vmatpush2.bf16.msra.mxu0 0
    %3792 = vmatprep.subr.bf16.mxu0 0
    %3793 = vmatpush2.bf16.msra.mxu0 0
    %3794 = vmatprep.subr.bf16.mxu0 0
    %3795 = vmatpush2.bf16.msra.mxu0 0
    %3796 = vmatprep.subr.bf16.mxu0 0
    %3797 = vmatpush2.bf16.msra.mxu0 0
    %3798 = vmatprep.subr.bf16.mxu0 0
    %3799 = vmatpush2.bf16.msra.mxu0 0
    %3800 = vmatprep.mubr.bf16.mxu0 0
    %3801 = vmatmul.mubr.bf16.gmra.mxu0 %v3725
    %v3802 = vpop.f32.mrf.mxu0
    %v3803 = vadd.f32 %v3635, %v3802
    %v3804 = vpop.f32.mrf.mxu0
    %v3805 = vadd.f32 %v3639, %v3804
    %v3806 = vpop.f32.mrf.mxu0
    %v3807 = vpop.f32.mrf.mxu0
    %3808 = vdwg.mxu0
    %v3809 = vmax.f32 %v3762, 0.0
    %v3810 = vmax.f32 %v3764, 0.0
    %v3811 = vmax.f32 %v3803, 0.0
    %v3812 = vmax.f32 %v3805, 0.0
    %v3813 = vpack.c.bf16 %v3809, %v3809
    %v3814 = vpack.c.bf16 %v3810, %v3810
    %v3815 = vpack.c.bf16 %v3811, %v3811
    %v3816 = vpack.c.bf16 %v3812, %v3812
    %v3817 = vld [vmem:[%s9] sm:$0xf]
    %v3818 = vld [vmem:[%s9 + $0x4] sm:$0xf]
    %v3819 = vld [vmem:[%s9 + $0x8] sm:$0xf]
    %v3820 = vld [vmem:[%s9 + $0xc] sm:$0xf]
    %v3821 = vld [vmem:[%s9 + $0x10] sm:$0xf]
    %v3822 = vld [vmem:[%s9 + $0x14] sm:$0xf]
    %v3823 = vld [vmem:[%s9 + $0x18] sm:$0xf]
    %v3824 = vld [vmem:[%s9 + $0x1c] sm:$0xf]
    %v3825 = vld [vmem:[%s9 + $0x20] sm:$0xf]
    %v3826 = vld [vmem:[%s9 + $0x24] sm:$0xf]
    %v3827 = vld [vmem:[%s9 + $0x28] sm:$0xf]
    %v3828 = vld [vmem:[%s9 + $0x2c] sm:$0xf]
    %v3829 = vld [vmem:[%s9 + $0x30] sm:$0xf]
    %v3830 = vld [vmem:[%s9 + $0x34] sm:$0xf]
    %v3831 = vld [vmem:[%s9 + $0x38] sm:$0xf]
    %v3832 = vld [vmem:[%s9 + $0x3c] sm:$0xf]
    %v3833 = vld [vmem:[%s9 + $0x40] sm:$0xf]
    %v3834 = vld [vmem:[%s9 + $0x44] sm:$0xf]
    %v3835 = vld [vmem:[%s9 + $0x48] sm:$0xf]
    %v3836 = vld [vmem:[%s9 + $0x4c] sm:$0xf]
    %v3837 = vld [vmem:[%s9 + $0x50] sm:$0xf]
    %v3838 = vld [vmem:[%s9 + $0x54] sm:$0xf]
    %v3839 = vld [vmem:[%s9 + $0x58] sm:$0xf]
    %v3840 = vld [vmem:[%s9 + $0x5c] sm:$0xf]
    %v3841 = vld [vmem:[%s9 + $0x60] sm:$0xf]
    %v3842 = vld [vmem:[%s9 + $0x64] sm:$0xf]
    %v3843 = vld [vmem:[%s9 + $0x68] sm:$0xf]
    %v3844 = vld [vmem:[%s9 + $0x6c] sm:$0xf]
    %v3845 = vld [vmem:[%s9 + $0x70] sm:$0xf]
    %v3846 = vld [vmem:[%s9 + $0x74] sm:$0xf]
    %v3847 = vld [vmem:[%s9 + $0x78] sm:$0xf]
    %v3848 = vld [vmem:[%s9 + $0x7c] sm:$0xf]
    %v3849 = vld [vmem:[%s9 + $0x80] sm:$0xf]
    %v3850 = vld [vmem:[%s9 + $0x84] sm:$0xf]
    %v3851 = vld [vmem:[%s9 + $0x88] sm:$0xf]
    %v3852 = vld [vmem:[%s9 + $0x8c] sm:$0xf]
    %v3853 = vld [vmem:[%s9 + $0x90] sm:$0xf]
    %v3854 = vld [vmem:[%s9 + $0x94] sm:$0xf]
    %v3855 = vld [vmem:[%s9 + $0x98] sm:$0xf]
    %v3856 = vld [vmem:[%s9 + $0x9c] sm:$0xf]
    %v3857 = vld [vmem:[%s9 + $0xa0] sm:$0xf]
    %v3858 = vld [vmem:[%s9 + $0xa4] sm:$0xf]
    %v3859 = vld [vmem:[%s9 + $0xa8] sm:$0xf]
    %v3860 = vld [vmem:[%s9 + $0xac] sm:$0xf]
    %v3861 = vld [vmem:[%s9 + $0xb0] sm:$0xf]
    %v3862 = vld [vmem:[%s9 + $0xb4] sm:$0xf]
    %v3863 = vld [vmem:[%s9 + $0xb8] sm:$0xf]
    %v3864 = vld [vmem:[%s9 + $0xbc] sm:$0xf]
    %v3865 = vld [vmem:[%s9 + $0xc0] sm:$0xf]
    %v3866 = vld [vmem:[%s9 + $0xc4] sm:$0xf]
    %v3867 = vld [vmem:[%s9 + $0xc8] sm:$0xf]
    %v3868 = vld [vmem:[%s9 + $0xcc] sm:$0xf]
    %v3869 = vld [vmem:[%s9 + $0xd0] sm:$0xf]
    %v3870 = vld [vmem:[%s9 + $0xd4] sm:$0xf]
    %v3871 = vld [vmem:[%s9 + $0xd8] sm:$0xf]
    %v3872 = vld [vmem:[%s9 + $0xdc] sm:$0xf]
    %v3873 = vld [vmem:[%s9 + $0xe0] sm:$0xf]
    %v3874 = vld [vmem:[%s9 + $0xe4] sm:$0xf]
    %v3875 = vld [vmem:[%s9 + $0xe8] sm:$0xf]
    %v3876 = vld [vmem:[%s9 + $0xec] sm:$0xf]
    %v3877 = vld [vmem:[%s9 + $0xf0] sm:$0xf]
    %v3878 = vld [vmem:[%s9 + $0xf4] sm:$0xf]
    %v3879 = vld [vmem:[%s9 + $0xf8] sm:$0xf]
    %v3880 = vld [vmem:[%s9 + $0xfc] sm:$0xf]
    %v3881 = vld [vmem:[%s10] sm:$0x1]
    %v3883 = vlaneseq
    %v3884 = vshrl.u32 %v3883, 7
    %v3885 = vsub.s32 0, %v3884
    %v3886 = vrot.slane %v3881, %v3885
    %v3952 = vunpack.c.l.b16 %v3817
    %v3953 = vunpack.c.l.b16 %v3818
    %v3954 = vunpack.c.l.b16 %v3819
    %v3955 = vunpack.c.l.b16 %v3820
    %v3956 = vunpack.c.l.b16 %v3821
    %v3957 = vunpack.c.l.b16 %v3822
    %v3958 = vunpack.c.l.b16 %v3823
    %v3959 = vunpack.c.l.b16 %v3824
    %v3960 = vunpack.c.l.b16 %v3825
    %v3961 = vunpack.c.l.b16 %v3826
    %v3962 = vunpack.c.l.b16 %v3827
    %v3963 = vunpack.c.l.b16 %v3828
    %v3964 = vunpack.c.l.b16 %v3829
    %v3965 = vunpack.c.l.b16 %v3830
    %v3966 = vunpack.c.l.b16 %v3831
    %v3967 = vunpack.c.l.b16 %v3832
    %v3968 = vunpack.c.l.b16 %v3833
    %v3969 = vunpack.c.l.b16 %v3834
    %v3970 = vunpack.c.l.b16 %v3835
    %v3971 = vunpack.c.l.b16 %v3836
    %v3972 = vunpack.c.l.b16 %v3837
    %v3973 = vunpack.c.l.b16 %v3838
    %v3974 = vunpack.c.l.b16 %v3839
    %v3975 = vunpack.c.l.b16 %v3840
    %v3976 = vunpack.c.l.b16 %v3841
    %v3977 = vunpack.c.l.b16 %v3842
    %v3978 = vunpack.c.l.b16 %v3843
    %v3979 = vunpack.c.l.b16 %v3844
    %v3980 = vunpack.c.l.b16 %v3845
    %v3981 = vunpack.c.l.b16 %v3846
    %v3982 = vunpack.c.l.b16 %v3847
    %v3983 = vunpack.c.l.b16 %v3848
    %v3984 = vunpack.c.l.b16 %v3849
    %v3985 = vunpack.c.l.b16 %v3850
    %v3986 = vunpack.c.l.b16 %v3851
    %v3987 = vunpack.c.l.b16 %v3852
    %v3988 = vunpack.c.l.b16 %v3853
    %v3989 = vunpack.c.l.b16 %v3854
    %v3990 = vunpack.c.l.b16 %v3855
    %v3991 = vunpack.c.l.b16 %v3856
    %v3992 = vunpack.c.l.b16 %v3857
    %v3993 = vunpack.c.l.b16 %v3858
    %v3994 = vunpack.c.l.b16 %v3859
    %v3995 = vunpack.c.l.b16 %v3860
    %v3996 = vunpack.c.l.b16 %v3861
    %v3997 = vunpack.c.l.b16 %v3862
    %v3998 = vunpack.c.l.b16 %v3863
    %v3999 = vunpack.c.l.b16 %v3864
    %v4000 = vunpack.c.l.b16 %v3865
    %v4001 = vunpack.c.l.b16 %v3866
    %v4002 = vunpack.c.l.b16 %v3867
    %v4003 = vunpack.c.l.b16 %v3868
    %v4004 = vunpack.c.l.b16 %v3869
    %v4005 = vunpack.c.l.b16 %v3870
    %v4006 = vunpack.c.l.b16 %v3871
    %v4007 = vunpack.c.l.b16 %v3872
    %v4008 = vunpack.c.l.b16 %v3873
    %v4009 = vunpack.c.l.b16 %v3874
    %v4010 = vunpack.c.l.b16 %v3875
    %v4011 = vunpack.c.l.b16 %v3876
    %v4012 = vunpack.c.l.b16 %v3877
    %v4013 = vunpack.c.l.b16 %v3878
    %v4014 = vunpack.c.l.b16 %v3879
    %v4015 = vunpack.c.l.b16 %v3880
    %v4016 = vpack.c.b16 %v3953, %v3952
    %v4017 = vpack.c.b16 %v3955, %v3954
    %v4018 = vpack.c.b16 %v3957, %v3956
    %v4019 = vpack.c.b16 %v3959, %v3958
    %v4020 = vpack.c.b16 %v3961, %v3960
    %v4021 = vpack.c.b16 %v3963, %v3962
    %v4022 = vpack.c.b16 %v3965, %v3964
    %v4023 = vpack.c.b16 %v3967, %v3966
    %v4024 = vpack.c.b16 %v3969, %v3968
    %v4025 = vpack.c.b16 %v3971, %v3970
    %v4026 = vpack.c.b16 %v3973, %v3972
    %v4027 = vpack.c.b16 %v3975, %v3974
    %v4028 = vpack.c.b16 %v3977, %v3976
    %v4029 = vpack.c.b16 %v3979, %v3978
    %v4030 = vpack.c.b16 %v3981, %v3980
    %v4031 = vpack.c.b16 %v3983, %v3982
    %v4032 = vpack.c.b16 %v3985, %v3984
    %v4033 = vpack.c.b16 %v3987, %v3986
    %v4034 = vpack.c.b16 %v3989, %v3988
    %v4035 = vpack.c.b16 %v3991, %v3990
    %v4036 = vpack.c.b16 %v3993, %v3992
    %v4037 = vpack.c.b16 %v3995, %v3994
    %v4038 = vpack.c.b16 %v3997, %v3996
    %v4039 = vpack.c.b16 %v3999, %v3998
    %v4040 = vpack.c.b16 %v4001, %v4000
    %v4041 = vpack.c.b16 %v4003, %v4002
    %v4042 = vpack.c.b16 %v4005, %v4004
    %v4043 = vpack.c.b16 %v4007, %v4006
    %v4044 = vpack.c.b16 %v4009, %v4008
    %v4045 = vpack.c.b16 %v4011, %v4010
    %v4046 = vpack.c.b16 %v4013, %v4012
    %v4047 = vpack.c.b16 %v4015, %v4014
    %4080 = vmatprep.subr.bf16.mxu0 0
    %4081 = vmatpush1.bf16.msra.mxu0 %v4023
    %4082 = vmatprep.subr.bf16.mxu0 0
    %4083 = vmatpush1.bf16.msra.mxu0 %v4022
    %4084 = vmatprep.subr.bf16.mxu0 0
    %4085 = vmatpush1.bf16.msra.mxu0 %v4021
    %4086 = vmatprep.subr.bf16.mxu0 0
    %4087 = vmatpush1.bf16.msra.mxu0 %v4020
    %4088 = vmatprep.subr.bf16.mxu0 0
    %4089 = vmatpush1.bf16.msra.mxu0 %v4019
    %4090 = vmatprep.subr.bf16.mxu0 0
    %4091 = vmatpush1.bf16.msra.mxu0 %v4018
    %4092 = vmatprep.subr.bf16.mxu0 0
    %4093 = vmatpush1.bf16.msra.mxu0 %v4017
    %4094 = vmatprep.subr.bf16.mxu0 0
    %4095 = vmatpush1.bf16.msra.mxu0 %v4016
    %4096 = vmatprep.subr.bf16.mxu0 0
    %4097 = vmatpush2.bf16.msra.mxu0 %v4031
    %4098 = vmatprep.subr.bf16.mxu0 0
    %4099 = vmatpush2.bf16.msra.mxu0 %v4030
    %4100 = vmatprep.subr.bf16.mxu0 0
    %4101 = vmatpush2.bf16.msra.mxu0 %v4029
    %4102 = vmatprep.subr.bf16.mxu0 0
    %4103 = vmatpush2.bf16.msra.mxu0 %v4028
    %4104 = vmatprep.subr.bf16.mxu0 0
    %4105 = vmatpush2.bf16.msra.mxu0 %v4027
    %4106 = vmatprep.subr.bf16.mxu0 0
    %4107 = vmatpush2.bf16.msra.mxu0 %v4026
    %4108 = vmatprep.subr.bf16.mxu0 0
    %4109 = vmatpush2.bf16.msra.mxu0 %v4025
    %4110 = vmatprep.subr.bf16.mxu0 0
    %4111 = vmatpush2.bf16.msra.mxu0 %v4024
    %4112 = vmatprep.mubr.bf16.mxu0 %v3814
    %4113 = vmatmul.mubr.bf16.gmra.mxu0 %v3813
    %v4114 = vpop.f32.mrf.mxu0
    %v4115 = vadd.f32 %v3886, %v4114
    %v4116 = vpop.f32.mrf.mxu0
    %v4117 = vpop.f32.mrf.mxu0
    %v4118 = vpop.f32.mrf.mxu0
    %4119 = vdwg.mxu0
    %4120 = vmatprep.subr.bf16.mxu0 0
    %4121 = vmatpush1.bf16.msra.mxu0 %v4039
    %4122 = vmatprep.subr.bf16.mxu0 0
    %4123 = vmatpush1.bf16.msra.mxu0 %v4038
    %4124 = vmatprep.subr.bf16.mxu0 0
    %4125 = vmatpush1.bf16.msra.mxu0 %v4037
    %4126 = vmatprep.subr.bf16.mxu0 0
    %4127 = vmatpush1.bf16.msra.mxu0 %v4036
    %4128 = vmatprep.subr.bf16.mxu0 0
    %4129 = vmatpush1.bf16.msra.mxu0 %v4035
    %4130 = vmatprep.subr.bf16.mxu0 0
    %4131 = vmatpush1.bf16.msra.mxu0 %v4034
    %4132 = vmatprep.subr.bf16.mxu0 0
    %4133 = vmatpush1.bf16.msra.mxu0 %v4033
    %4134 = vmatprep.subr.bf16.mxu0 0
    %4135 = vmatpush1.bf16.msra.mxu0 %v4032
    %4136 = vmatprep.subr.bf16.mxu0 0
    %4137 = vmatpush2.bf16.msra.mxu0 %v4047
    %4138 = vmatprep.subr.bf16.mxu0 0
    %4139 = vmatpush2.bf16.msra.mxu0 %v4046
    %4140 = vmatprep.subr.bf16.mxu0 0
    %4141 = vmatpush2.bf16.msra.mxu0 %v4045
    %4142 = vmatprep.subr.bf16.mxu0 0
    %4143 = vmatpush2.bf16.msra.mxu0 %v4044
    %4144 = vmatprep.subr.bf16.mxu0 0
    %4145 = vmatpush2.bf16.msra.mxu0 %v4043
    %4146 = vmatprep.subr.bf16.mxu0 0
    %4147 = vmatpush2.bf16.msra.mxu0 %v4042
    %4148 = vmatprep.subr.bf16.mxu0 0
    %4149 = vmatpush2.bf16.msra.mxu0 %v4041
    %4150 = vmatprep.subr.bf16.mxu0 0
    %4151 = vmatpush2.bf16.msra.mxu0 %v4040
    %4152 = vmatprep.mubr.bf16.mxu0 %v3816
    %4153 = vmatmul.mubr.bf16.gmra.mxu0 %v3815
    %v4154 = vpop.f32.mrf.mxu0
    %v4155 = vadd.f32 %v4115, %v4154
    %v4156 = vpop.f32.mrf.mxu0
    %v4157 = vpop.f32.mrf.mxu0
    %v4158 = vpop.f32.mrf.mxu0
    %4159 = vdwg.mxu0
    %4160 = vst [vmem:[#allocation2] sm:$0x3] %v4155
    // Predicated region
    $region46: #{mario_net_forward.1} parent=1 // pred_check
      _
    $region47: #{mario_net_forward.1} parent=1 // pred_check_branch
      %4162 = sbr.rel (0) target = $region49
    $region48: #{mario_net_forward.1} parent=1 // pred_region
      %s4164 = ssub.s32 32, 32
      %4165 = vsyncadd [#allocation3], %s4164
      %s4167 = sshll.u32 [#allocation2], 4
      %s4168 = int_to_ptr.vmem [resolvable:$true] %s4167
      %4170 = dma.vmem_to_hbm [thread:$0]  %s4168, 32, %s11, [#allocation3]
    $region49: #{mario_net_forward.1} parent=1 // pred_fallthru
      _
    // Predicated region
    $region50: #{mario_net_forward.1} parent=1 // pred_check
      _
    $region51: #{mario_net_forward.1} parent=1 // pred_check_branch
      %4172 = sbr.rel (0) target = $region53
    $region52: #{mario_net_forward.1} parent=1 // pred_region
      %4173 = dma.done [#allocation3], 32
    $region53: #{mario_net_forward.1} parent=1 // pred_fallthru
      _
    %4174 = vsyncpa [#allocation3], 1

</llo_original>
